<compile_context>
chip_gen: v7x
topology: tpu7x:2x2x1
jax: 0.10.0
libtpu: 0.0.40
codegen_flags: <defaults>
</compile_context>

<pallas_src>
import jax
import jax.numpy as jnp
from jax.experimental import pallas as pl
from jax.experimental.pallas import tpu as pltpu


def conv_bn_plif_kernel(x_ref, w_ref, bias_ref, leak_ref, out_ref, v_ref):
    """One (batch-element, time-step) tile: 3x3 conv -> folded BN -> PLIF neuron.

    Grid is (B, T): axis 0 ("parallel") over batch elements, axis 1 ("arbitrary",
    sequential) over time. v_ref holds the membrane potential of this batch tile,
    persists across the T axis and is reset at t == 0.
    """
    t = pl.program_id(1)

    @pl.when(t == 0)
    def _():
        v_ref[...] = jnp.zeros_like(v_ref)

    # Current frame for this batch element. Layout/shuffle work (pad, shifted taps,
    # concat) is done in f32; MXU operands are cast to bf16 right before the dot.
    x = x_ref[0, 0].astype(jnp.float32)                    # [H, W, Cin]
    H, W, Cin = x.shape
    Cout = out_ref.shape[-1]

    # In-kernel zero padding (pad=1 on H and W) -> no padded activation copy in HBM.
    zr = jnp.zeros((1, W, Cin), jnp.float32)
    xp = jnp.concatenate([zr, x, zr], axis=0)              # [H+2, W, Cin]
    zc = jnp.zeros((H + 2, 1, Cin), jnp.float32)
    xp = jnp.concatenate([zc, xp, zc], axis=1)             # [H+2, W+2, Cin]

    # im2col: the 9 shifted taps concatenated along channels -> ONE MXU matmul with
    # contraction K = 9*Cin (instead of 9 matmuls with K = Cin).
    patches = jnp.concatenate(
        [xp[dy:dy + H, dx:dx + W, :] for dy in range(3) for dx in range(3)],
        axis=-1).reshape(H * W, 9 * Cin)

    # Conv; BN scale and the PLIF input gain sigmoid(w) are pre-folded into w_ref,
    # and (BN bias)*sigmoid(w) into bias_ref -> no per-step full-tensor scale mults.
    y = jnp.dot(patches.astype(jnp.bfloat16), w_ref[...],
                preferred_element_type=jnp.float32)        # [H*W, Cout] f32
    y = y + bias_ref[...]

    # Parametric LIF (decay_input=True, v_th=1.0, hard reset to v_reset=0):
    #   v <- v*(1 - sigmoid(w)) + BN(conv(x))*sigmoid(w) ; spike = (v >= 1) ; reset.
    leak = leak_ref[0]                                     # scalar (1 - sigmoid(w))
    v = v_ref[...] * leak + y
    spike = v >= 1.0
    v_ref[...] = jnp.where(spike, 0.0, v)
    out_ref[0, 0] = spike.astype(out_ref.dtype).reshape(H, W, Cout)


def conv3x3_block(x, w, gamma, beta, run_mean, run_var, plif_w, *, eps=1e-5):
    """x: [T, B, H, W, Cin] channels-last. Returns bf16 spikes [T, B, H, W, Cout]."""
    T, B, H, W, Cin = x.shape
    Cout = w.shape[-1]
    f32 = jnp.float32

    # Fold BatchNorm (eval mode, running stats) and PLIF decay into conv weight/bias:
    #   BN(y) = y*scale + bias_bn,  v' = v*(1-d) + BN(y)*d  with d = sigmoid(plif_w)
    # => w' = w*scale*d,  bias' = bias_bn*d,  kernel: v' = v*(1-d) + conv_w'(x) + bias'
    scale = gamma.astype(f32) * jax.lax.rsqrt(run_var.astype(f32) + eps)    # [Cout]
    bias_bn = beta.astype(f32) - run_mean.astype(f32) * scale               # [Cout]
    decay = jax.nn.sigmoid(jnp.asarray(plif_w, f32))                        # scalar
    w_folded = (w.astype(f32).reshape(9 * Cin, Cout) * (scale * decay)
                ).astype(jnp.bfloat16)                                      # [9*Cin, Cout]
    bias_folded = (bias_bn * decay).reshape(1, Cout).astype(f32)            # [1, Cout]
    leak = jnp.reshape(1.0 - decay, (1,)).astype(f32)                       # SMEM scalar

    x_bf16 = x.astype(jnp.bfloat16)   # spikes feeding block 2 are exact 0/1 in bf16

    return pl.pallas_call(
        conv_bn_plif_kernel,
        out_shape=jax.ShapeDtypeStruct((T, B, H, W, Cout), jnp.bfloat16),
        grid_spec=pltpu.PrefetchScalarGridSpec(
            num_scalar_prefetch=0,
            grid=(B, T),                       # T innermost & sequential (stateful)
            in_specs=[
                pl.BlockSpec((1, 1, H, W, Cin), lambda b, t: (t, b, 0, 0, 0)),
                pl.BlockSpec((9 * Cin, Cout), lambda b, t: (0, 0)),
                pl.BlockSpec((1, Cout), lambda b, t: (0, 0)),
                pl.BlockSpec(memory_space=pltpu.MemorySpace.SMEM),   # leak scalar
            ],
            out_specs=pl.BlockSpec((1, 1, H, W, Cout), lambda b, t: (t, b, 0, 0, 0)),
            scratch_shapes=[pltpu.VMEM((H * W, Cout), jnp.float32)],  # membrane v
        ),
        compiler_params=pltpu.CompilerParams(
            dimension_semantics=("parallel", "arbitrary")),
    )(x_bf16, w_folded, bias_folded, leak)


def plain_block_forward(x, p):
    """x: [T, B, C_in, H, W] (PyTorch multi-step NCHW). Returns same shape (f32)."""
    xcl = jnp.transpose(x, (0, 1, 3, 4, 2))                       # -> [T, B, H, W, C]
    s1 = conv3x3_block(xcl, p["w1"], p["g1"], p["b1"], p["m1"], p["v1"], p["pw1"])
    s2 = conv3x3_block(s1, p["w2"], p["g2"], p["b2"], p["m2"], p["v2"], p["pw2"])
    return jnp.transpose(s2, (0, 1, 4, 2, 3)).astype(x.dtype)     # -> [T, B, C, H, W]


def init_params(key, c_in, c_mid):
    ks = jax.random.split(key, 12)
    p = {
        # conv weights in HWIO layout: [3, 3, Cin, Cout]
        "w1": 0.2 * jax.random.normal(ks[0], (3, 3, c_in, c_mid), jnp.float32),
        "w2": 0.2 * jax.random.normal(ks[1], (3, 3, c_mid, c_in), jnp.float32),
        # BatchNorm params / running stats
        "g1": 1.0 + 0.1 * jax.random.normal(ks[2], (c_mid,), jnp.float32),
        "b1": 0.1 * jax.random.normal(ks[3], (c_mid,), jnp.float32),
        "m1": 0.1 * jax.random.normal(ks[4], (c_mid,), jnp.float32),
        "v1": jax.random.uniform(ks[5], (c_mid,), jnp.float32, 0.5, 1.5),
        "g2": 1.0 + 0.1 * jax.random.normal(ks[6], (c_in,), jnp.float32),
        "b2": 0.1 * jax.random.normal(ks[7], (c_in,), jnp.float32),
        "m2": 0.1 * jax.random.normal(ks[8], (c_in,), jnp.float32),
        "v2": jax.random.uniform(ks[9], (c_in,), jnp.float32, 0.5, 1.5),
        # ParametricLIF learnable w; init_tau=2.0 -> w = -log(tau - 1) = 0.0
        "pw1": jnp.zeros((), jnp.float32),
        "pw2": jnp.zeros((), jnp.float32),
    }
    return p


if __name__ == "__main__":
    T, B, C_IN, C_MID, H, W = 4, 2, 4, 8, 16, 16
    key = jax.random.PRNGKey(0)
    kx, kp = jax.random.split(key)
    x = jax.random.normal(kx, (T, B, C_IN, H, W), jnp.float32)
    params = init_params(kp, C_IN, C_MID)

    out = jax.jit(plain_block_forward)(x, params)
    out = jax.block_until_ready(out)
    assert out.shape == (T, B, C_IN, H, W)
    assert out.dtype == jnp.float32
    print("KERNEL_OK")
</pallas_src>

<mosaic_0001>
module attributes {stable_mosaic.version = 11 : i64} {
  func.func @conv_bn_plif_kernel(%arg0: i32, %arg1: i32, %arg2: memref<1x1x16x16x4xbf16, #tpu.memory_space<vmem>>, %arg3: memref<36x8xbf16, #tpu.memory_space<vmem>>, %arg4: memref<1x8xf32, #tpu.memory_space<vmem>>, %arg5: memref<1xf32, #tpu.memory_space<smem>>, %arg6: memref<1x1x16x16x8xbf16, #tpu.memory_space<vmem>>, %arg7: memref<256x8xf32, #tpu.memory_space<vmem>>) attributes {dimension_semantics = [#tpu.dimension_semantics<parallel>, #tpu.dimension_semantics<arbitrary>], iteration_bounds = array<i64: 2, 4>, scalar_prefetch = 0 : i64, scratch_operands = 1 : i64, tpu.core_type = #tpu.core_type<tc>, window_params = [{transform_indices = @transform_0, window_bounds = array<i64: 1, 1, 16, 16, 4>}, {pipeline_mode = #tpu.pipeline_mode<synchronous>, transform_indices = @transform_1, window_bounds = array<i64: 36, 8>}, {pipeline_mode = #tpu.pipeline_mode<synchronous>, transform_indices = @transform_2, window_bounds = array<i64: 1, 8>}, {transform_indices = @transform_3, window_bounds = array<i64: 1>}, {transform_indices = @transform_4, window_bounds = array<i64: 1, 1, 16, 16, 8>}]} {
    %c0_i32 = arith.constant 0 : i32
    %0 = arith.cmpi eq, %arg1, %c0_i32 : i32
    %1 = arith.extui %0 : i1 to i32
    %c0_i32_0 = arith.constant 0 : i32
    %2 = arith.cmpi ne, %1, %c0_i32_0 : i32
    scf.if %2 {
      %cst_23 = arith.constant 0.000000e+00 : f32
      %44 = vector.broadcast %cst_23 : f32 to vector<256x8xf32>
      %c0_24 = arith.constant 0 : index
      %c0_25 = arith.constant 0 : index
      %45 = vector.load %arg7[%c0_24, %c0_25] : memref<256x8xf32, #tpu.memory_space<vmem>>, vector<256x8xf32>
      tpu.vector_store %arg7[%c0_24, %c0_25], %44 {strides = array<i32>} : memref<256x8xf32, #tpu.memory_space<vmem>>, vector<256x8xf32>,
    } else {
    }
    %c0 = arith.constant 0 : index
    %c0_1 = arith.constant 0 : index
    %c0_2 = arith.constant 0 : index
    %c0_3 = arith.constant 0 : index
    %c0_4 = arith.constant 0 : index
    %3 = vector.load %arg2[%c0, %c0_1, %c0_2, %c0_3, %c0_4] : memref<1x1x16x16x4xbf16, #tpu.memory_space<vmem>>, vector<1x1x16x16x4xbf16>
    %4 = vector.shape_cast %3 : vector<1x1x16x16x4xbf16> to vector<16x16x4xbf16>
    %5 = arith.extf %4 : vector<16x16x4xbf16> to vector<16x16x4xf32>
    %cst = arith.constant 0.000000e+00 : f32
    %6 = vector.broadcast %cst : f32 to vector<1x16x4xf32>
    %7 = tpu.concatenate %6, %5, %6 in 0 : vector<1x16x4xf32>, vector<16x16x4xf32>, vector<1x16x4xf32> -> vector<18x16x4xf32>
    %cst_5 = arith.constant 0.000000e+00 : f32
    %8 = vector.broadcast %cst_5 : f32 to vector<18x1x4xf32>
    %9 = tpu.concatenate %8, %7, %8 in 1 : vector<18x1x4xf32>, vector<18x16x4xf32>, vector<18x1x4xf32> -> vector<18x18x4xf32>
    %10 = vector.extract_strided_slice %9 {offsets = [0, 0, 0], sizes = [16, 16, 4], strides = [1, 1, 1]} : vector<18x18x4xf32> to vector<16x16x4xf32>
    %11 = vector.extract_strided_slice %9 {offsets = [0, 1, 0], sizes = [16, 16, 4], strides = [1, 1, 1]} : vector<18x18x4xf32> to vector<16x16x4xf32>
    %12 = vector.extract_strided_slice %9 {offsets = [0, 2, 0], sizes = [16, 16, 4], strides = [1, 1, 1]} : vector<18x18x4xf32> to vector<16x16x4xf32>
    %13 = vector.extract_strided_slice %9 {offsets = [1, 0, 0], sizes = [16, 16, 4], strides = [1, 1, 1]} : vector<18x18x4xf32> to vector<16x16x4xf32>
    %14 = vector.extract_strided_slice %9 {offsets = [1, 1, 0], sizes = [16, 16, 4], strides = [1, 1, 1]} : vector<18x18x4xf32> to vector<16x16x4xf32>
    %15 = vector.extract_strided_slice %9 {offsets = [1, 2, 0], sizes = [16, 16, 4], strides = [1, 1, 1]} : vector<18x18x4xf32> to vector<16x16x4xf32>
    %16 = vector.extract_strided_slice %9 {offsets = [2, 0, 0], sizes = [16, 16, 4], strides = [1, 1, 1]} : vector<18x18x4xf32> to vector<16x16x4xf32>
    %17 = vector.extract_strided_slice %9 {offsets = [2, 1, 0], sizes = [16, 16, 4], strides = [1, 1, 1]} : vector<18x18x4xf32> to vector<16x16x4xf32>
    %18 = vector.extract_strided_slice %9 {offsets = [2, 2, 0], sizes = [16, 16, 4], strides = [1, 1, 1]} : vector<18x18x4xf32> to vector<16x16x4xf32>
    %19 = tpu.concatenate %10, %11, %12, %13, %14, %15, %16, %17, %18 in 2 : vector<16x16x4xf32>, vector<16x16x4xf32>, vector<16x16x4xf32>, vector<16x16x4xf32>, vector<16x16x4xf32>, vector<16x16x4xf32>, vector<16x16x4xf32>, vector<16x16x4xf32>, vector<16x16x4xf32> -> vector<16x16x36xf32>
    %20 = vector.shape_cast %19 : vector<16x16x36xf32> to vector<256x36xf32>
    %21 = arith.truncf %20 : vector<256x36xf32> to vector<256x36xbf16>
    %c0_6 = arith.constant 0 : index
    %c0_7 = arith.constant 0 : index
    %22 = vector.load %arg3[%c0_6, %c0_7] : memref<36x8xbf16, #tpu.memory_space<vmem>>, vector<36x8xbf16>
    %cst_8 = arith.constant dense<0.000000e+00> : vector<256x8xf32>
    %23 = tpu.matmul %21, %22, %cst_8 {dimension_numbers = #tpu.dot_dimension_numbers<[1], [0], [0], [1], [0, 0, 1, 1], [], []>} : vector<256x36xbf16>, vector<36x8xbf16>, vector<256x8xf32> -> vector<256x8xf32>
    %c0_9 = arith.constant 0 : index
    %c0_10 = arith.constant 0 : index
    %24 = vector.load %arg4[%c0_9, %c0_10] : memref<1x8xf32, #tpu.memory_space<vmem>>, vector<1x8xf32>
    %25 = vector.broadcast %24 : vector<1x8xf32> to vector<256x8xf32>
    %26 = arith.addf %23, %25 : vector<256x8xf32>
    %c0_11 = arith.constant 0 : index
    %27 = memref.load %arg5[%c0_11] : memref<1xf32, #tpu.memory_space<smem>>
    %c0_12 = arith.constant 0 : index
    %c0_13 = arith.constant 0 : index
    %28 = vector.load %arg7[%c0_12, %c0_13] : memref<256x8xf32, #tpu.memory_space<vmem>>, vector<256x8xf32>
    %29 = vector.broadcast %27 : f32 to vector<256x8xf32>
    %30 = arith.mulf %28, %29 : vector<256x8xf32>
    %31 = arith.addf %30, %26 : vector<256x8xf32>
    %cst_14 = arith.constant 1.000000e+00 : f32
    %32 = vector.broadcast %cst_14 : f32 to vector<256x8xf32>
    %33 = arith.cmpf oge, %31, %32 : vector<256x8xf32>
    %cst_15 = arith.constant 0.000000e+00 : f32
    %34 = vector.broadcast %cst_15 : f32 to vector<256x8xf32>
    %35 = arith.select %33, %34, %31 : vector<256x8xi1>, vector<256x8xf32>
    %c0_16 = arith.constant 0 : index
    %c0_17 = arith.constant 0 : index
    %36 = vector.load %arg7[%c0_16, %c0_17] : memref<256x8xf32, #tpu.memory_space<vmem>>, vector<256x8xf32>
    tpu.vector_store %arg7[%c0_16, %c0_17], %35 {strides = array<i32>} : memref<256x8xf32, #tpu.memory_space<vmem>>, vector<256x8xf32>,
    %37 = arith.extui %33 : vector<256x8xi1> to vector<256x8xi32>
    %38 = arith.sitofp %37 : vector<256x8xi32> to vector<256x8xf32>
    %39 = arith.truncf %38 : vector<256x8xf32> to vector<256x8xbf16>
    %40 = vector.shape_cast %39 : vector<256x8xbf16> to vector<16x16x8xbf16>
    %c0_18 = arith.constant 0 : index
    %c0_19 = arith.constant 0 : index
    %c0_20 = arith.constant 0 : index
    %c0_21 = arith.constant 0 : index
    %c0_22 = arith.constant 0 : index
    %41 = vector.load %arg6[%c0_18, %c0_19, %c0_20, %c0_21, %c0_22] : memref<1x1x16x16x8xbf16, #tpu.memory_space<vmem>>, vector<1x1x16x16x8xbf16>
    %42 = vector.shape_cast %41 : vector<1x1x16x16x8xbf16> to vector<16x16x8xbf16>
    %43 = vector.shape_cast %40 : vector<16x16x8xbf16> to vector<1x1x16x16x8xbf16>
    tpu.vector_store %arg6[%c0_18, %c0_19, %c0_20, %c0_21, %c0_22], %43 {strides = array<i32>} : memref<1x1x16x16x8xbf16, #tpu.memory_space<vmem>>, vector<1x1x16x16x8xbf16>,
    return
  }
  func.func @transform_0(%arg0: i32, %arg1: i32) -> (i32, i32, i32, i32, i32) {
    %c0_i32 = arith.constant 0 : i32
    %c0_i32_0 = arith.constant 0 : i32
    %c0_i32_1 = arith.constant 0 : i32
    %c0_i32_2 = arith.constant 0 : i32
    return %arg1, %arg0, %c0_i32, %c0_i32_0, %c0_i32_1 : i32, i32, i32, i32, i32
  }
  func.func @transform_1(%arg0: i32, %arg1: i32) -> (i32, i32) {
    %c0_i32 = arith.constant 0 : i32
    %c0_i32_0 = arith.constant 0 : i32
    %c0_i32_1 = arith.constant 0 : i32
    return %c0_i32, %c0_i32_0 : i32, i32
  }
  func.func @transform_2(%arg0: i32, %arg1: i32) -> (i32, i32) {
    %c0_i32 = arith.constant 0 : i32
    %c0_i32_0 = arith.constant 0 : i32
    %c0_i32_1 = arith.constant 0 : i32
    return %c0_i32, %c0_i32_0 : i32, i32
  }
  func.func @transform_3(%arg0: i32, %arg1: i32) -> i32 {
    %c0_i32 = arith.constant 0 : i32
    %c0_i32_0 = arith.constant 0 : i32
    return %c0_i32 : i32
  }
  func.func @transform_4(%arg0: i32, %arg1: i32) -> (i32, i32, i32, i32, i32) {
    %c0_i32 = arith.constant 0 : i32
    %c0_i32_0 = arith.constant 0 : i32
    %c0_i32_1 = arith.constant 0 : i32
    %c0_i32_2 = arith.constant 0 : i32
    return %arg1, %arg0, %c0_i32, %c0_i32_0, %c0_i32_1 : i32, i32, i32, i32, i32
  }
}

module attributes {stable_mosaic.version = 11 : i64} {
  func.func @conv_bn_plif_kernel(%arg0: i32, %arg1: i32, %arg2: memref<1x1x16x16x8xbf16, #tpu.memory_space<vmem>>, %arg3: memref<72x4xbf16, #tpu.memory_space<vmem>>, %arg4: memref<1x4xf32, #tpu.memory_space<vmem>>, %arg5: memref<1xf32, #tpu.memory_space<smem>>, %arg6: memref<1x1x16x16x4xbf16, #tpu.memory_space<vmem>>, %arg7: memref<256x4xf32, #tpu.memory_space<vmem>>) attributes {dimension_semantics = [#tpu.dimension_semantics<parallel>, #tpu.dimension_semantics<arbitrary>], iteration_bounds = array<i64: 2, 4>, scalar_prefetch = 0 : i64, scratch_operands = 1 : i64, tpu.core_type = #tpu.core_type<tc>, window_params = [{transform_indices = @transform_0, window_bounds = array<i64: 1, 1, 16, 16, 8>}, {pipeline_mode = #tpu.pipeline_mode<synchronous>, transform_indices = @transform_1, window_bounds = array<i64: 72, 4>}, {pipeline_mode = #tpu.pipeline_mode<synchronous>, transform_indices = @transform_2, window_bounds = array<i64: 1, 4>}, {transform_indices = @transform_3, window_bounds = array<i64: 1>}, {transform_indices = @transform_4, window_bounds = array<i64: 1, 1, 16, 16, 4>}]} {
    %c0_i32 = arith.constant 0 : i32
    %0 = arith.cmpi eq, %arg1, %c0_i32 : i32
    %1 = arith.extui %0 : i1 to i32
    %c0_i32_0 = arith.constant 0 : i32
    %2 = arith.cmpi ne, %1, %c0_i32_0 : i32
    scf.if %2 {
      %cst_23 = arith.constant 0.000000e+00 : f32
      %44 = vector.broadcast %cst_23 : f32 to vector<256x4xf32>
      %c0_24 = arith.constant 0 : index
      %c0_25 = arith.constant 0 : index
      %45 = vector.load %arg7[%c0_24, %c0_25] : memref<256x4xf32, #tpu.memory_space<vmem>>, vector<256x4xf32>
      tpu.vector_store %arg7[%c0_24, %c0_25], %44 {strides = array<i32>} : memref<256x4xf32, #tpu.memory_space<vmem>>, vector<256x4xf32>,
    } else {
    }
    %c0 = arith.constant 0 : index
    %c0_1 = arith.constant 0 : index
    %c0_2 = arith.constant 0 : index
    %c0_3 = arith.constant 0 : index
    %c0_4 = arith.constant 0 : index
    %3 = vector.load %arg2[%c0, %c0_1, %c0_2, %c0_3, %c0_4] : memref<1x1x16x16x8xbf16, #tpu.memory_space<vmem>>, vector<1x1x16x16x8xbf16>
    %4 = vector.shape_cast %3 : vector<1x1x16x16x8xbf16> to vector<16x16x8xbf16>
    %5 = arith.extf %4 : vector<16x16x8xbf16> to vector<16x16x8xf32>
    %cst = arith.constant 0.000000e+00 : f32
    %6 = vector.broadcast %cst : f32 to vector<1x16x8xf32>
    %7 = tpu.concatenate %6, %5, %6 in 0 : vector<1x16x8xf32>, vector<16x16x8xf32>, vector<1x16x8xf32> -> vector<18x16x8xf32>
    %cst_5 = arith.constant 0.000000e+00 : f32
    %8 = vector.broadcast %cst_5 : f32 to vector<18x1x8xf32>
    %9 = tpu.concatenate %8, %7, %8 in 1 : vector<18x1x8xf32>, vector<18x16x8xf32>, vector<18x1x8xf32> -> vector<18x18x8xf32>
    %10 = vector.extract_strided_slice %9 {offsets = [0, 0, 0], sizes = [16, 16, 8], strides = [1, 1, 1]} : vector<18x18x8xf32> to vector<16x16x8xf32>
    %11 = vector.extract_strided_slice %9 {offsets = [0, 1, 0], sizes = [16, 16, 8], strides = [1, 1, 1]} : vector<18x18x8xf32> to vector<16x16x8xf32>
    %12 = vector.extract_strided_slice %9 {offsets = [0, 2, 0], sizes = [16, 16, 8], strides = [1, 1, 1]} : vector<18x18x8xf32> to vector<16x16x8xf32>
    %13 = vector.extract_strided_slice %9 {offsets = [1, 0, 0], sizes = [16, 16, 8], strides = [1, 1, 1]} : vector<18x18x8xf32> to vector<16x16x8xf32>
    %14 = vector.extract_strided_slice %9 {offsets = [1, 1, 0], sizes = [16, 16, 8], strides = [1, 1, 1]} : vector<18x18x8xf32> to vector<16x16x8xf32>
    %15 = vector.extract_strided_slice %9 {offsets = [1, 2, 0], sizes = [16, 16, 8], strides = [1, 1, 1]} : vector<18x18x8xf32> to vector<16x16x8xf32>
    %16 = vector.extract_strided_slice %9 {offsets = [2, 0, 0], sizes = [16, 16, 8], strides = [1, 1, 1]} : vector<18x18x8xf32> to vector<16x16x8xf32>
    %17 = vector.extract_strided_slice %9 {offsets = [2, 1, 0], sizes = [16, 16, 8], strides = [1, 1, 1]} : vector<18x18x8xf32> to vector<16x16x8xf32>
    %18 = vector.extract_strided_slice %9 {offsets = [2, 2, 0], sizes = [16, 16, 8], strides = [1, 1, 1]} : vector<18x18x8xf32> to vector<16x16x8xf32>
    %19 = tpu.concatenate %10, %11, %12, %13, %14, %15, %16, %17, %18 in 2 : vector<16x16x8xf32>, vector<16x16x8xf32>, vector<16x16x8xf32>, vector<16x16x8xf32>, vector<16x16x8xf32>, vector<16x16x8xf32>, vector<16x16x8xf32>, vector<16x16x8xf32>, vector<16x16x8xf32> -> vector<16x16x72xf32>
    %20 = vector.shape_cast %19 : vector<16x16x72xf32> to vector<256x72xf32>
    %21 = arith.truncf %20 : vector<256x72xf32> to vector<256x72xbf16>
    %c0_6 = arith.constant 0 : index
    %c0_7 = arith.constant 0 : index
    %22 = vector.load %arg3[%c0_6, %c0_7] : memref<72x4xbf16, #tpu.memory_space<vmem>>, vector<72x4xbf16>
    %cst_8 = arith.constant dense<0.000000e+00> : vector<256x4xf32>
    %23 = tpu.matmul %21, %22, %cst_8 {dimension_numbers = #tpu.dot_dimension_numbers<[1], [0], [0], [1], [0, 0, 1, 1], [], []>} : vector<256x72xbf16>, vector<72x4xbf16>, vector<256x4xf32> -> vector<256x4xf32>
    %c0_9 = arith.constant 0 : index
    %c0_10 = arith.constant 0 : index
    %24 = vector.load %arg4[%c0_9, %c0_10] : memref<1x4xf32, #tpu.memory_space<vmem>>, vector<1x4xf32>
    %25 = vector.broadcast %24 : vector<1x4xf32> to vector<256x4xf32>
    %26 = arith.addf %23, %25 : vector<256x4xf32>
    %c0_11 = arith.constant 0 : index
    %27 = memref.load %arg5[%c0_11] : memref<1xf32, #tpu.memory_space<smem>>
    %c0_12 = arith.constant 0 : index
    %c0_13 = arith.constant 0 : index
    %28 = vector.load %arg7[%c0_12, %c0_13] : memref<256x4xf32, #tpu.memory_space<vmem>>, vector<256x4xf32>
    %29 = vector.broadcast %27 : f32 to vector<256x4xf32>
    %30 = arith.mulf %28, %29 : vector<256x4xf32>
    %31 = arith.addf %30, %26 : vector<256x4xf32>
    %cst_14 = arith.constant 1.000000e+00 : f32
    %32 = vector.broadcast %cst_14 : f32 to vector<256x4xf32>
    %33 = arith.cmpf oge, %31, %32 : vector<256x4xf32>
    %cst_15 = arith.constant 0.000000e+00 : f32
    %34 = vector.broadcast %cst_15 : f32 to vector<256x4xf32>
    %35 = arith.select %33, %34, %31 : vector<256x4xi1>, vector<256x4xf32>
    %c0_16 = arith.constant 0 : index
    %c0_17 = arith.constant 0 : index
    %36 = vector.load %arg7[%c0_16, %c0_17] : memref<256x4xf32, #tpu.memory_space<vmem>>, vector<256x4xf32>
    tpu.vector_store %arg7[%c0_16, %c0_17], %35 {strides = array<i32>} : memref<256x4xf32, #tpu.memory_space<vmem>>, vector<256x4xf32>,
    %37 = arith.extui %33 : vector<256x4xi1> to vector<256x4xi32>
    %38 = arith.sitofp %37 : vector<256x4xi32> to vector<256x4xf32>
    %39 = arith.truncf %38 : vector<256x4xf32> to vector<256x4xbf16>
    %40 = vector.shape_cast %39 : vector<256x4xbf16> to vector<16x16x4xbf16>
    %c0_18 = arith.constant 0 : index
    %c0_19 = arith.constant 0 : index
    %c0_20 = arith.constant 0 : index
    %c0_21 = arith.constant 0 : index
    %c0_22 = arith.constant 0 : index
    %41 = vector.load %arg6[%c0_18, %c0_19, %c0_20, %c0_21, %c0_22] : memref<1x1x16x16x4xbf16, #tpu.memory_space<vmem>>, vector<1x1x16x16x4xbf16>
    %42 = vector.shape_cast %41 : vector<1x1x16x16x4xbf16> to vector<16x16x4xbf16>
    %43 = vector.shape_cast %40 : vector<16x16x4xbf16> to vector<1x1x16x16x4xbf16>
    tpu.vector_store %arg6[%c0_18, %c0_19, %c0_20, %c0_21, %c0_22], %43 {strides = array<i32>} : memref<1x1x16x16x4xbf16, #tpu.memory_space<vmem>>, vector<1x1x16x16x4xbf16>,
    return
  }
  func.func @transform_0(%arg0: i32, %arg1: i32) -> (i32, i32, i32, i32, i32) {
    %c0_i32 = arith.constant 0 : i32
    %c0_i32_0 = arith.constant 0 : i32
    %c0_i32_1 = arith.constant 0 : i32
    %c0_i32_2 = arith.constant 0 : i32
    return %arg1, %arg0, %c0_i32, %c0_i32_0, %c0_i32_1 : i32, i32, i32, i32, i32
  }
  func.func @transform_1(%arg0: i32, %arg1: i32) -> (i32, i32) {
    %c0_i32 = arith.constant 0 : i32
    %c0_i32_0 = arith.constant 0 : i32
    %c0_i32_1 = arith.constant 0 : i32
    return %c0_i32, %c0_i32_0 : i32, i32
  }
  func.func @transform_2(%arg0: i32, %arg1: i32) -> (i32, i32) {
    %c0_i32 = arith.constant 0 : i32
    %c0_i32_0 = arith.constant 0 : i32
    %c0_i32_1 = arith.constant 0 : i32
    return %c0_i32, %c0_i32_0 : i32, i32
  }
  func.func @transform_3(%arg0: i32, %arg1: i32) -> i32 {
    %c0_i32 = arith.constant 0 : i32
    %c0_i32_0 = arith.constant 0 : i32
    return %c0_i32 : i32
  }
  func.func @transform_4(%arg0: i32, %arg1: i32) -> (i32, i32, i32, i32, i32) {
    %c0_i32 = arith.constant 0 : i32
    %c0_i32_0 = arith.constant 0 : i32
    %c0_i32_1 = arith.constant 0 : i32
    %c0_i32_2 = arith.constant 0 : i32
    return %arg1, %arg0, %c0_i32, %c0_i32_0, %c0_i32_1 : i32, i32, i32, i32, i32
  }
}

</mosaic_0001>

<llo_original>
// kernel: plain_block_forward.2
$region0: #{plain_block_forward.2}
  #allocation0 [shape = 'u32[]', space=smem, size = 0x4, offset = 0x4, fixed_abs, tag = 'smem constant byte address 0x4 - core index']
  #allocation1 [shape = 'u32[144,128]{1,0:T(1,128)}', space=vmem, size = 0x12000, scoped, tag = 'internal scratch']
  #allocation2 [shape = 'f32[256,8]{1,0:T(8,128)}', space=vmem, size = 0x20000, scoped, tag = 'scratch operand']
  #allocation3 [shape = 'f32[1]{0:T(128)S(6)}', space=smem, size = 0x200, scoped, tag = 'scoped memory for plain_block_forward.2']
  %s0 = inlined_call_operand.vmem [shape: bf16[4,2,16,16,4], index: 0, kind: input, shape index: {}]
  %s1 = inlined_call_operand.vmem [shape: bf16[36,8], index: 1, kind: input, shape index: {}]
  %s2 = inlined_call_operand.vmem [shape: f32[1,8], index: 2, kind: input, shape index: {}]
  %s3 = inlined_call_operand.<no memory space> [shape: f32[1], index: 3, kind: input, shape index: {}]
  %s4 = inlined_call_operand.vmem [shape: bf16[4,2,16,16,8], index: 4, kind: output, shape index: {}]
  %s5 = sld [smem:[#allocation0]]
  $region53: #{plain_block_forward.2} parent=0
    _
  %s7 = ssub.s32 1, %s5
  %s8 = scalar_select 0, %s7, %s5
  %9 = sst [smem:[#allocation3]] %s3
  loop: start=0, step=1, limit=10
  $region2: #{plain_block_forward.2} parent=0 // loop_pre_header
    _
  $region3: #{plain_block_forward.2} parent=0 // loop_header
    %s11 = sphi 0, %s15
    %p12 = scmp.ge.s32.totalorder %s11, 10
    %s18 = sphi 0, %s30
    %s19 = sphi 0, %s26
    %s20 = sphi 0, %s18
    %s21 = sphi 0, %s19
    %s22 = sphi 0, %s20
    %s23 = sphi 0, %s21
    %s35 = sphi 0, %s37
    %s38 = sphi 0, %s35
    %s39 = sphi 0, %s38
    %s55 = sphi 0, %s39
    %s59 = sphi 0, %s59
    %s61 = sphi 0, %s59
    %s62 = sphi 0, %s61
    %s76 = sphi 0, %s62
    %s80 = sphi 0, %s80
    %s82 = sphi 0, %s80
    %s83 = sphi 0, %s82
    %s97 = sphi 0, %s83
    %s101 = sphi 0, %s101
    %s103 = sphi 0, %s101
    %s104 = sphi 0, %s103
    %s118 = sphi 0, %s104
    %s126 = sphi 0, %s128
    %s129 = sphi 0, %s126
    %s130 = sphi 0, %s129
    %s146 = sphi 0, %s130
  $region4: #{plain_block_forward.2} parent=0 // loop_header_branch
    %14 = sbr.rel (%p12) target = $region8
  $region5: #{plain_block_forward.2} parent=0 // loop_body
    %s16 = ssub.s32 %s11, 1
    %s17 = ssub.s32 %s11, 2
    %s24 = sadd.s32 1, %s19
    %p25 = scmp.ge.s32.totalorder %s24, 4
    %s26 = scalar_select %p25, 0, %s24
    %s27 = sadd.s32 1, %s18
    %s28 = scalar_select %p25, %s27, %s18
    %p29 = scmp.ge.s32.totalorder %s28, 2
    %s30 = scalar_select %p29, 0, %s28
    %s31 = ssub.s32 %s19, %s26
    %s32 = ssub.s32 %s18, %s30
    %s33 = sor.u32 %s31, %s32
    %p34 = scmp.eq.s32.totalorder %s33, 0
    %s36 = sadd.s32 %s35, 1
    %s37 = scalar_select %p34, %s35, %s36
    %p40 = pneg %p34
    %p41 = scmp.eq.s32.totalorder %s11, 7
    %p42 = por %p40, %p41
    %p43 = scmp.ne.s32.totalorder %s35, %s38
    %p44 = scmp.eq.s32.totalorder %s11, 0
    %p45 = por %p43, %p44
    %p46 = scmp.ne.s32.totalorder %s35, %s38
    %p47 = scmp.eq.s32.totalorder %s16, 7
    %p48 = por %p46, %p47
    %p49 = scmp.ne.s32.totalorder %s38, %s39
    %p50 = scmp.eq.s32.totalorder %s16, 0
    %p51 = por %p49, %p50
    %p52 = scmp.ne.s32.totalorder %s38, %s39
    %p53 = scmp.eq.s32.totalorder %s17, 7
    %p54 = por %p52, %p53
    %p56 = scmp.ne.s32.totalorder %s39, %s55
    %p57 = scmp.eq.s32.totalorder %s17, 0
    %p58 = por %p56, %p57
    %s60 = sadd.s32 %s59, 1
    %p63 = scmp.eq.s32.totalorder %s11, 7
    %p64 = scmp.ne.s32.totalorder %s59, %s61
    %p65 = scmp.eq.s32.totalorder %s11, 0
    %p66 = por %p64, %p65
    %p67 = scmp.ne.s32.totalorder %s59, %s61
    %p68 = scmp.eq.s32.totalorder %s16, 7
    %p69 = por %p67, %p68
    %p70 = scmp.ne.s32.totalorder %s61, %s62
    %p71 = scmp.eq.s32.totalorder %s16, 0
    %p72 = por %p70, %p71
    %p73 = scmp.ne.s32.totalorder %s61, %s62
    %p74 = scmp.eq.s32.totalorder %s17, 7
    %p75 = por %p73, %p74
    %p77 = scmp.ne.s32.totalorder %s62, %s76
    %p78 = scmp.eq.s32.totalorder %s17, 0
    %p79 = por %p77, %p78
    %s81 = sadd.s32 %s80, 1
    %p84 = scmp.eq.s32.totalorder %s11, 7
    %p85 = scmp.ne.s32.totalorder %s80, %s82
    %p86 = scmp.eq.s32.totalorder %s11, 0
    %p87 = por %p85, %p86
    %p88 = scmp.ne.s32.totalorder %s80, %s82
    %p89 = scmp.eq.s32.totalorder %s16, 7
    %p90 = por %p88, %p89
    %p91 = scmp.ne.s32.totalorder %s82, %s83
    %p92 = scmp.eq.s32.totalorder %s16, 0
    %p93 = por %p91, %p92
    %p94 = scmp.ne.s32.totalorder %s82, %s83
    %p95 = scmp.eq.s32.totalorder %s17, 7
    %p96 = por %p94, %p95
    %p98 = scmp.ne.s32.totalorder %s83, %s97
    %p99 = scmp.eq.s32.totalorder %s17, 0
    %p100 = por %p98, %p99
    %s102 = sadd.s32 %s101, 1
    %p105 = scmp.eq.s32.totalorder %s11, 7
    %p106 = scmp.ne.s32.totalorder %s101, %s103
    %p107 = scmp.eq.s32.totalorder %s11, 0
    %p108 = por %p106, %p107
    %p109 = scmp.ne.s32.totalorder %s101, %s103
    %p110 = scmp.eq.s32.totalorder %s16, 7
    %p111 = por %p109, %p110
    %p112 = scmp.ne.s32.totalorder %s103, %s104
    %p113 = scmp.eq.s32.totalorder %s16, 0
    %p114 = por %p112, %p113
    %p115 = scmp.ne.s32.totalorder %s103, %s104
    %p116 = scmp.eq.s32.totalorder %s17, 7
    %p117 = por %p115, %p116
    %p119 = scmp.ne.s32.totalorder %s104, %s118
    %p120 = scmp.eq.s32.totalorder %s17, 0
    %p121 = por %p119, %p120
    %s122 = ssub.s32 %s19, %s26
    %s123 = ssub.s32 %s18, %s30
    %s124 = sor.u32 %s122, %s123
    %p125 = scmp.eq.s32.totalorder %s124, 0
    %s127 = sadd.s32 %s126, 1
    %s128 = scalar_select %p125, %s126, %s127
    %p131 = pneg %p125
    %p132 = scmp.eq.s32.totalorder %s11, 7
    %p133 = por %p131, %p132
    %p134 = scmp.ne.s32.totalorder %s126, %s129
    %p135 = scmp.eq.s32.totalorder %s11, 0
    %p136 = por %p134, %p135
    %p137 = scmp.ne.s32.totalorder %s126, %s129
    %p138 = scmp.eq.s32.totalorder %s16, 7
    %p139 = por %p137, %p138
    %p140 = scmp.ne.s32.totalorder %s129, %s130
    %p141 = scmp.eq.s32.totalorder %s16, 0
    %p142 = por %p140, %p141
    %p143 = scmp.ne.s32.totalorder %s129, %s130
    %p144 = scmp.eq.s32.totalorder %s17, 7
    %p145 = por %p143, %p144
    %p147 = scmp.ne.s32.totalorder %s130, %s146
    %p148 = scmp.eq.s32.totalorder %s17, 0
    %p149 = por %p147, %p148
    %p150 = scmp.le.s32.totalorder 1, %s11
    %p151 = scmp.lt.s32.totalorder %s11, 9
    %p152 = pnand %p150, %p151
    %p153 = pneg %p152
    // Predicated region
    $region9: #{plain_block_forward.2} parent=5 // pred_check
      _
    $region10: #{plain_block_forward.2} parent=5 // pred_check_branch
      %155 = sbr.rel (%p152) target = $region12
    $region11: #{plain_block_forward.2} parent=5 // pred_region
      %s156 = ssub.s32 %s11, 1
      // Predicated region
      $region13: #{plain_block_forward.2} parent=11 // pred_check
        %p157 = pneg %p72
      $region14: #{plain_block_forward.2} parent=11 // pred_check_branch
        %159 = sbr.rel (%p157) target = $region16
      $region15: #{plain_block_forward.2} parent=11 // pred_region
        _
      $region16: #{plain_block_forward.2} parent=11 // pred_fallthru
        _
      // Predicated region
      $region17: #{plain_block_forward.2} parent=11 // pred_check
        %p160 = pneg %p93
      $region18: #{plain_block_forward.2} parent=11 // pred_check_branch
        %162 = sbr.rel (%p160) target = $region20
      $region19: #{plain_block_forward.2} parent=11 // pred_region
        _
      $region20: #{plain_block_forward.2} parent=11 // pred_fallthru
        _
      // Predicated region
      $region21: #{plain_block_forward.2} parent=11 // pred_check
        %p163 = pneg %p114
      $region22: #{plain_block_forward.2} parent=11 // pred_check_branch
        %165 = sbr.rel (%p163) target = $region24
      $region23: #{plain_block_forward.2} parent=11 // pred_region
        _
      $region24: #{plain_block_forward.2} parent=11 // pred_fallthru
        _
    $region12: #{plain_block_forward.2} parent=5 // pred_fallthru
      _
    %p166 = scmp.lt.s32.totalorder %s11, 8
    // Predicated region
    $region25: #{plain_block_forward.2} parent=5 // pred_check
      %p167 = pneg %p166
    $region26: #{plain_block_forward.2} parent=5 // pred_check_branch
      %169 = sbr.rel (%p167) target = $region28
    $region27: #{plain_block_forward.2} parent=5 // pred_region
      // Predicated region
      $region29: #{plain_block_forward.2} parent=27 // pred_check
        %p170 = pneg %p45
      $region30: #{plain_block_forward.2} parent=27 // pred_check_branch
        %172 = sbr.rel (%p170) target = $region32
      $region31: #{plain_block_forward.2} parent=27 // pred_region
        %p173 = scmp.lt.s32.totalorder %s19, 3
        %s174 = scalar_select %p173, %s19, 3
        %p175 = scmp.lt.s32.totalorder %s18, 1
        %s176 = scalar_select %p175, %s18, 1
        %s177 = smul.addr %s176, 32
        %s178 = smul.addr %s174, 64
        %s179 = sadd.s32 %s177, %s178
        %s180 = smul.addr %s179, 4
        %s181 = scalar_lea.vmem %s0, %s180
      $region32: #{plain_block_forward.2} parent=27 // pred_fallthru
        _
    $region28: #{plain_block_forward.2} parent=5 // pred_fallthru
      _
    %p182 = scmp.le.s32.totalorder 1, %s11
    %p183 = scmp.lt.s32.totalorder %s11, 9
    %p184 = pnand %p182, %p183
    %p185 = pneg %p184
    // Predicated region
    $region33: #{plain_block_forward.2} parent=5 // pred_check
      _
    $region34: #{plain_block_forward.2} parent=5 // pred_check_branch
      %187 = sbr.rel (%p184) target = $region36
    $region35: #{plain_block_forward.2} parent=5 // pred_region
      %s188 = ssub.s32 %s11, 1
      %p189 = scmp.lt.s32.totalorder %s21, 3
      %s190 = scalar_select %p189, %s21, 3
      %p191 = scmp.lt.s32.totalorder %s20, 1
      %s192 = scalar_select %p191, %s20, 1
      %s193 = smul.addr %s192, 32
      %s194 = smul.addr %s190, 64
      %s195 = sadd.s32 %s193, %s194
      %s196 = smul.addr %s195, 4
      %s197 = scalar_lea.vmem %s0, %s196
      %p198 = pneg %p51
      %p199 = pneg %p48
      %p200 = pneg %p72
      %p201 = pneg %p69
      %p202 = pneg %p93
      %p203 = pneg %p90
      %p204 = pneg %p114
      %p205 = pneg %p111
      %p206 = pneg %p142
      %p207 = pneg %p139
      %p208 = scmp.lt.s32.totalorder %s21, 3
      %s209 = scalar_select %p208, %s21, 3
      %p210 = scmp.lt.s32.totalorder %s20, 1
      %s211 = scalar_select %p210, %s20, 1
      %s212 = smul.addr %s211, 32
      %s213 = smul.addr %s209, 64
      %s214 = sadd.s32 %s212, %s213
      %s215 = smul.addr %s214, 4
      %s216 = scalar_lea.vmem %s4, %s215
      %p217 = scmp.lt.s32.totalorder %s21, 3
      %s218 = scalar_select %p217, %s21, 3
      %p219 = scmp.lt.s32.totalorder %s20, 1
      %s220 = scalar_select %p219, %s20, 1
      %s221 = smul.addr %s220, 32
      %s222 = smul.addr %s218, 64
      %s223 = sadd.s32 %s221, %s222
      %s224 = smul.addr %s223, 4
      %s225 = scalar_lea.vmem %s0, %s224
      %p226 = scmp.lt.s32.totalorder %s21, 3
      %s227 = scalar_select %p226, %s21, 3
      %p228 = scmp.lt.s32.totalorder %s20, 1
      %s229 = scalar_select %p228, %s20, 1
      %s230 = smul.addr %s229, 32
      %s231 = smul.addr %s227, 64
      %s232 = sadd.s32 %s230, %s231
      %s233 = smul.addr %s232, 4
      %s234 = scalar_lea.vmem %s4, %s233
      %p236 = scmp.eq.s32.totalorder %s21, 0
      // Predicated region
      $region37: #{plain_block_forward.2} parent=35 // pred_check
        %p237 = pneg %p236
      $region38: #{plain_block_forward.2} parent=35 // pred_check_branch
        %239 = sbr.rel (%p237) target = $region40
      $region39: #{plain_block_forward.2} parent=35 // pred_region
        %vm240 = vcmask 64512
        %241 = vst.msk [vmem:[#allocation2] sm:$0xff] %vm240, 0.0
        %242 = vst.msk [vmem:[#allocation2 + $0x8] sm:$0xff] %vm240, 0.0
        %243 = vst.msk [vmem:[#allocation2 + $0x10] sm:$0xff] %vm240, 0.0
        %244 = vst.msk [vmem:[#allocation2 + $0x18] sm:$0xff] %vm240, 0.0
        %245 = vst.msk [vmem:[#allocation2 + $0x20] sm:$0xff] %vm240, 0.0
        %246 = vst.msk [vmem:[#allocation2 + $0x28] sm:$0xff] %vm240, 0.0
        %247 = vst.msk [vmem:[#allocation2 + $0x30] sm:$0xff] %vm240, 0.0
        %248 = vst.msk [vmem:[#allocation2 + $0x38] sm:$0xff] %vm240, 0.0
        %249 = vst.msk [vmem:[#allocation2 + $0x40] sm:$0xff] %vm240, 0.0
        %250 = vst.msk [vmem:[#allocation2 + $0x48] sm:$0xff] %vm240, 0.0
        %251 = vst.msk [vmem:[#allocation2 + $0x50] sm:$0xff] %vm240, 0.0
        %252 = vst.msk [vmem:[#allocation2 + $0x58] sm:$0xff] %vm240, 0.0
        %253 = vst.msk [vmem:[#allocation2 + $0x60] sm:$0xff] %vm240, 0.0
        %254 = vst.msk [vmem:[#allocation2 + $0x68] sm:$0xff] %vm240, 0.0
        %255 = vst.msk [vmem:[#allocation2 + $0x70] sm:$0xff] %vm240, 0.0
        %256 = vst.msk [vmem:[#allocation2 + $0x78] sm:$0xff] %vm240, 0.0
        %257 = vst.msk [vmem:[#allocation2 + $0x80] sm:$0xff] %vm240, 0.0
        %258 = vst.msk [vmem:[#allocation2 + $0x88] sm:$0xff] %vm240, 0.0
        %259 = vst.msk [vmem:[#allocation2 + $0x90] sm:$0xff] %vm240, 0.0
        %260 = vst.msk [vmem:[#allocation2 + $0x98] sm:$0xff] %vm240, 0.0
        %261 = vst.msk [vmem:[#allocation2 + $0xa0] sm:$0xff] %vm240, 0.0
        %262 = vst.msk [vmem:[#allocation2 + $0xa8] sm:$0xff] %vm240, 0.0
        %263 = vst.msk [vmem:[#allocation2 + $0xb0] sm:$0xff] %vm240, 0.0
        %264 = vst.msk [vmem:[#allocation2 + $0xb8] sm:$0xff] %vm240, 0.0
        %265 = vst.msk [vmem:[#allocation2 + $0xc0] sm:$0xff] %vm240, 0.0
        %266 = vst.msk [vmem:[#allocation2 + $0xc8] sm:$0xff] %vm240, 0.0
        %267 = vst.msk [vmem:[#allocation2 + $0xd0] sm:$0xff] %vm240, 0.0
        %268 = vst.msk [vmem:[#allocation2 + $0xd8] sm:$0xff] %vm240, 0.0
        %269 = vst.msk [vmem:[#allocation2 + $0xe0] sm:$0xff] %vm240, 0.0
        %270 = vst.msk [vmem:[#allocation2 + $0xe8] sm:$0xff] %vm240, 0.0
        %271 = vst.msk [vmem:[#allocation2 + $0xf0] sm:$0xff] %vm240, 0.0
        %272 = vst.msk [vmem:[#allocation2 + $0xf8] sm:$0xff] %vm240, 0.0
      $region40: #{plain_block_forward.2} parent=35 // pred_fallthru
        _
      %v273 = vld [vmem:[%s225] sm:$0xf]
      %v274 = vld [vmem:[%s225 + $0x4] sm:$0xf]
      %v275 = vld [vmem:[%s225 + $0x8] sm:$0xf]
      %v276 = vld [vmem:[%s225 + $0xc] sm:$0xf]
      %v277 = vld [vmem:[%s225 + $0x10] sm:$0xf]
      %v278 = vld [vmem:[%s225 + $0x14] sm:$0xf]
      %v279 = vld [vmem:[%s225 + $0x18] sm:$0xf]
      %v280 = vld [vmem:[%s225 + $0x1c] sm:$0xf]
      %v281 = vld [vmem:[%s225 + $0x20] sm:$0xf]
      %v282 = vld [vmem:[%s225 + $0x24] sm:$0xf]
      %v283 = vld [vmem:[%s225 + $0x28] sm:$0xf]
      %v284 = vld [vmem:[%s225 + $0x2c] sm:$0xf]
      %v285 = vld [vmem:[%s225 + $0x30] sm:$0xf]
      %v286 = vld [vmem:[%s225 + $0x34] sm:$0xf]
      %v287 = vld [vmem:[%s225 + $0x38] sm:$0xf]
      %v288 = vld [vmem:[%s225 + $0x3c] sm:$0xf]
      %v289 = vld [vmem:[%s225 + $0x40] sm:$0xf]
      %v290 = vld [vmem:[%s225 + $0x44] sm:$0xf]
      %v291 = vld [vmem:[%s225 + $0x48] sm:$0xf]
      %v292 = vld [vmem:[%s225 + $0x4c] sm:$0xf]
      %v293 = vld [vmem:[%s225 + $0x50] sm:$0xf]
      %v294 = vld [vmem:[%s225 + $0x54] sm:$0xf]
      %v295 = vld [vmem:[%s225 + $0x58] sm:$0xf]
      %v296 = vld [vmem:[%s225 + $0x5c] sm:$0xf]
      %v297 = vld [vmem:[%s225 + $0x60] sm:$0xf]
      %v298 = vld [vmem:[%s225 + $0x64] sm:$0xf]
      %v299 = vld [vmem:[%s225 + $0x68] sm:$0xf]
      %v300 = vld [vmem:[%s225 + $0x6c] sm:$0xf]
      %v301 = vld [vmem:[%s225 + $0x70] sm:$0xf]
      %v302 = vld [vmem:[%s225 + $0x74] sm:$0xf]
      %v303 = vld [vmem:[%s225 + $0x78] sm:$0xf]
      %v304 = vld [vmem:[%s225 + $0x7c] sm:$0xf]
      %v305 = vunpack.c.l.bf16 %v273
      %v306 = vunpack.c.l.bf16 %v274
      %v307 = vunpack.c.l.bf16 %v275
      %v308 = vunpack.c.l.bf16 %v276
      %v309 = vunpack.c.l.bf16 %v277
      %v310 = vunpack.c.l.bf16 %v278
      %v311 = vunpack.c.l.bf16 %v279
      %v312 = vunpack.c.l.bf16 %v280
      %v313 = vunpack.c.l.bf16 %v281
      %v314 = vunpack.c.l.bf16 %v282
      %v315 = vunpack.c.l.bf16 %v283
      %v316 = vunpack.c.l.bf16 %v284
      %v317 = vunpack.c.l.bf16 %v285
      %v318 = vunpack.c.l.bf16 %v286
      %v319 = vunpack.c.l.bf16 %v287
      %v320 = vunpack.c.l.bf16 %v288
      %v321 = vunpack.c.l.bf16 %v289
      %v322 = vunpack.c.l.bf16 %v290
      %v323 = vunpack.c.l.bf16 %v291
      %v324 = vunpack.c.l.bf16 %v292
      %v325 = vunpack.c.l.bf16 %v293
      %v326 = vunpack.c.l.bf16 %v294
      %v327 = vunpack.c.l.bf16 %v295
      %v328 = vunpack.c.l.bf16 %v296
      %v329 = vunpack.c.l.bf16 %v297
      %v330 = vunpack.c.l.bf16 %v298
      %v331 = vunpack.c.l.bf16 %v299
      %v332 = vunpack.c.l.bf16 %v300
      %v333 = vunpack.c.l.bf16 %v301
      %v334 = vunpack.c.l.bf16 %v302
      %v335 = vunpack.c.l.bf16 %v303
      %v336 = vunpack.c.l.bf16 %v304
      %vm370 = vcmask 1040384
      %v371 = vrot.slane 0.0, 7
      %v372 = vsel %vm370, %v371, %v371
      %v373 = vrot.slane %v305, 7
      %v374 = vrot.slane %v306, 7
      %v375 = vsel %vm370, %v373, %v374
      %v376 = vrot.slane %v307, 7
      %v377 = vrot.slane %v308, 7
      %v378 = vsel %vm370, %v376, %v377
      %v379 = vrot.slane %v309, 7
      %v380 = vrot.slane %v310, 7
      %v381 = vsel %vm370, %v379, %v380
      %v382 = vrot.slane %v311, 7
      %v383 = vrot.slane %v312, 7
      %v384 = vsel %vm370, %v382, %v383
      %v385 = vrot.slane %v313, 7
      %v386 = vrot.slane %v314, 7
      %v387 = vsel %vm370, %v385, %v386
      %v388 = vrot.slane %v315, 7
      %v389 = vrot.slane %v316, 7
      %v390 = vsel %vm370, %v388, %v389
      %v391 = vrot.slane %v317, 7
      %v392 = vrot.slane %v318, 7
      %v393 = vsel %vm370, %v391, %v392
      %v394 = vrot.slane %v319, 7
      %v395 = vrot.slane %v320, 7
      %v396 = vsel %vm370, %v394, %v395
      %v397 = vrot.slane %v321, 7
      %v398 = vrot.slane %v322, 7
      %v399 = vsel %vm370, %v397, %v398
      %v400 = vrot.slane %v323, 7
      %v401 = vrot.slane %v324, 7
      %v402 = vsel %vm370, %v400, %v401
      %v403 = vrot.slane %v325, 7
      %v404 = vrot.slane %v326, 7
      %v405 = vsel %vm370, %v403, %v404
      %v406 = vrot.slane %v327, 7
      %v407 = vrot.slane %v328, 7
      %v408 = vsel %vm370, %v406, %v407
      %v409 = vrot.slane %v329, 7
      %v410 = vrot.slane %v330, 7
      %v411 = vsel %vm370, %v409, %v410
      %v412 = vrot.slane %v331, 7
      %v413 = vrot.slane %v332, 7
      %v414 = vsel %vm370, %v412, %v413
      %v415 = vrot.slane %v333, 7
      %v416 = vrot.slane %v334, 7
      %v417 = vsel %vm370, %v415, %v416
      %v418 = vrot.slane %v335, 7
      %v419 = vrot.slane %v336, 7
      %v420 = vsel %vm370, %v418, %v419
      %v470 = vsel %vm370, 0.0, %v371
      %v471 = vsel %vm370, 0.0, %v373
      %v472 = vsel %vm370, 0.0, %v376
      %v473 = vsel %vm370, 0.0, %v379
      %v474 = vsel %vm370, 0.0, %v382
      %v475 = vsel %vm370, 0.0, %v385
      %v476 = vsel %vm370, 0.0, %v388
      %v477 = vsel %vm370, 0.0, %v391
      %v478 = vsel %vm370, 0.0, %v394
      %v479 = vsel %vm370, 0.0, %v397
      %v480 = vsel %vm370, 0.0, %v400
      %v481 = vsel %vm370, 0.0, %v403
      %v482 = vsel %vm370, 0.0, %v406
      %v483 = vsel %vm370, 0.0, %v409
      %v484 = vsel %vm370, 0.0, %v412
      %v485 = vsel %vm370, 0.0, %v415
      %v486 = vsel %vm370, 0.0, %v418
      %v487 = vsel %vm370, %v371, 0.0
      %v488 = vsel %vm370, %v374, 0.0
      %v489 = vsel %vm370, %v377, 0.0
      %v490 = vsel %vm370, %v380, 0.0
      %v491 = vsel %vm370, %v383, 0.0
      %v492 = vsel %vm370, %v386, 0.0
      %v493 = vsel %vm370, %v389, 0.0
      %v494 = vsel %vm370, %v392, 0.0
      %v495 = vsel %vm370, %v395, 0.0
      %v496 = vsel %vm370, %v398, 0.0
      %v497 = vsel %vm370, %v401, 0.0
      %v498 = vsel %vm370, %v404, 0.0
      %v499 = vsel %vm370, %v407, 0.0
      %v500 = vsel %vm370, %v410, 0.0
      %v501 = vsel %vm370, %v413, 0.0
      %v502 = vsel %vm370, %v416, 0.0
      %v503 = vsel %vm370, %v419, 0.0
      %vm536 = vcmask 1046528
      %v537 = vrot.slane %v470, 1
      %v538 = vrot.slane %v372, 1
      %v539 = vsel %vm536, %v537, %v538
      %v540 = vrot.slane %v487, 1
      %v541 = vsel %vm536, %v538, %v540
      %v542 = vrot.slane %v471, 1
      %v543 = vrot.slane %v375, 1
      %v544 = vsel %vm536, %v542, %v543
      %v545 = vrot.slane %v488, 1
      %v546 = vsel %vm536, %v543, %v545
      %v547 = vrot.slane %v472, 1
      %v548 = vrot.slane %v378, 1
      %v549 = vsel %vm536, %v547, %v548
      %v550 = vrot.slane %v489, 1
      %v551 = vsel %vm536, %v548, %v550
      %v552 = vrot.slane %v473, 1
      %v553 = vrot.slane %v381, 1
      %v554 = vsel %vm536, %v552, %v553
      %v555 = vrot.slane %v490, 1
      %v556 = vsel %vm536, %v553, %v555
      %v557 = vrot.slane %v474, 1
      %v558 = vrot.slane %v384, 1
      %v559 = vsel %vm536, %v557, %v558
      %v560 = vrot.slane %v491, 1
      %v561 = vsel %vm536, %v558, %v560
      %v562 = vrot.slane %v475, 1
      %v563 = vrot.slane %v387, 1
      %v564 = vsel %vm536, %v562, %v563
      %v565 = vrot.slane %v492, 1
      %v566 = vsel %vm536, %v563, %v565
      %v567 = vrot.slane %v476, 1
      %v568 = vrot.slane %v390, 1
      %v569 = vsel %vm536, %v567, %v568
      %v570 = vrot.slane %v493, 1
      %v571 = vsel %vm536, %v568, %v570
      %v572 = vrot.slane %v477, 1
      %v573 = vrot.slane %v393, 1
      %v574 = vsel %vm536, %v572, %v573
      %v575 = vrot.slane %v494, 1
      %v576 = vsel %vm536, %v573, %v575
      %v577 = vrot.slane %v478, 1
      %v578 = vrot.slane %v396, 1
      %v579 = vsel %vm536, %v577, %v578
      %v580 = vrot.slane %v495, 1
      %v581 = vsel %vm536, %v578, %v580
      %v582 = vrot.slane %v479, 1
      %v583 = vrot.slane %v399, 1
      %v584 = vsel %vm536, %v582, %v583
      %v585 = vrot.slane %v496, 1
      %v586 = vsel %vm536, %v583, %v585
      %v587 = vrot.slane %v480, 1
      %v588 = vrot.slane %v402, 1
      %v589 = vsel %vm536, %v587, %v588
      %v590 = vrot.slane %v497, 1
      %v591 = vsel %vm536, %v588, %v590
      %v592 = vrot.slane %v481, 1
      %v593 = vrot.slane %v405, 1
      %v594 = vsel %vm536, %v592, %v593
      %v595 = vrot.slane %v498, 1
      %v596 = vsel %vm536, %v593, %v595
      %v597 = vrot.slane %v482, 1
      %v598 = vrot.slane %v408, 1
      %v599 = vsel %vm536, %v597, %v598
      %v600 = vrot.slane %v499, 1
      %v601 = vsel %vm536, %v598, %v600
      %v602 = vrot.slane %v483, 1
      %v603 = vrot.slane %v411, 1
      %v604 = vsel %vm536, %v602, %v603
      %v605 = vrot.slane %v500, 1
      %v606 = vsel %vm536, %v603, %v605
      %v607 = vrot.slane %v484, 1
      %v608 = vrot.slane %v414, 1
      %v609 = vsel %vm536, %v607, %v608
      %v610 = vrot.slane %v501, 1
      %v611 = vsel %vm536, %v608, %v610
      %v612 = vrot.slane %v485, 1
      %v613 = vrot.slane %v417, 1
      %v614 = vsel %vm536, %v612, %v613
      %v615 = vrot.slane %v502, 1
      %v616 = vsel %vm536, %v613, %v615
      %617 = vrot.lane.b32.xlu0 %v539, 4
      %v618 = vpop.permute.xlu0 %617
      %619 = vrot.lane.b32.xlu0 %v541, 4
      %v620 = vpop.permute.xlu0 %619
      %621 = vrot.lane.b32.xlu0 %v544, 4
      %v622 = vpop.permute.xlu0 %621
      %623 = vrot.lane.b32.xlu0 %v546, 4
      %v624 = vpop.permute.xlu0 %623
      %625 = vrot.lane.b32.xlu0 %v549, 4
      %v626 = vpop.permute.xlu0 %625
      %627 = vrot.lane.b32.xlu0 %v551, 4
      %v628 = vpop.permute.xlu0 %627
      %629 = vrot.lane.b32.xlu0 %v554, 4
      %v630 = vpop.permute.xlu0 %629
      %631 = vrot.lane.b32.xlu0 %v556, 4
      %v632 = vpop.permute.xlu0 %631
      %633 = vrot.lane.b32.xlu0 %v559, 4
      %v634 = vpop.permute.xlu0 %633
      %635 = vrot.lane.b32.xlu0 %v561, 4
      %v636 = vpop.permute.xlu0 %635
      %637 = vrot.lane.b32.xlu0 %v564, 4
      %v638 = vpop.permute.xlu0 %637
      %639 = vrot.lane.b32.xlu0 %v566, 4
      %v640 = vpop.permute.xlu0 %639
      %641 = vrot.lane.b32.xlu0 %v569, 4
      %v642 = vpop.permute.xlu0 %641
      %643 = vrot.lane.b32.xlu0 %v571, 4
      %v644 = vpop.permute.xlu0 %643
      %645 = vrot.lane.b32.xlu0 %v574, 4
      %v646 = vpop.permute.xlu0 %645
      %647 = vrot.lane.b32.xlu0 %v576, 4
      %v648 = vpop.permute.xlu0 %647
      %649 = vrot.lane.b32.xlu0 %v579, 4
      %v650 = vpop.permute.xlu0 %649
      %651 = vrot.lane.b32.xlu0 %v581, 4
      %v652 = vpop.permute.xlu0 %651
      %653 = vrot.lane.b32.xlu0 %v584, 4
      %v654 = vpop.permute.xlu0 %653
      %655 = vrot.lane.b32.xlu0 %v586, 4
      %v656 = vpop.permute.xlu0 %655
      %657 = vrot.lane.b32.xlu0 %v589, 4
      %v658 = vpop.permute.xlu0 %657
      %659 = vrot.lane.b32.xlu0 %v591, 4
      %v660 = vpop.permute.xlu0 %659
      %661 = vrot.lane.b32.xlu0 %v594, 4
      %v662 = vpop.permute.xlu0 %661
      %663 = vrot.lane.b32.xlu0 %v596, 4
      %v664 = vpop.permute.xlu0 %663
      %665 = vrot.lane.b32.xlu0 %v599, 4
      %v666 = vpop.permute.xlu0 %665
      %667 = vrot.lane.b32.xlu0 %v601, 4
      %v668 = vpop.permute.xlu0 %667
      %669 = vrot.lane.b32.xlu0 %v604, 4
      %v670 = vpop.permute.xlu0 %669
      %671 = vrot.lane.b32.xlu0 %v606, 4
      %v672 = vpop.permute.xlu0 %671
      %673 = vrot.lane.b32.xlu0 %v609, 4
      %v674 = vpop.permute.xlu0 %673
      %675 = vrot.lane.b32.xlu0 %v611, 4
      %v676 = vpop.permute.xlu0 %675
      %677 = vrot.lane.b32.xlu0 %v614, 4
      %v678 = vpop.permute.xlu0 %677
      %679 = vrot.lane.b32.xlu0 %v616, 4
      %v680 = vpop.permute.xlu0 %679
      %vm713 = vcmask 1045504
      %v714 = vrot.slane %v470, 2
      %v715 = vrot.slane %v372, 2
      %v716 = vsel %vm713, %v714, %v715
      %v717 = vrot.slane %v487, 2
      %v718 = vsel %vm713, %v715, %v717
      %v719 = vrot.slane %v471, 2
      %v720 = vrot.slane %v375, 2
      %v721 = vsel %vm713, %v719, %v720
      %v722 = vrot.slane %v488, 2
      %v723 = vsel %vm713, %v720, %v722
      %v724 = vrot.slane %v472, 2
      %v725 = vrot.slane %v378, 2
      %v726 = vsel %vm713, %v724, %v725
      %v727 = vrot.slane %v489, 2
      %v728 = vsel %vm713, %v725, %v727
      %v729 = vrot.slane %v473, 2
      %v730 = vrot.slane %v381, 2
      %v731 = vsel %vm713, %v729, %v730
      %v732 = vrot.slane %v490, 2
      %v733 = vsel %vm713, %v730, %v732
      %v734 = vrot.slane %v474, 2
      %v735 = vrot.slane %v384, 2
      %v736 = vsel %vm713, %v734, %v735
      %v737 = vrot.slane %v491, 2
      %v738 = vsel %vm713, %v735, %v737
      %v739 = vrot.slane %v475, 2
      %v740 = vrot.slane %v387, 2
      %v741 = vsel %vm713, %v739, %v740
      %v742 = vrot.slane %v492, 2
      %v743 = vsel %vm713, %v740, %v742
      %v744 = vrot.slane %v476, 2
      %v745 = vrot.slane %v390, 2
      %v746 = vsel %vm713, %v744, %v745
      %v747 = vrot.slane %v493, 2
      %v748 = vsel %vm713, %v745, %v747
      %v749 = vrot.slane %v477, 2
      %v750 = vrot.slane %v393, 2
      %v751 = vsel %vm713, %v749, %v750
      %v752 = vrot.slane %v494, 2
      %v753 = vsel %vm713, %v750, %v752
      %v754 = vrot.slane %v478, 2
      %v755 = vrot.slane %v396, 2
      %v756 = vsel %vm713, %v754, %v755
      %v757 = vrot.slane %v495, 2
      %v758 = vsel %vm713, %v755, %v757
      %v759 = vrot.slane %v479, 2
      %v760 = vrot.slane %v399, 2
      %v761 = vsel %vm713, %v759, %v760
      %v762 = vrot.slane %v496, 2
      %v763 = vsel %vm713, %v760, %v762
      %v764 = vrot.slane %v480, 2
      %v765 = vrot.slane %v402, 2
      %v766 = vsel %vm713, %v764, %v765
      %v767 = vrot.slane %v497, 2
      %v768 = vsel %vm713, %v765, %v767
      %v769 = vrot.slane %v481, 2
      %v770 = vrot.slane %v405, 2
      %v771 = vsel %vm713, %v769, %v770
      %v772 = vrot.slane %v498, 2
      %v773 = vsel %vm713, %v770, %v772
      %v774 = vrot.slane %v482, 2
      %v775 = vrot.slane %v408, 2
      %v776 = vsel %vm713, %v774, %v775
      %v777 = vrot.slane %v499, 2
      %v778 = vsel %vm713, %v775, %v777
      %v779 = vrot.slane %v483, 2
      %v780 = vrot.slane %v411, 2
      %v781 = vsel %vm713, %v779, %v780
      %v782 = vrot.slane %v500, 2
      %v783 = vsel %vm713, %v780, %v782
      %v784 = vrot.slane %v484, 2
      %v785 = vrot.slane %v414, 2
      %v786 = vsel %vm713, %v784, %v785
      %v787 = vrot.slane %v501, 2
      %v788 = vsel %vm713, %v785, %v787
      %v789 = vrot.slane %v485, 2
      %v790 = vrot.slane %v417, 2
      %v791 = vsel %vm713, %v789, %v790
      %v792 = vrot.slane %v502, 2
      %v793 = vsel %vm713, %v790, %v792
      %794 = vrot.lane.b32.xlu0 %v716, 8
      %v795 = vpop.permute.xlu0 %794
      %796 = vrot.lane.b32.xlu0 %v718, 8
      %v797 = vpop.permute.xlu0 %796
      %798 = vrot.lane.b32.xlu0 %v721, 8
      %v799 = vpop.permute.xlu0 %798
      %800 = vrot.lane.b32.xlu0 %v723, 8
      %v801 = vpop.permute.xlu0 %800
      %802 = vrot.lane.b32.xlu0 %v726, 8
      %v803 = vpop.permute.xlu0 %802
      %804 = vrot.lane.b32.xlu0 %v728, 8
      %v805 = vpop.permute.xlu0 %804
      %806 = vrot.lane.b32.xlu0 %v731, 8
      %v807 = vpop.permute.xlu0 %806
      %808 = vrot.lane.b32.xlu0 %v733, 8
      %v809 = vpop.permute.xlu0 %808
      %810 = vrot.lane.b32.xlu0 %v736, 8
      %v811 = vpop.permute.xlu0 %810
      %812 = vrot.lane.b32.xlu0 %v738, 8
      %v813 = vpop.permute.xlu0 %812
      %814 = vrot.lane.b32.xlu0 %v741, 8
      %v815 = vpop.permute.xlu0 %814
      %816 = vrot.lane.b32.xlu0 %v743, 8
      %v817 = vpop.permute.xlu0 %816
      %818 = vrot.lane.b32.xlu0 %v746, 8
      %v819 = vpop.permute.xlu0 %818
      %820 = vrot.lane.b32.xlu0 %v748, 8
      %v821 = vpop.permute.xlu0 %820
      %822 = vrot.lane.b32.xlu0 %v751, 8
      %v823 = vpop.permute.xlu0 %822
      %824 = vrot.lane.b32.xlu0 %v753, 8
      %v825 = vpop.permute.xlu0 %824
      %826 = vrot.lane.b32.xlu0 %v756, 8
      %v827 = vpop.permute.xlu0 %826
      %828 = vrot.lane.b32.xlu0 %v758, 8
      %v829 = vpop.permute.xlu0 %828
      %830 = vrot.lane.b32.xlu0 %v761, 8
      %v831 = vpop.permute.xlu0 %830
      %832 = vrot.lane.b32.xlu0 %v763, 8
      %v833 = vpop.permute.xlu0 %832
      %834 = vrot.lane.b32.xlu0 %v766, 8
      %v835 = vpop.permute.xlu0 %834
      %836 = vrot.lane.b32.xlu0 %v768, 8
      %v837 = vpop.permute.xlu0 %836
      %838 = vrot.lane.b32.xlu0 %v771, 8
      %v839 = vpop.permute.xlu0 %838
      %840 = vrot.lane.b32.xlu0 %v773, 8
      %v841 = vpop.permute.xlu0 %840
      %842 = vrot.lane.b32.xlu0 %v776, 8
      %v843 = vpop.permute.xlu0 %842
      %844 = vrot.lane.b32.xlu0 %v778, 8
      %v845 = vpop.permute.xlu0 %844
      %846 = vrot.lane.b32.xlu0 %v781, 8
      %v847 = vpop.permute.xlu0 %846
      %848 = vrot.lane.b32.xlu0 %v783, 8
      %v849 = vpop.permute.xlu0 %848
      %850 = vrot.lane.b32.xlu0 %v786, 8
      %v851 = vpop.permute.xlu0 %850
      %852 = vrot.lane.b32.xlu0 %v788, 8
      %v853 = vpop.permute.xlu0 %852
      %854 = vrot.lane.b32.xlu0 %v791, 8
      %v855 = vpop.permute.xlu0 %854
      %856 = vrot.lane.b32.xlu0 %v793, 8
      %v857 = vpop.permute.xlu0 %856
      %891 = vrot.lane.b32.xlu0 %v471, 12
      %v892 = vpop.permute.xlu0 %891
      %893 = vrot.lane.b32.xlu0 %v375, 12
      %v894 = vpop.permute.xlu0 %893
      %895 = vrot.lane.b32.xlu0 %v472, 12
      %v896 = vpop.permute.xlu0 %895
      %897 = vrot.lane.b32.xlu0 %v378, 12
      %v898 = vpop.permute.xlu0 %897
      %899 = vrot.lane.b32.xlu0 %v473, 12
      %v900 = vpop.permute.xlu0 %899
      %901 = vrot.lane.b32.xlu0 %v381, 12
      %v902 = vpop.permute.xlu0 %901
      %903 = vrot.lane.b32.xlu0 %v474, 12
      %v904 = vpop.permute.xlu0 %903
      %905 = vrot.lane.b32.xlu0 %v384, 12
      %v906 = vpop.permute.xlu0 %905
      %907 = vrot.lane.b32.xlu0 %v475, 12
      %v908 = vpop.permute.xlu0 %907
      %909 = vrot.lane.b32.xlu0 %v387, 12
      %v910 = vpop.permute.xlu0 %909
      %911 = vrot.lane.b32.xlu0 %v476, 12
      %v912 = vpop.permute.xlu0 %911
      %913 = vrot.lane.b32.xlu0 %v390, 12
      %v914 = vpop.permute.xlu0 %913
      %915 = vrot.lane.b32.xlu0 %v477, 12
      %v916 = vpop.permute.xlu0 %915
      %917 = vrot.lane.b32.xlu0 %v393, 12
      %v918 = vpop.permute.xlu0 %917
      %919 = vrot.lane.b32.xlu0 %v478, 12
      %v920 = vpop.permute.xlu0 %919
      %921 = vrot.lane.b32.xlu0 %v396, 12
      %v922 = vpop.permute.xlu0 %921
      %923 = vrot.lane.b32.xlu0 %v479, 12
      %v924 = vpop.permute.xlu0 %923
      %925 = vrot.lane.b32.xlu0 %v399, 12
      %v926 = vpop.permute.xlu0 %925
      %927 = vrot.lane.b32.xlu0 %v480, 12
      %v928 = vpop.permute.xlu0 %927
      %929 = vrot.lane.b32.xlu0 %v402, 12
      %v930 = vpop.permute.xlu0 %929
      %931 = vrot.lane.b32.xlu0 %v481, 12
      %v932 = vpop.permute.xlu0 %931
      %933 = vrot.lane.b32.xlu0 %v405, 12
      %v934 = vpop.permute.xlu0 %933
      %935 = vrot.lane.b32.xlu0 %v482, 12
      %v936 = vpop.permute.xlu0 %935
      %937 = vrot.lane.b32.xlu0 %v408, 12
      %v938 = vpop.permute.xlu0 %937
      %939 = vrot.lane.b32.xlu0 %v483, 12
      %v940 = vpop.permute.xlu0 %939
      %941 = vrot.lane.b32.xlu0 %v411, 12
      %v942 = vpop.permute.xlu0 %941
      %943 = vrot.lane.b32.xlu0 %v484, 12
      %v944 = vpop.permute.xlu0 %943
      %945 = vrot.lane.b32.xlu0 %v414, 12
      %v946 = vpop.permute.xlu0 %945
      %947 = vrot.lane.b32.xlu0 %v485, 12
      %v948 = vpop.permute.xlu0 %947
      %949 = vrot.lane.b32.xlu0 %v417, 12
      %v950 = vpop.permute.xlu0 %949
      %951 = vrot.lane.b32.xlu0 %v486, 12
      %v952 = vpop.permute.xlu0 %951
      %953 = vrot.lane.b32.xlu0 %v420, 12
      %v954 = vpop.permute.xlu0 %953
      %v988 = vrot.slane %v486, 1
      %v989 = vrot.slane %v420, 1
      %v990 = vsel %vm536, %v988, %v989
      %v991 = vrot.slane %v503, 1
      %v992 = vsel %vm536, %v989, %v991
      %993 = vrot.lane.b32.xlu0 %v544, 16
      %v994 = vpop.permute.xlu0 %993
      %995 = vrot.lane.b32.xlu0 %v546, 16
      %v996 = vpop.permute.xlu0 %995
      %997 = vrot.lane.b32.xlu0 %v549, 16
      %v998 = vpop.permute.xlu0 %997
      %999 = vrot.lane.b32.xlu0 %v551, 16
      %v1000 = vpop.permute.xlu0 %999
      %1001 = vrot.lane.b32.xlu0 %v554, 16
      %v1002 = vpop.permute.xlu0 %1001
      %1003 = vrot.lane.b32.xlu0 %v556, 16
      %v1004 = vpop.permute.xlu0 %1003
      %1005 = vrot.lane.b32.xlu0 %v559, 16
      %v1006 = vpop.permute.xlu0 %1005
      %1007 = vrot.lane.b32.xlu0 %v561, 16
      %v1008 = vpop.permute.xlu0 %1007
      %1009 = vrot.lane.b32.xlu0 %v564, 16
      %v1010 = vpop.permute.xlu0 %1009
      %1011 = vrot.lane.b32.xlu0 %v566, 16
      %v1012 = vpop.permute.xlu0 %1011
      %1013 = vrot.lane.b32.xlu0 %v569, 16
      %v1014 = vpop.permute.xlu0 %1013
      %1015 = vrot.lane.b32.xlu0 %v571, 16
      %v1016 = vpop.permute.xlu0 %1015
      %1017 = vrot.lane.b32.xlu0 %v574, 16
      %v1018 = vpop.permute.xlu0 %1017
      %1019 = vrot.lane.b32.xlu0 %v576, 16
      %v1020 = vpop.permute.xlu0 %1019
      %1021 = vrot.lane.b32.xlu0 %v579, 16
      %v1022 = vpop.permute.xlu0 %1021
      %1023 = vrot.lane.b32.xlu0 %v581, 16
      %v1024 = vpop.permute.xlu0 %1023
      %1025 = vrot.lane.b32.xlu0 %v584, 16
      %v1026 = vpop.permute.xlu0 %1025
      %1027 = vrot.lane.b32.xlu0 %v586, 16
      %v1028 = vpop.permute.xlu0 %1027
      %1029 = vrot.lane.b32.xlu0 %v589, 16
      %v1030 = vpop.permute.xlu0 %1029
      %1031 = vrot.lane.b32.xlu0 %v591, 16
      %v1032 = vpop.permute.xlu0 %1031
      %1033 = vrot.lane.b32.xlu0 %v594, 16
      %v1034 = vpop.permute.xlu0 %1033
      %1035 = vrot.lane.b32.xlu0 %v596, 16
      %v1036 = vpop.permute.xlu0 %1035
      %1037 = vrot.lane.b32.xlu0 %v599, 16
      %v1038 = vpop.permute.xlu0 %1037
      %1039 = vrot.lane.b32.xlu0 %v601, 16
      %v1040 = vpop.permute.xlu0 %1039
      %1041 = vrot.lane.b32.xlu0 %v604, 16
      %v1042 = vpop.permute.xlu0 %1041
      %1043 = vrot.lane.b32.xlu0 %v606, 16
      %v1044 = vpop.permute.xlu0 %1043
      %1045 = vrot.lane.b32.xlu0 %v609, 16
      %v1046 = vpop.permute.xlu0 %1045
      %1047 = vrot.lane.b32.xlu0 %v611, 16
      %v1048 = vpop.permute.xlu0 %1047
      %1049 = vrot.lane.b32.xlu0 %v614, 16
      %v1050 = vpop.permute.xlu0 %1049
      %1051 = vrot.lane.b32.xlu0 %v616, 16
      %v1052 = vpop.permute.xlu0 %1051
      %1053 = vrot.lane.b32.xlu0 %v990, 16
      %v1054 = vpop.permute.xlu0 %1053
      %1055 = vrot.lane.b32.xlu0 %v992, 16
      %v1056 = vpop.permute.xlu0 %1055
      %v1089 = vrot.slane %v486, 2
      %v1090 = vrot.slane %v420, 2
      %v1091 = vsel %vm713, %v1089, %v1090
      %v1092 = vrot.slane %v503, 2
      %v1093 = vsel %vm713, %v1090, %v1092
      %1094 = vrot.lane.b32.xlu0 %v721, 20
      %v1095 = vpop.permute.xlu0 %1094
      %1096 = vrot.lane.b32.xlu0 %v723, 20
      %v1097 = vpop.permute.xlu0 %1096
      %1098 = vrot.lane.b32.xlu0 %v726, 20
      %v1099 = vpop.permute.xlu0 %1098
      %1100 = vrot.lane.b32.xlu0 %v728, 20
      %v1101 = vpop.permute.xlu0 %1100
      %1102 = vrot.lane.b32.xlu0 %v731, 20
      %v1103 = vpop.permute.xlu0 %1102
      %1104 = vrot.lane.b32.xlu0 %v733, 20
      %v1105 = vpop.permute.xlu0 %1104
      %1106 = vrot.lane.b32.xlu0 %v736, 20
      %v1107 = vpop.permute.xlu0 %1106
      %1108 = vrot.lane.b32.xlu0 %v738, 20
      %v1109 = vpop.permute.xlu0 %1108
      %1110 = vrot.lane.b32.xlu0 %v741, 20
      %v1111 = vpop.permute.xlu0 %1110
      %1112 = vrot.lane.b32.xlu0 %v743, 20
      %v1113 = vpop.permute.xlu0 %1112
      %1114 = vrot.lane.b32.xlu0 %v746, 20
      %v1115 = vpop.permute.xlu0 %1114
      %1116 = vrot.lane.b32.xlu0 %v748, 20
      %v1117 = vpop.permute.xlu0 %1116
      %1118 = vrot.lane.b32.xlu0 %v751, 20
      %v1119 = vpop.permute.xlu0 %1118
      %1120 = vrot.lane.b32.xlu0 %v753, 20
      %v1121 = vpop.permute.xlu0 %1120
      %1122 = vrot.lane.b32.xlu0 %v756, 20
      %v1123 = vpop.permute.xlu0 %1122
      %1124 = vrot.lane.b32.xlu0 %v758, 20
      %v1125 = vpop.permute.xlu0 %1124
      %1126 = vrot.lane.b32.xlu0 %v761, 20
      %v1127 = vpop.permute.xlu0 %1126
      %1128 = vrot.lane.b32.xlu0 %v763, 20
      %v1129 = vpop.permute.xlu0 %1128
      %1130 = vrot.lane.b32.xlu0 %v766, 20
      %v1131 = vpop.permute.xlu0 %1130
      %1132 = vrot.lane.b32.xlu0 %v768, 20
      %v1133 = vpop.permute.xlu0 %1132
      %1134 = vrot.lane.b32.xlu0 %v771, 20
      %v1135 = vpop.permute.xlu0 %1134
      %1136 = vrot.lane.b32.xlu0 %v773, 20
      %v1137 = vpop.permute.xlu0 %1136
      %1138 = vrot.lane.b32.xlu0 %v776, 20
      %v1139 = vpop.permute.xlu0 %1138
      %1140 = vrot.lane.b32.xlu0 %v778, 20
      %v1141 = vpop.permute.xlu0 %1140
      %1142 = vrot.lane.b32.xlu0 %v781, 20
      %v1143 = vpop.permute.xlu0 %1142
      %1144 = vrot.lane.b32.xlu0 %v783, 20
      %v1145 = vpop.permute.xlu0 %1144
      %1146 = vrot.lane.b32.xlu0 %v786, 20
      %v1147 = vpop.permute.xlu0 %1146
      %1148 = vrot.lane.b32.xlu0 %v788, 20
      %v1149 = vpop.permute.xlu0 %1148
      %1150 = vrot.lane.b32.xlu0 %v791, 20
      %v1151 = vpop.permute.xlu0 %1150
      %1152 = vrot.lane.b32.xlu0 %v793, 20
      %v1153 = vpop.permute.xlu0 %1152
      %1154 = vrot.lane.b32.xlu0 %v1091, 20
      %v1155 = vpop.permute.xlu0 %1154
      %1156 = vrot.lane.b32.xlu0 %v1093, 20
      %v1157 = vpop.permute.xlu0 %1156
      %1190 = vrot.lane.b32.xlu0 %v472, 24
      %v1191 = vpop.permute.xlu0 %1190
      %1192 = vrot.lane.b32.xlu0 %v378, 24
      %v1193 = vpop.permute.xlu0 %1192
      %1194 = vrot.lane.b32.xlu0 %v473, 24
      %v1195 = vpop.permute.xlu0 %1194
      %1196 = vrot.lane.b32.xlu0 %v381, 24
      %v1197 = vpop.permute.xlu0 %1196
      %1198 = vrot.lane.b32.xlu0 %v474, 24
      %v1199 = vpop.permute.xlu0 %1198
      %1200 = vrot.lane.b32.xlu0 %v384, 24
      %v1201 = vpop.permute.xlu0 %1200
      %1202 = vrot.lane.b32.xlu0 %v475, 24
      %v1203 = vpop.permute.xlu0 %1202
      %1204 = vrot.lane.b32.xlu0 %v387, 24
      %v1205 = vpop.permute.xlu0 %1204
      %1206 = vrot.lane.b32.xlu0 %v476, 24
      %v1207 = vpop.permute.xlu0 %1206
      %1208 = vrot.lane.b32.xlu0 %v390, 24
      %v1209 = vpop.permute.xlu0 %1208
      %1210 = vrot.lane.b32.xlu0 %v477, 24
      %v1211 = vpop.permute.xlu0 %1210
      %1212 = vrot.lane.b32.xlu0 %v393, 24
      %v1213 = vpop.permute.xlu0 %1212
      %1214 = vrot.lane.b32.xlu0 %v478, 24
      %v1215 = vpop.permute.xlu0 %1214
      %1216 = vrot.lane.b32.xlu0 %v396, 24
      %v1217 = vpop.permute.xlu0 %1216
      %1218 = vrot.lane.b32.xlu0 %v479, 24
      %v1219 = vpop.permute.xlu0 %1218
      %1220 = vrot.lane.b32.xlu0 %v399, 24
      %v1221 = vpop.permute.xlu0 %1220
      %1222 = vrot.lane.b32.xlu0 %v480, 24
      %v1223 = vpop.permute.xlu0 %1222
      %1224 = vrot.lane.b32.xlu0 %v402, 24
      %v1225 = vpop.permute.xlu0 %1224
      %1226 = vrot.lane.b32.xlu0 %v481, 24
      %v1227 = vpop.permute.xlu0 %1226
      %1228 = vrot.lane.b32.xlu0 %v405, 24
      %v1229 = vpop.permute.xlu0 %1228
      %1230 = vrot.lane.b32.xlu0 %v482, 24
      %v1231 = vpop.permute.xlu0 %1230
      %1232 = vrot.lane.b32.xlu0 %v408, 24
      %v1233 = vpop.permute.xlu0 %1232
      %1234 = vrot.lane.b32.xlu0 %v483, 24
      %v1235 = vpop.permute.xlu0 %1234
      %1236 = vrot.lane.b32.xlu0 %v411, 24
      %v1237 = vpop.permute.xlu0 %1236
      %1238 = vrot.lane.b32.xlu0 %v484, 24
      %v1239 = vpop.permute.xlu0 %1238
      %1240 = vrot.lane.b32.xlu0 %v414, 24
      %v1241 = vpop.permute.xlu0 %1240
      %1242 = vrot.lane.b32.xlu0 %v485, 24
      %v1243 = vpop.permute.xlu0 %1242
      %1244 = vrot.lane.b32.xlu0 %v417, 24
      %v1245 = vpop.permute.xlu0 %1244
      %1246 = vrot.lane.b32.xlu0 %v486, 24
      %v1247 = vpop.permute.xlu0 %1246
      %1248 = vrot.lane.b32.xlu0 %v420, 24
      %v1249 = vpop.permute.xlu0 %1248
      %1250 = vrot.lane.b32.xlu0 %v470, 24
      %v1251 = vpop.permute.xlu0 %1250
      %1252 = vrot.lane.b32.xlu0 %v372, 24
      %v1253 = vpop.permute.xlu0 %1252
      %1286 = vrot.lane.b32.xlu0 %v549, 28
      %v1287 = vpop.permute.xlu0 %1286
      %1288 = vrot.lane.b32.xlu0 %v551, 28
      %v1289 = vpop.permute.xlu0 %1288
      %1290 = vrot.lane.b32.xlu0 %v554, 28
      %v1291 = vpop.permute.xlu0 %1290
      %1292 = vrot.lane.b32.xlu0 %v556, 28
      %v1293 = vpop.permute.xlu0 %1292
      %1294 = vrot.lane.b32.xlu0 %v559, 28
      %v1295 = vpop.permute.xlu0 %1294
      %1296 = vrot.lane.b32.xlu0 %v561, 28
      %v1297 = vpop.permute.xlu0 %1296
      %1298 = vrot.lane.b32.xlu0 %v564, 28
      %v1299 = vpop.permute.xlu0 %1298
      %1300 = vrot.lane.b32.xlu0 %v566, 28
      %v1301 = vpop.permute.xlu0 %1300
      %1302 = vrot.lane.b32.xlu0 %v569, 28
      %v1303 = vpop.permute.xlu0 %1302
      %1304 = vrot.lane.b32.xlu0 %v571, 28
      %v1305 = vpop.permute.xlu0 %1304
      %1306 = vrot.lane.b32.xlu0 %v574, 28
      %v1307 = vpop.permute.xlu0 %1306
      %1308 = vrot.lane.b32.xlu0 %v576, 28
      %v1309 = vpop.permute.xlu0 %1308
      %1310 = vrot.lane.b32.xlu0 %v579, 28
      %v1311 = vpop.permute.xlu0 %1310
      %1312 = vrot.lane.b32.xlu0 %v581, 28
      %v1313 = vpop.permute.xlu0 %1312
      %1314 = vrot.lane.b32.xlu0 %v584, 28
      %v1315 = vpop.permute.xlu0 %1314
      %1316 = vrot.lane.b32.xlu0 %v586, 28
      %v1317 = vpop.permute.xlu0 %1316
      %1318 = vrot.lane.b32.xlu0 %v589, 28
      %v1319 = vpop.permute.xlu0 %1318
      %1320 = vrot.lane.b32.xlu0 %v591, 28
      %v1321 = vpop.permute.xlu0 %1320
      %1322 = vrot.lane.b32.xlu0 %v594, 28
      %v1323 = vpop.permute.xlu0 %1322
      %1324 = vrot.lane.b32.xlu0 %v596, 28
      %v1325 = vpop.permute.xlu0 %1324
      %1326 = vrot.lane.b32.xlu0 %v599, 28
      %v1327 = vpop.permute.xlu0 %1326
      %1328 = vrot.lane.b32.xlu0 %v601, 28
      %v1329 = vpop.permute.xlu0 %1328
      %1330 = vrot.lane.b32.xlu0 %v604, 28
      %v1331 = vpop.permute.xlu0 %1330
      %1332 = vrot.lane.b32.xlu0 %v606, 28
      %v1333 = vpop.permute.xlu0 %1332
      %1334 = vrot.lane.b32.xlu0 %v609, 28
      %v1335 = vpop.permute.xlu0 %1334
      %1336 = vrot.lane.b32.xlu0 %v611, 28
      %v1337 = vpop.permute.xlu0 %1336
      %1338 = vrot.lane.b32.xlu0 %v614, 28
      %v1339 = vpop.permute.xlu0 %1338
      %1340 = vrot.lane.b32.xlu0 %v616, 28
      %v1341 = vpop.permute.xlu0 %1340
      %1342 = vrot.lane.b32.xlu0 %v990, 28
      %v1343 = vpop.permute.xlu0 %1342
      %1344 = vrot.lane.b32.xlu0 %v992, 28
      %v1345 = vpop.permute.xlu0 %1344
      %1346 = vrot.lane.b32.xlu0 %v539, 28
      %v1347 = vpop.permute.xlu0 %1346
      %1348 = vrot.lane.b32.xlu0 %v541, 28
      %v1349 = vpop.permute.xlu0 %1348
      %1382 = vrot.lane.b32.xlu0 %v726, 32
      %v1383 = vpop.permute.xlu0 %1382
      %1384 = vrot.lane.b32.xlu0 %v728, 32
      %v1385 = vpop.permute.xlu0 %1384
      %1386 = vrot.lane.b32.xlu0 %v731, 32
      %v1387 = vpop.permute.xlu0 %1386
      %1388 = vrot.lane.b32.xlu0 %v733, 32
      %v1389 = vpop.permute.xlu0 %1388
      %1390 = vrot.lane.b32.xlu0 %v736, 32
      %v1391 = vpop.permute.xlu0 %1390
      %1392 = vrot.lane.b32.xlu0 %v738, 32
      %v1393 = vpop.permute.xlu0 %1392
      %1394 = vrot.lane.b32.xlu0 %v741, 32
      %v1395 = vpop.permute.xlu0 %1394
      %1396 = vrot.lane.b32.xlu0 %v743, 32
      %v1397 = vpop.permute.xlu0 %1396
      %1398 = vrot.lane.b32.xlu0 %v746, 32
      %v1399 = vpop.permute.xlu0 %1398
      %1400 = vrot.lane.b32.xlu0 %v748, 32
      %v1401 = vpop.permute.xlu0 %1400
      %1402 = vrot.lane.b32.xlu0 %v751, 32
      %v1403 = vpop.permute.xlu0 %1402
      %1404 = vrot.lane.b32.xlu0 %v753, 32
      %v1405 = vpop.permute.xlu0 %1404
      %1406 = vrot.lane.b32.xlu0 %v756, 32
      %v1407 = vpop.permute.xlu0 %1406
      %1408 = vrot.lane.b32.xlu0 %v758, 32
      %v1409 = vpop.permute.xlu0 %1408
      %1410 = vrot.lane.b32.xlu0 %v761, 32
      %v1411 = vpop.permute.xlu0 %1410
      %1412 = vrot.lane.b32.xlu0 %v763, 32
      %v1413 = vpop.permute.xlu0 %1412
      %1414 = vrot.lane.b32.xlu0 %v766, 32
      %v1415 = vpop.permute.xlu0 %1414
      %1416 = vrot.lane.b32.xlu0 %v768, 32
      %v1417 = vpop.permute.xlu0 %1416
      %1418 = vrot.lane.b32.xlu0 %v771, 32
      %v1419 = vpop.permute.xlu0 %1418
      %1420 = vrot.lane.b32.xlu0 %v773, 32
      %v1421 = vpop.permute.xlu0 %1420
      %1422 = vrot.lane.b32.xlu0 %v776, 32
      %v1423 = vpop.permute.xlu0 %1422
      %1424 = vrot.lane.b32.xlu0 %v778, 32
      %v1425 = vpop.permute.xlu0 %1424
      %1426 = vrot.lane.b32.xlu0 %v781, 32
      %v1427 = vpop.permute.xlu0 %1426
      %1428 = vrot.lane.b32.xlu0 %v783, 32
      %v1429 = vpop.permute.xlu0 %1428
      %1430 = vrot.lane.b32.xlu0 %v786, 32
      %v1431 = vpop.permute.xlu0 %1430
      %1432 = vrot.lane.b32.xlu0 %v788, 32
      %v1433 = vpop.permute.xlu0 %1432
      %1434 = vrot.lane.b32.xlu0 %v791, 32
      %v1435 = vpop.permute.xlu0 %1434
      %1436 = vrot.lane.b32.xlu0 %v793, 32
      %v1437 = vpop.permute.xlu0 %1436
      %1438 = vrot.lane.b32.xlu0 %v1091, 32
      %v1439 = vpop.permute.xlu0 %1438
      %1440 = vrot.lane.b32.xlu0 %v1093, 32
      %v1441 = vpop.permute.xlu0 %1440
      %1442 = vrot.lane.b32.xlu0 %v716, 32
      %v1443 = vpop.permute.xlu0 %1442
      %1444 = vrot.lane.b32.xlu0 %v718, 32
      %v1445 = vpop.permute.xlu0 %1444
      %vm1478 = vcmask 31744
      %v1479 = vsel %vm1478, %v470, %v618
      %v1480 = vsel %vm1478, %v372, %v620
      %v1481 = vsel %vm1478, %v471, %v622
      %v1482 = vsel %vm1478, %v375, %v624
      %v1483 = vsel %vm1478, %v472, %v626
      %v1484 = vsel %vm1478, %v378, %v628
      %v1485 = vsel %vm1478, %v473, %v630
      %v1486 = vsel %vm1478, %v381, %v632
      %v1487 = vsel %vm1478, %v474, %v634
      %v1488 = vsel %vm1478, %v384, %v636
      %v1489 = vsel %vm1478, %v475, %v638
      %v1490 = vsel %vm1478, %v387, %v640
      %v1491 = vsel %vm1478, %v476, %v642
      %v1492 = vsel %vm1478, %v390, %v644
      %v1493 = vsel %vm1478, %v477, %v646
      %v1494 = vsel %vm1478, %v393, %v648
      %v1495 = vsel %vm1478, %v478, %v650
      %v1496 = vsel %vm1478, %v396, %v652
      %v1497 = vsel %vm1478, %v479, %v654
      %v1498 = vsel %vm1478, %v399, %v656
      %v1499 = vsel %vm1478, %v480, %v658
      %v1500 = vsel %vm1478, %v402, %v660
      %v1501 = vsel %vm1478, %v481, %v662
      %v1502 = vsel %vm1478, %v405, %v664
      %v1503 = vsel %vm1478, %v482, %v666
      %v1504 = vsel %vm1478, %v408, %v668
      %v1505 = vsel %vm1478, %v483, %v670
      %v1506 = vsel %vm1478, %v411, %v672
      %v1507 = vsel %vm1478, %v484, %v674
      %v1508 = vsel %vm1478, %v414, %v676
      %v1509 = vsel %vm1478, %v485, %v678
      %v1510 = vsel %vm1478, %v417, %v680
      %vm1511 = vcmask 64512
      %v1512 = vsel %vm1511, %v1479, %v795
      %v1513 = vsel %vm1511, %v1480, %v797
      %v1514 = vsel %vm1511, %v1481, %v799
      %v1515 = vsel %vm1511, %v1482, %v801
      %v1516 = vsel %vm1511, %v1483, %v803
      %v1517 = vsel %vm1511, %v1484, %v805
      %v1518 = vsel %vm1511, %v1485, %v807
      %v1519 = vsel %vm1511, %v1486, %v809
      %v1520 = vsel %vm1511, %v1487, %v811
      %v1521 = vsel %vm1511, %v1488, %v813
      %v1522 = vsel %vm1511, %v1489, %v815
      %v1523 = vsel %vm1511, %v1490, %v817
      %v1524 = vsel %vm1511, %v1491, %v819
      %v1525 = vsel %vm1511, %v1492, %v821
      %v1526 = vsel %vm1511, %v1493, %v823
      %v1527 = vsel %vm1511, %v1494, %v825
      %v1528 = vsel %vm1511, %v1495, %v827
      %v1529 = vsel %vm1511, %v1496, %v829
      %v1530 = vsel %vm1511, %v1497, %v831
      %v1531 = vsel %vm1511, %v1498, %v833
      %v1532 = vsel %vm1511, %v1499, %v835
      %v1533 = vsel %vm1511, %v1500, %v837
      %v1534 = vsel %vm1511, %v1501, %v839
      %v1535 = vsel %vm1511, %v1502, %v841
      %v1536 = vsel %vm1511, %v1503, %v843
      %v1537 = vsel %vm1511, %v1504, %v845
      %v1538 = vsel %vm1511, %v1505, %v847
      %v1539 = vsel %vm1511, %v1506, %v849
      %v1540 = vsel %vm1511, %v1507, %v851
      %v1541 = vsel %vm1511, %v1508, %v853
      %v1542 = vsel %vm1511, %v1509, %v855
      %v1543 = vsel %vm1511, %v1510, %v857
      %vm1544 = vcmask 97280
      %v1545 = vsel %vm1544, %v1512, %v892
      %v1546 = vsel %vm1544, %v1513, %v894
      %v1547 = vsel %vm1544, %v1514, %v896
      %v1548 = vsel %vm1544, %v1515, %v898
      %v1549 = vsel %vm1544, %v1516, %v900
      %v1550 = vsel %vm1544, %v1517, %v902
      %v1551 = vsel %vm1544, %v1518, %v904
      %v1552 = vsel %vm1544, %v1519, %v906
      %v1553 = vsel %vm1544, %v1520, %v908
      %v1554 = vsel %vm1544, %v1521, %v910
      %v1555 = vsel %vm1544, %v1522, %v912
      %v1556 = vsel %vm1544, %v1523, %v914
      %v1557 = vsel %vm1544, %v1524, %v916
      %v1558 = vsel %vm1544, %v1525, %v918
      %v1559 = vsel %vm1544, %v1526, %v920
      %v1560 = vsel %vm1544, %v1527, %v922
      %v1561 = vsel %vm1544, %v1528, %v924
      %v1562 = vsel %vm1544, %v1529, %v926
      %v1563 = vsel %vm1544, %v1530, %v928
      %v1564 = vsel %vm1544, %v1531, %v930
      %v1565 = vsel %vm1544, %v1532, %v932
      %v1566 = vsel %vm1544, %v1533, %v934
      %v1567 = vsel %vm1544, %v1534, %v936
      %v1568 = vsel %vm1544, %v1535, %v938
      %v1569 = vsel %vm1544, %v1536, %v940
      %v1570 = vsel %vm1544, %v1537, %v942
      %v1571 = vsel %vm1544, %v1538, %v944
      %v1572 = vsel %vm1544, %v1539, %v946
      %v1573 = vsel %vm1544, %v1540, %v948
      %v1574 = vsel %vm1544, %v1541, %v950
      %v1575 = vsel %vm1544, %v1542, %v952
      %v1576 = vsel %vm1544, %v1543, %v954
      %vm1577 = vcmask 130048
      %v1578 = vsel %vm1577, %v1545, %v994
      %v1579 = vsel %vm1577, %v1546, %v996
      %v1580 = vsel %vm1577, %v1547, %v998
      %v1581 = vsel %vm1577, %v1548, %v1000
      %v1582 = vsel %vm1577, %v1549, %v1002
      %v1583 = vsel %vm1577, %v1550, %v1004
      %v1584 = vsel %vm1577, %v1551, %v1006
      %v1585 = vsel %vm1577, %v1552, %v1008
      %v1586 = vsel %vm1577, %v1553, %v1010
      %v1587 = vsel %vm1577, %v1554, %v1012
      %v1588 = vsel %vm1577, %v1555, %v1014
      %v1589 = vsel %vm1577, %v1556, %v1016
      %v1590 = vsel %vm1577, %v1557, %v1018
      %v1591 = vsel %vm1577, %v1558, %v1020
      %v1592 = vsel %vm1577, %v1559, %v1022
      %v1593 = vsel %vm1577, %v1560, %v1024
      %v1594 = vsel %vm1577, %v1561, %v1026
      %v1595 = vsel %vm1577, %v1562, %v1028
      %v1596 = vsel %vm1577, %v1563, %v1030
      %v1597 = vsel %vm1577, %v1564, %v1032
      %v1598 = vsel %vm1577, %v1565, %v1034
      %v1599 = vsel %vm1577, %v1566, %v1036
      %v1600 = vsel %vm1577, %v1567, %v1038
      %v1601 = vsel %vm1577, %v1568, %v1040
      %v1602 = vsel %vm1577, %v1569, %v1042
      %v1603 = vsel %vm1577, %v1570, %v1044
      %v1604 = vsel %vm1577, %v1571, %v1046
      %v1605 = vsel %vm1577, %v1572, %v1048
      %v1606 = vsel %vm1577, %v1573, %v1050
      %v1607 = vsel %vm1577, %v1574, %v1052
      %v1608 = vsel %vm1577, %v1575, %v1054
      %v1609 = vsel %vm1577, %v1576, %v1056
      %vm1610 = vcmask 162816
      %v1611 = vsel %vm1610, %v1578, %v1095
      %v1612 = vsel %vm1610, %v1579, %v1097
      %v1613 = vsel %vm1610, %v1580, %v1099
      %v1614 = vsel %vm1610, %v1581, %v1101
      %v1615 = vsel %vm1610, %v1582, %v1103
      %v1616 = vsel %vm1610, %v1583, %v1105
      %v1617 = vsel %vm1610, %v1584, %v1107
      %v1618 = vsel %vm1610, %v1585, %v1109
      %v1619 = vsel %vm1610, %v1586, %v1111
      %v1620 = vsel %vm1610, %v1587, %v1113
      %v1621 = vsel %vm1610, %v1588, %v1115
      %v1622 = vsel %vm1610, %v1589, %v1117
      %v1623 = vsel %vm1610, %v1590, %v1119
      %v1624 = vsel %vm1610, %v1591, %v1121
      %v1625 = vsel %vm1610, %v1592, %v1123
      %v1626 = vsel %vm1610, %v1593, %v1125
      %v1627 = vsel %vm1610, %v1594, %v1127
      %v1628 = vsel %vm1610, %v1595, %v1129
      %v1629 = vsel %vm1610, %v1596, %v1131
      %v1630 = vsel %vm1610, %v1597, %v1133
      %v1631 = vsel %vm1610, %v1598, %v1135
      %v1632 = vsel %vm1610, %v1599, %v1137
      %v1633 = vsel %vm1610, %v1600, %v1139
      %v1634 = vsel %vm1610, %v1601, %v1141
      %v1635 = vsel %vm1610, %v1602, %v1143
      %v1636 = vsel %vm1610, %v1603, %v1145
      %v1637 = vsel %vm1610, %v1604, %v1147
      %v1638 = vsel %vm1610, %v1605, %v1149
      %v1639 = vsel %vm1610, %v1606, %v1151
      %v1640 = vsel %vm1610, %v1607, %v1153
      %v1641 = vsel %vm1610, %v1608, %v1155
      %v1642 = vsel %vm1610, %v1609, %v1157
      %vm1643 = vcmask 195584
      %v1644 = vsel %vm1643, %v1611, %v1191
      %v1645 = vsel %vm1643, %v1612, %v1193
      %v1646 = vsel %vm1643, %v1613, %v1195
      %v1647 = vsel %vm1643, %v1614, %v1197
      %v1648 = vsel %vm1643, %v1615, %v1199
      %v1649 = vsel %vm1643, %v1616, %v1201
      %v1650 = vsel %vm1643, %v1617, %v1203
      %v1651 = vsel %vm1643, %v1618, %v1205
      %v1652 = vsel %vm1643, %v1619, %v1207
      %v1653 = vsel %vm1643, %v1620, %v1209
      %v1654 = vsel %vm1643, %v1621, %v1211
      %v1655 = vsel %vm1643, %v1622, %v1213
      %v1656 = vsel %vm1643, %v1623, %v1215
      %v1657 = vsel %vm1643, %v1624, %v1217
      %v1658 = vsel %vm1643, %v1625, %v1219
      %v1659 = vsel %vm1643, %v1626, %v1221
      %v1660 = vsel %vm1643, %v1627, %v1223
      %v1661 = vsel %vm1643, %v1628, %v1225
      %v1662 = vsel %vm1643, %v1629, %v1227
      %v1663 = vsel %vm1643, %v1630, %v1229
      %v1664 = vsel %vm1643, %v1631, %v1231
      %v1665 = vsel %vm1643, %v1632, %v1233
      %v1666 = vsel %vm1643, %v1633, %v1235
      %v1667 = vsel %vm1643, %v1634, %v1237
      %v1668 = vsel %vm1643, %v1635, %v1239
      %v1669 = vsel %vm1643, %v1636, %v1241
      %v1670 = vsel %vm1643, %v1637, %v1243
      %v1671 = vsel %vm1643, %v1638, %v1245
      %v1672 = vsel %vm1643, %v1639, %v1247
      %v1673 = vsel %vm1643, %v1640, %v1249
      %v1674 = vsel %vm1643, %v1641, %v1251
      %v1675 = vsel %vm1643, %v1642, %v1253
      %vm1676 = vcmask 228352
      %v1677 = vsel %vm1676, %v1644, %v1287
      %v1678 = vsel %vm1676, %v1645, %v1289
      %v1679 = vsel %vm1676, %v1646, %v1291
      %v1680 = vsel %vm1676, %v1647, %v1293
      %v1681 = vsel %vm1676, %v1648, %v1295
      %v1682 = vsel %vm1676, %v1649, %v1297
      %v1683 = vsel %vm1676, %v1650, %v1299
      %v1684 = vsel %vm1676, %v1651, %v1301
      %v1685 = vsel %vm1676, %v1652, %v1303
      %v1686 = vsel %vm1676, %v1653, %v1305
      %v1687 = vsel %vm1676, %v1654, %v1307
      %v1688 = vsel %vm1676, %v1655, %v1309
      %v1689 = vsel %vm1676, %v1656, %v1311
      %v1690 = vsel %vm1676, %v1657, %v1313
      %v1691 = vsel %vm1676, %v1658, %v1315
      %v1692 = vsel %vm1676, %v1659, %v1317
      %v1693 = vsel %vm1676, %v1660, %v1319
      %v1694 = vsel %vm1676, %v1661, %v1321
      %v1695 = vsel %vm1676, %v1662, %v1323
      %v1696 = vsel %vm1676, %v1663, %v1325
      %v1697 = vsel %vm1676, %v1664, %v1327
      %v1698 = vsel %vm1676, %v1665, %v1329
      %v1699 = vsel %vm1676, %v1666, %v1331
      %v1700 = vsel %vm1676, %v1667, %v1333
      %v1701 = vsel %vm1676, %v1668, %v1335
      %v1702 = vsel %vm1676, %v1669, %v1337
      %v1703 = vsel %vm1676, %v1670, %v1339
      %v1704 = vsel %vm1676, %v1671, %v1341
      %v1705 = vsel %vm1676, %v1672, %v1343
      %v1706 = vsel %vm1676, %v1673, %v1345
      %v1707 = vsel %vm1676, %v1674, %v1347
      %v1708 = vsel %vm1676, %v1675, %v1349
      %vm1709 = vcmask 261120
      %v1710 = vsel %vm1709, %v1677, %v1383
      %v1711 = vsel %vm1709, %v1678, %v1385
      %v1712 = vsel %vm1709, %v1679, %v1387
      %v1713 = vsel %vm1709, %v1680, %v1389
      %v1714 = vsel %vm1709, %v1681, %v1391
      %v1715 = vsel %vm1709, %v1682, %v1393
      %v1716 = vsel %vm1709, %v1683, %v1395
      %v1717 = vsel %vm1709, %v1684, %v1397
      %v1718 = vsel %vm1709, %v1685, %v1399
      %v1719 = vsel %vm1709, %v1686, %v1401
      %v1720 = vsel %vm1709, %v1687, %v1403
      %v1721 = vsel %vm1709, %v1688, %v1405
      %v1722 = vsel %vm1709, %v1689, %v1407
      %v1723 = vsel %vm1709, %v1690, %v1409
      %v1724 = vsel %vm1709, %v1691, %v1411
      %v1725 = vsel %vm1709, %v1692, %v1413
      %v1726 = vsel %vm1709, %v1693, %v1415
      %v1727 = vsel %vm1709, %v1694, %v1417
      %v1728 = vsel %vm1709, %v1695, %v1419
      %v1729 = vsel %vm1709, %v1696, %v1421
      %v1730 = vsel %vm1709, %v1697, %v1423
      %v1731 = vsel %vm1709, %v1698, %v1425
      %v1732 = vsel %vm1709, %v1699, %v1427
      %v1733 = vsel %vm1709, %v1700, %v1429
      %v1734 = vsel %vm1709, %v1701, %v1431
      %v1735 = vsel %vm1709, %v1702, %v1433
      %v1736 = vsel %vm1709, %v1703, %v1435
      %v1737 = vsel %vm1709, %v1704, %v1437
      %v1738 = vsel %vm1709, %v1705, %v1439
      %v1739 = vsel %vm1709, %v1706, %v1441
      %v1740 = vsel %vm1709, %v1707, %v1443
      %v1741 = vsel %vm1709, %v1708, %v1445
      %v1742 = vpack.c.bf16 %v1711, %v1710
      %v1743 = vpack.c.bf16 %v1713, %v1712
      %v1744 = vpack.c.bf16 %v1715, %v1714
      %v1745 = vpack.c.bf16 %v1717, %v1716
      %v1746 = vpack.c.bf16 %v1719, %v1718
      %v1747 = vpack.c.bf16 %v1721, %v1720
      %v1748 = vpack.c.bf16 %v1723, %v1722
      %v1749 = vpack.c.bf16 %v1725, %v1724
      %v1750 = vpack.c.bf16 %v1727, %v1726
      %v1751 = vpack.c.bf16 %v1729, %v1728
      %v1752 = vpack.c.bf16 %v1731, %v1730
      %v1753 = vpack.c.bf16 %v1733, %v1732
      %v1754 = vpack.c.bf16 %v1735, %v1734
      %v1755 = vpack.c.bf16 %v1737, %v1736
      %v1756 = vpack.c.bf16 %v1739, %v1738
      %v1757 = vpack.c.bf16 %v1741, %v1740
      %v1758 = vld [vmem:[%s1] sm:$0xf]
      %v1759 = vld [vmem:[%s1 + $0x4] sm:$0xf]
      %v1760 = vld [vmem:[%s1 + $0x8] sm:$0xf]
      %v1761 = vld [vmem:[%s1 + $0xc] sm:$0xf]
      %v1762 = vld [vmem:[%s1 + $0x10] sm:$0x3]
      %v1763 = vld [vmem:[%s2] sm:$0x1]
      %v1765 = vlaneseq
      %v1766 = vshrl.u32 %v1765, 7
      %v1767 = vsub.s32 0, %v1766
      %v1768 = vrot.slane %v1763, %v1767
      %v1775 = vunpack.c.l.b16 %v1758
      %v1776 = vunpack.c.l.b16 %v1759
      %v1777 = vunpack.c.l.b16 %v1760
      %v1778 = vunpack.c.l.b16 %v1761
      %v1779 = vunpack.c.l.b16 %v1762
      %v1780 = vpack.c.b16 %v1776, %v1775
      %v1781 = vpack.c.b16 %v1778, %v1777
      %v1782 = vpack.c.b16 %v1779, %v1779
      %vm1785 = vcmask 293888
      %v1787 = vsel %vm1785, %v1742, 0
      %v1790 = vsel %vm1785, %v1743, 0
      %v1793 = vsel %vm1785, %v1744, 0
      %v1796 = vsel %vm1785, %v1745, 0
      %v1799 = vsel %vm1785, %v1746, 0
      %v1802 = vsel %vm1785, %v1747, 0
      %v1805 = vsel %vm1785, %v1748, 0
      %v1808 = vsel %vm1785, %v1749, 0
      %v1811 = vsel %vm1785, %v1750, 0
      %v1814 = vsel %vm1785, %v1751, 0
      %v1817 = vsel %vm1785, %v1752, 0
      %v1820 = vsel %vm1785, %v1753, 0
      %v1823 = vsel %vm1785, %v1754, 0
      %v1826 = vsel %vm1785, %v1755, 0
      %v1829 = vsel %vm1785, %v1756, 0
      %v1832 = vsel %vm1785, %v1757, 0
      %vm1834 = vcmask 1041408
      %v1836 = vsel %vm1834, %v1782, 0
      %1838 = vmatprep.subr.bf16.mxu0 0
      %1839 = vmatpush1.bf16.msra.mxu0 %v1780
      %1840 = vmatprep.subr.bf16.mxu0 0
      %1841 = vmatpush1.bf16.msra.mxu0 %v1781
      %1842 = vmatprep.subr.bf16.mxu0 0
      %1843 = vmatpush1.bf16.msra.mxu0 %v1836
      %1844 = vmatprep.subr.bf16.mxu0 0
      %1845 = vmatpush1.bf16.msra.mxu0 0
      %1846 = vmatprep.subr.bf16.mxu0 0
      %1847 = vmatpush1.bf16.msra.mxu0 0
      %1848 = vmatprep.subr.bf16.mxu0 0
      %1849 = vmatpush1.bf16.msra.mxu0 0
      %1850 = vmatprep.subr.bf16.mxu0 0
      %1851 = vmatpush1.bf16.msra.mxu0 0
      %1852 = vmatprep.subr.bf16.mxu0 0
      %1853 = vmatpush1.bf16.msra.mxu0 0
      %1854 = vmatprep.subr.bf16.mxu0 0
      %1855 = vmatpush1.bf16.msra.mxu0 0
      %1856 = vmatprep.subr.bf16.mxu0 0
      %1857 = vmatpush1.bf16.msra.mxu0 0
      %1858 = vmatprep.subr.bf16.mxu0 0
      %1859 = vmatpush1.bf16.msra.mxu0 0
      %1860 = vmatprep.subr.bf16.mxu0 0
      %1861 = vmatpush1.bf16.msra.mxu0 0
      %1862 = vmatprep.subr.bf16.mxu0 0
      %1863 = vmatpush1.bf16.msra.mxu0 0
      %1864 = vmatprep.subr.bf16.mxu0 0
      %1865 = vmatpush1.bf16.msra.mxu0 0
      %1866 = vmatprep.subr.bf16.mxu0 0
      %1867 = vmatpush1.bf16.msra.mxu0 0
      %1868 = vmatprep.subr.bf16.mxu0 0
      %1869 = vmatpush1.bf16.msra.mxu0 0
      %1870 = vmatprep.mubr.bf16.mxu0 0
      %1871 = vmatmul.mubr.bf16.gmra.mrb[0].mxu0 %v1787
      %v1872 = vpop.f32.mrb[0].mxu0
      %v1873 = vadd.f32 %v1768, %v1872
      %v1874 = vpop.f32.mrb[0].mxu0
      %v1875 = vpop.f32.mrb[0].mxu0
      %v1876 = vadd.f32 %v1768, %v1875
      %v1877 = vpop.f32.mrb[0].mxu0
      %1878 = vmatprep.mubr.bf16.mxu0 0
      %1879 = vmatmul.mubr.bf16.gmra.mrb[0].mxu0 %v1790
      %v1880 = vpop.f32.mrb[0].mxu0
      %v1881 = vadd.f32 %v1768, %v1880
      %v1882 = vpop.f32.mrb[0].mxu0
      %v1883 = vpop.f32.mrb[0].mxu0
      %v1884 = vadd.f32 %v1768, %v1883
      %v1885 = vpop.f32.mrb[0].mxu0
      %1886 = vmatprep.mubr.bf16.mxu0 0
      %1887 = vmatmul.mubr.bf16.gmra.mrb[0].mxu0 %v1793
      %v1888 = vpop.f32.mrb[0].mxu0
      %v1889 = vadd.f32 %v1768, %v1888
      %v1890 = vpop.f32.mrb[0].mxu0
      %v1891 = vpop.f32.mrb[0].mxu0
      %v1892 = vadd.f32 %v1768, %v1891
      %v1893 = vpop.f32.mrb[0].mxu0
      %1894 = vmatprep.mubr.bf16.mxu0 0
      %1895 = vmatmul.mubr.bf16.gmra.mrb[0].mxu0 %v1796
      %v1896 = vpop.f32.mrb[0].mxu0
      %v1897 = vadd.f32 %v1768, %v1896
      %v1898 = vpop.f32.mrb[0].mxu0
      %v1899 = vpop.f32.mrb[0].mxu0
      %v1900 = vadd.f32 %v1768, %v1899
      %v1901 = vpop.f32.mrb[0].mxu0
      %1902 = vmatprep.mubr.bf16.mxu0 0
      %1903 = vmatmul.mubr.bf16.gmra.mrb[0].mxu0 %v1799
      %v1904 = vpop.f32.mrb[0].mxu0
      %v1905 = vadd.f32 %v1768, %v1904
      %v1906 = vpop.f32.mrb[0].mxu0
      %v1907 = vpop.f32.mrb[0].mxu0
      %v1908 = vadd.f32 %v1768, %v1907
      %v1909 = vpop.f32.mrb[0].mxu0
      %1910 = vmatprep.mubr.bf16.mxu0 0
      %1911 = vmatmul.mubr.bf16.gmra.mrb[0].mxu0 %v1802
      %v1912 = vpop.f32.mrb[0].mxu0
      %v1913 = vadd.f32 %v1768, %v1912
      %v1914 = vpop.f32.mrb[0].mxu0
      %v1915 = vpop.f32.mrb[0].mxu0
      %v1916 = vadd.f32 %v1768, %v1915
      %v1917 = vpop.f32.mrb[0].mxu0
      %1918 = vmatprep.mubr.bf16.mxu0 0
      %1919 = vmatmul.mubr.bf16.gmra.mrb[0].mxu0 %v1805
      %v1920 = vpop.f32.mrb[0].mxu0
      %v1921 = vadd.f32 %v1768, %v1920
      %v1922 = vpop.f32.mrb[0].mxu0
      %v1923 = vpop.f32.mrb[0].mxu0
      %v1924 = vadd.f32 %v1768, %v1923
      %v1925 = vpop.f32.mrb[0].mxu0
      %1926 = vmatprep.mubr.bf16.mxu0 0
      %1927 = vmatmul.mubr.bf16.gmra.mrb[0].mxu0 %v1808
      %v1928 = vpop.f32.mrb[0].mxu0
      %v1929 = vadd.f32 %v1768, %v1928
      %v1930 = vpop.f32.mrb[0].mxu0
      %v1931 = vpop.f32.mrb[0].mxu0
      %v1932 = vadd.f32 %v1768, %v1931
      %v1933 = vpop.f32.mrb[0].mxu0
      %1934 = vmatprep.mubr.bf16.mxu0 0
      %1935 = vmatmul.mubr.bf16.gmra.mrb[0].mxu0 %v1811
      %v1936 = vpop.f32.mrb[0].mxu0
      %v1937 = vadd.f32 %v1768, %v1936
      %v1938 = vpop.f32.mrb[0].mxu0
      %v1939 = vpop.f32.mrb[0].mxu0
      %v1940 = vadd.f32 %v1768, %v1939
      %v1941 = vpop.f32.mrb[0].mxu0
      %1942 = vmatprep.mubr.bf16.mxu0 0
      %1943 = vmatmul.mubr.bf16.gmra.mrb[0].mxu0 %v1814
      %v1944 = vpop.f32.mrb[0].mxu0
      %v1945 = vadd.f32 %v1768, %v1944
      %v1946 = vpop.f32.mrb[0].mxu0
      %v1947 = vpop.f32.mrb[0].mxu0
      %v1948 = vadd.f32 %v1768, %v1947
      %v1949 = vpop.f32.mrb[0].mxu0
      %1950 = vmatprep.mubr.bf16.mxu0 0
      %1951 = vmatmul.mubr.bf16.gmra.mrb[0].mxu0 %v1817
      %v1952 = vpop.f32.mrb[0].mxu0
      %v1953 = vadd.f32 %v1768, %v1952
      %v1954 = vpop.f32.mrb[0].mxu0
      %v1955 = vpop.f32.mrb[0].mxu0
      %v1956 = vadd.f32 %v1768, %v1955
      %v1957 = vpop.f32.mrb[0].mxu0
      %1958 = vmatprep.mubr.bf16.mxu0 0
      %1959 = vmatmul.mubr.bf16.gmra.mrb[0].mxu0 %v1820
      %v1960 = vpop.f32.mrb[0].mxu0
      %v1961 = vadd.f32 %v1768, %v1960
      %v1962 = vpop.f32.mrb[0].mxu0
      %v1963 = vpop.f32.mrb[0].mxu0
      %v1964 = vadd.f32 %v1768, %v1963
      %v1965 = vpop.f32.mrb[0].mxu0
      %1966 = vmatprep.mubr.bf16.mxu0 0
      %1967 = vmatmul.mubr.bf16.gmra.mrb[0].mxu0 %v1823
      %v1968 = vpop.f32.mrb[0].mxu0
      %v1969 = vadd.f32 %v1768, %v1968
      %v1970 = vpop.f32.mrb[0].mxu0
      %v1971 = vpop.f32.mrb[0].mxu0
      %v1972 = vadd.f32 %v1768, %v1971
      %v1973 = vpop.f32.mrb[0].mxu0
      %1974 = vmatprep.mubr.bf16.mxu0 0
      %1975 = vmatmul.mubr.bf16.gmra.mrb[0].mxu0 %v1826
      %v1976 = vpop.f32.mrb[0].mxu0
      %v1977 = vadd.f32 %v1768, %v1976
      %v1978 = vpop.f32.mrb[0].mxu0
      %v1979 = vpop.f32.mrb[0].mxu0
      %v1980 = vadd.f32 %v1768, %v1979
      %v1981 = vpop.f32.mrb[0].mxu0
      %1982 = vmatprep.mubr.bf16.mxu0 0
      %1983 = vmatmul.mubr.bf16.gmra.mrb[0].mxu0 %v1829
      %v1984 = vpop.f32.mrb[0].mxu0
      %v1985 = vadd.f32 %v1768, %v1984
      %v1986 = vpop.f32.mrb[0].mxu0
      %v1987 = vpop.f32.mrb[0].mxu0
      %v1988 = vadd.f32 %v1768, %v1987
      %v1989 = vpop.f32.mrb[0].mxu0
      %1990 = vmatprep.mubr.bf16.mxu0 0
      %1991 = vmatmul.mubr.bf16.gmra.mrb[0].mxu0 %v1832
      %v1992 = vpop.f32.mrb[0].mxu0
      %v1993 = vadd.f32 %v1768, %v1992
      %v1994 = vpop.f32.mrb[0].mxu0
      %v1995 = vpop.f32.mrb[0].mxu0
      %v1996 = vadd.f32 %v1768, %v1995
      %v1997 = vpop.f32.mrb[0].mxu0
      %1998 = vdwg.mxu0
      %s1999 = sld [smem:[#allocation3]]
      %v2000 = vld [vmem:[#allocation2] sm:$0xff]
      %v2001 = vld [vmem:[#allocation2 + $0x8] sm:$0xff]
      %v2002 = vld [vmem:[#allocation2 + $0x10] sm:$0xff]
      %v2003 = vld [vmem:[#allocation2 + $0x18] sm:$0xff]
      %v2004 = vld [vmem:[#allocation2 + $0x20] sm:$0xff]
      %v2005 = vld [vmem:[#allocation2 + $0x28] sm:$0xff]
      %v2006 = vld [vmem:[#allocation2 + $0x30] sm:$0xff]
      %v2007 = vld [vmem:[#allocation2 + $0x38] sm:$0xff]
      %v2008 = vld [vmem:[#allocation2 + $0x40] sm:$0xff]
      %v2009 = vld [vmem:[#allocation2 + $0x48] sm:$0xff]
      %v2010 = vld [vmem:[#allocation2 + $0x50] sm:$0xff]
      %v2011 = vld [vmem:[#allocation2 + $0x58] sm:$0xff]
      %v2012 = vld [vmem:[#allocation2 + $0x60] sm:$0xff]
      %v2013 = vld [vmem:[#allocation2 + $0x68] sm:$0xff]
      %v2014 = vld [vmem:[#allocation2 + $0x70] sm:$0xff]
      %v2015 = vld [vmem:[#allocation2 + $0x78] sm:$0xff]
      %v2016 = vld [vmem:[#allocation2 + $0x80] sm:$0xff]
      %v2017 = vld [vmem:[#allocation2 + $0x88] sm:$0xff]
      %v2018 = vld [vmem:[#allocation2 + $0x90] sm:$0xff]
      %v2019 = vld [vmem:[#allocation2 + $0x98] sm:$0xff]
      %v2020 = vld [vmem:[#allocation2 + $0xa0] sm:$0xff]
      %v2021 = vld [vmem:[#allocation2 + $0xa8] sm:$0xff]
      %v2022 = vld [vmem:[#allocation2 + $0xb0] sm:$0xff]
      %v2023 = vld [vmem:[#allocation2 + $0xb8] sm:$0xff]
      %v2024 = vld [vmem:[#allocation2 + $0xc0] sm:$0xff]
      %v2025 = vld [vmem:[#allocation2 + $0xc8] sm:$0xff]
      %v2026 = vld [vmem:[#allocation2 + $0xd0] sm:$0xff]
      %v2027 = vld [vmem:[#allocation2 + $0xd8] sm:$0xff]
      %v2028 = vld [vmem:[#allocation2 + $0xe0] sm:$0xff]
      %v2029 = vld [vmem:[#allocation2 + $0xe8] sm:$0xff]
      %v2030 = vld [vmem:[#allocation2 + $0xf0] sm:$0xff]
      %v2031 = vld [vmem:[#allocation2 + $0xf8] sm:$0xff]
      %v2032 = vstv %s1999
      %v2033 = vmul.f32 %v2000, %v2032
      %v2034 = vmul.f32 %v2001, %v2032
      %v2035 = vmul.f32 %v2002, %v2032
      %v2036 = vmul.f32 %v2003, %v2032
      %v2037 = vmul.f32 %v2004, %v2032
      %v2038 = vmul.f32 %v2005, %v2032
      %v2039 = vmul.f32 %v2006, %v2032
      %v2040 = vmul.f32 %v2007, %v2032
      %v2041 = vmul.f32 %v2008, %v2032
      %v2042 = vmul.f32 %v2009, %v2032
      %v2043 = vmul.f32 %v2010, %v2032
      %v2044 = vmul.f32 %v2011, %v2032
      %v2045 = vmul.f32 %v2012, %v2032
      %v2046 = vmul.f32 %v2013, %v2032
      %v2047 = vmul.f32 %v2014, %v2032
      %v2048 = vmul.f32 %v2015, %v2032
      %v2049 = vmul.f32 %v2016, %v2032
      %v2050 = vmul.f32 %v2017, %v2032
      %v2051 = vmul.f32 %v2018, %v2032
      %v2052 = vmul.f32 %v2019, %v2032
      %v2053 = vmul.f32 %v2020, %v2032
      %v2054 = vmul.f32 %v2021, %v2032
      %v2055 = vmul.f32 %v2022, %v2032
      %v2056 = vmul.f32 %v2023, %v2032
      %v2057 = vmul.f32 %v2024, %v2032
      %v2058 = vmul.f32 %v2025, %v2032
      %v2059 = vmul.f32 %v2026, %v2032
      %v2060 = vmul.f32 %v2027, %v2032
      %v2061 = vmul.f32 %v2028, %v2032
      %v2062 = vmul.f32 %v2029, %v2032
      %v2063 = vmul.f32 %v2030, %v2032
      %v2064 = vmul.f32 %v2031, %v2032
      %v2065 = vadd.f32 %v2033, %v1873
      %v2066 = vadd.f32 %v2034, %v1876
      %v2067 = vadd.f32 %v2035, %v1881
      %v2068 = vadd.f32 %v2036, %v1884
      %v2069 = vadd.f32 %v2037, %v1889
      %v2070 = vadd.f32 %v2038, %v1892
      %v2071 = vadd.f32 %v2039, %v1897
      %v2072 = vadd.f32 %v2040, %v1900
      %v2073 = vadd.f32 %v2041, %v1905
      %v2074 = vadd.f32 %v2042, %v1908
      %v2075 = vadd.f32 %v2043, %v1913
      %v2076 = vadd.f32 %v2044, %v1916
      %v2077 = vadd.f32 %v2045, %v1921
      %v2078 = vadd.f32 %v2046, %v1924
      %v2079 = vadd.f32 %v2047, %v1929
      %v2080 = vadd.f32 %v2048, %v1932
      %v2081 = vadd.f32 %v2049, %v1937
      %v2082 = vadd.f32 %v2050, %v1940
      %v2083 = vadd.f32 %v2051, %v1945
      %v2084 = vadd.f32 %v2052, %v1948
      %v2085 = vadd.f32 %v2053, %v1953
      %v2086 = vadd.f32 %v2054, %v1956
      %v2087 = vadd.f32 %v2055, %v1961
      %v2088 = vadd.f32 %v2056, %v1964
      %v2089 = vadd.f32 %v2057, %v1969
      %v2090 = vadd.f32 %v2058, %v1972
      %v2091 = vadd.f32 %v2059, %v1977
      %v2092 = vadd.f32 %v2060, %v1980
      %v2093 = vadd.f32 %v2061, %v1985
      %v2094 = vadd.f32 %v2062, %v1988
      %v2095 = vadd.f32 %v2063, %v1993
      %v2096 = vadd.f32 %v2064, %v1996
      %vm2097 = vcmp.ge.f32.partialorder %v2065, 1.0
      %vm2098 = vcmp.ge.f32.partialorder %v2066, 1.0
      %vm2099 = vcmp.ge.f32.partialorder %v2067, 1.0
      %vm2100 = vcmp.ge.f32.partialorder %v2068, 1.0
      %vm2101 = vcmp.ge.f32.partialorder %v2069, 1.0
      %vm2102 = vcmp.ge.f32.partialorder %v2070, 1.0
      %vm2103 = vcmp.ge.f32.partialorder %v2071, 1.0
      %vm2104 = vcmp.ge.f32.partialorder %v2072, 1.0
      %vm2105 = vcmp.ge.f32.partialorder %v2073, 1.0
      %vm2106 = vcmp.ge.f32.partialorder %v2074, 1.0
      %vm2107 = vcmp.ge.f32.partialorder %v2075, 1.0
      %vm2108 = vcmp.ge.f32.partialorder %v2076, 1.0
      %vm2109 = vcmp.ge.f32.partialorder %v2077, 1.0
      %vm2110 = vcmp.ge.f32.partialorder %v2078, 1.0
      %vm2111 = vcmp.ge.f32.partialorder %v2079, 1.0
      %vm2112 = vcmp.ge.f32.partialorder %v2080, 1.0
      %vm2113 = vcmp.ge.f32.partialorder %v2081, 1.0
      %vm2114 = vcmp.ge.f32.partialorder %v2082, 1.0
      %vm2115 = vcmp.ge.f32.partialorder %v2083, 1.0
      %vm2116 = vcmp.ge.f32.partialorder %v2084, 1.0
      %vm2117 = vcmp.ge.f32.partialorder %v2085, 1.0
      %vm2118 = vcmp.ge.f32.partialorder %v2086, 1.0
      %vm2119 = vcmp.ge.f32.partialorder %v2087, 1.0
      %vm2120 = vcmp.ge.f32.partialorder %v2088, 1.0
      %vm2121 = vcmp.ge.f32.partialorder %v2089, 1.0
      %vm2122 = vcmp.ge.f32.partialorder %v2090, 1.0
      %vm2123 = vcmp.ge.f32.partialorder %v2091, 1.0
      %vm2124 = vcmp.ge.f32.partialorder %v2092, 1.0
      %vm2125 = vcmp.ge.f32.partialorder %v2093, 1.0
      %vm2126 = vcmp.ge.f32.partialorder %v2094, 1.0
      %vm2127 = vcmp.ge.f32.partialorder %v2095, 1.0
      %vm2128 = vcmp.ge.f32.partialorder %v2096, 1.0
      %v2129 = vsel %vm2097, 0.0, %v2065
      %v2130 = vsel %vm2098, 0.0, %v2066
      %v2131 = vsel %vm2099, 0.0, %v2067
      %v2132 = vsel %vm2100, 0.0, %v2068
      %v2133 = vsel %vm2101, 0.0, %v2069
      %v2134 = vsel %vm2102, 0.0, %v2070
      %v2135 = vsel %vm2103, 0.0, %v2071
      %v2136 = vsel %vm2104, 0.0, %v2072
      %v2137 = vsel %vm2105, 0.0, %v2073
      %v2138 = vsel %vm2106, 0.0, %v2074
      %v2139 = vsel %vm2107, 0.0, %v2075
      %v2140 = vsel %vm2108, 0.0, %v2076
      %v2141 = vsel %vm2109, 0.0, %v2077
      %v2142 = vsel %vm2110, 0.0, %v2078
      %v2143 = vsel %vm2111, 0.0, %v2079
      %v2144 = vsel %vm2112, 0.0, %v2080
      %v2145 = vsel %vm2113, 0.0, %v2081
      %v2146 = vsel %vm2114, 0.0, %v2082
      %v2147 = vsel %vm2115, 0.0, %v2083
      %v2148 = vsel %vm2116, 0.0, %v2084
      %v2149 = vsel %vm2117, 0.0, %v2085
      %v2150 = vsel %vm2118, 0.0, %v2086
      %v2151 = vsel %vm2119, 0.0, %v2087
      %v2152 = vsel %vm2120, 0.0, %v2088
      %v2153 = vsel %vm2121, 0.0, %v2089
      %v2154 = vsel %vm2122, 0.0, %v2090
      %v2155 = vsel %vm2123, 0.0, %v2091
      %v2156 = vsel %vm2124, 0.0, %v2092
      %v2157 = vsel %vm2125, 0.0, %v2093
      %v2158 = vsel %vm2126, 0.0, %v2094
      %v2159 = vsel %vm2127, 0.0, %v2095
      %v2160 = vsel %vm2128, 0.0, %v2096
      %2161 = vst.msk [vmem:[#allocation2] sm:$0xff] %vm1511, %v2129
      %2162 = vst.msk [vmem:[#allocation2 + $0x8] sm:$0xff] %vm1511, %v2130
      %2163 = vst.msk [vmem:[#allocation2 + $0x10] sm:$0xff] %vm1511, %v2131
      %2164 = vst.msk [vmem:[#allocation2 + $0x18] sm:$0xff] %vm1511, %v2132
      %2165 = vst.msk [vmem:[#allocation2 + $0x20] sm:$0xff] %vm1511, %v2133
      %2166 = vst.msk [vmem:[#allocation2 + $0x28] sm:$0xff] %vm1511, %v2134
      %2167 = vst.msk [vmem:[#allocation2 + $0x30] sm:$0xff] %vm1511, %v2135
      %2168 = vst.msk [vmem:[#allocation2 + $0x38] sm:$0xff] %vm1511, %v2136
      %2169 = vst.msk [vmem:[#allocation2 + $0x40] sm:$0xff] %vm1511, %v2137
      %2170 = vst.msk [vmem:[#allocation2 + $0x48] sm:$0xff] %vm1511, %v2138
      %2171 = vst.msk [vmem:[#allocation2 + $0x50] sm:$0xff] %vm1511, %v2139
      %2172 = vst.msk [vmem:[#allocation2 + $0x58] sm:$0xff] %vm1511, %v2140
      %2173 = vst.msk [vmem:[#allocation2 + $0x60] sm:$0xff] %vm1511, %v2141
      %2174 = vst.msk [vmem:[#allocation2 + $0x68] sm:$0xff] %vm1511, %v2142
      %2175 = vst.msk [vmem:[#allocation2 + $0x70] sm:$0xff] %vm1511, %v2143
      %2176 = vst.msk [vmem:[#allocation2 + $0x78] sm:$0xff] %vm1511, %v2144
      %2177 = vst.msk [vmem:[#allocation2 + $0x80] sm:$0xff] %vm1511, %v2145
      %2178 = vst.msk [vmem:[#allocation2 + $0x88] sm:$0xff] %vm1511, %v2146
      %2179 = vst.msk [vmem:[#allocation2 + $0x90] sm:$0xff] %vm1511, %v2147
      %2180 = vst.msk [vmem:[#allocation2 + $0x98] sm:$0xff] %vm1511, %v2148
      %2181 = vst.msk [vmem:[#allocation2 + $0xa0] sm:$0xff] %vm1511, %v2149
      %2182 = vst.msk [vmem:[#allocation2 + $0xa8] sm:$0xff] %vm1511, %v2150
      %2183 = vst.msk [vmem:[#allocation2 + $0xb0] sm:$0xff] %vm1511, %v2151
      %2184 = vst.msk [vmem:[#allocation2 + $0xb8] sm:$0xff] %vm1511, %v2152
      %2185 = vst.msk [vmem:[#allocation2 + $0xc0] sm:$0xff] %vm1511, %v2153
      %2186 = vst.msk [vmem:[#allocation2 + $0xc8] sm:$0xff] %vm1511, %v2154
      %2187 = vst.msk [vmem:[#allocation2 + $0xd0] sm:$0xff] %vm1511, %v2155
      %2188 = vst.msk [vmem:[#allocation2 + $0xd8] sm:$0xff] %vm1511, %v2156
      %2189 = vst.msk [vmem:[#allocation2 + $0xe0] sm:$0xff] %vm1511, %v2157
      %2190 = vst.msk [vmem:[#allocation2 + $0xe8] sm:$0xff] %vm1511, %v2158
      %2191 = vst.msk [vmem:[#allocation2 + $0xf0] sm:$0xff] %vm1511, %v2159
      %2192 = vst.msk [vmem:[#allocation2 + $0xf8] sm:$0xff] %vm1511, %v2160
      %v2193 = vsel %vm2097, 1, 0
      %v2194 = vsel %vm2098, 1, 0
      %v2195 = vsel %vm2099, 1, 0
      %v2196 = vsel %vm2100, 1, 0
      %v2197 = vsel %vm2101, 1, 0
      %v2198 = vsel %vm2102, 1, 0
      %v2199 = vsel %vm2103, 1, 0
      %v2200 = vsel %vm2104, 1, 0
      %v2201 = vsel %vm2105, 1, 0
      %v2202 = vsel %vm2106, 1, 0
      %v2203 = vsel %vm2107, 1, 0
      %v2204 = vsel %vm2108, 1, 0
      %v2205 = vsel %vm2109, 1, 0
      %v2206 = vsel %vm2110, 1, 0
      %v2207 = vsel %vm2111, 1, 0
      %v2208 = vsel %vm2112, 1, 0
      %v2209 = vsel %vm2113, 1, 0
      %v2210 = vsel %vm2114, 1, 0
      %v2211 = vsel %vm2115, 1, 0
      %v2212 = vsel %vm2116, 1, 0
      %v2213 = vsel %vm2117, 1, 0
      %v2214 = vsel %vm2118, 1, 0
      %v2215 = vsel %vm2119, 1, 0
      %v2216 = vsel %vm2120, 1, 0
      %v2217 = vsel %vm2121, 1, 0
      %v2218 = vsel %vm2122, 1, 0
      %v2219 = vsel %vm2123, 1, 0
      %v2220 = vsel %vm2124, 1, 0
      %v2221 = vsel %vm2125, 1, 0
      %v2222 = vsel %vm2126, 1, 0
      %v2223 = vsel %vm2127, 1, 0
      %v2224 = vsel %vm2128, 1, 0
      %v2225 = vcvt.s32.f32 %v2193
      %v2226 = vcvt.s32.f32 %v2194
      %v2227 = vcvt.s32.f32 %v2195
      %v2228 = vcvt.s32.f32 %v2196
      %v2229 = vcvt.s32.f32 %v2197
      %v2230 = vcvt.s32.f32 %v2198
      %v2231 = vcvt.s32.f32 %v2199
      %v2232 = vcvt.s32.f32 %v2200
      %v2233 = vcvt.s32.f32 %v2201
      %v2234 = vcvt.s32.f32 %v2202
      %v2235 = vcvt.s32.f32 %v2203
      %v2236 = vcvt.s32.f32 %v2204
      %v2237 = vcvt.s32.f32 %v2205
      %v2238 = vcvt.s32.f32 %v2206
      %v2239 = vcvt.s32.f32 %v2207
      %v2240 = vcvt.s32.f32 %v2208
      %v2241 = vcvt.s32.f32 %v2209
      %v2242 = vcvt.s32.f32 %v2210
      %v2243 = vcvt.s32.f32 %v2211
      %v2244 = vcvt.s32.f32 %v2212
      %v2245 = vcvt.s32.f32 %v2213
      %v2246 = vcvt.s32.f32 %v2214
      %v2247 = vcvt.s32.f32 %v2215
      %v2248 = vcvt.s32.f32 %v2216
      %v2249 = vcvt.s32.f32 %v2217
      %v2250 = vcvt.s32.f32 %v2218
      %v2251 = vcvt.s32.f32 %v2219
      %v2252 = vcvt.s32.f32 %v2220
      %v2253 = vcvt.s32.f32 %v2221
      %v2254 = vcvt.s32.f32 %v2222
      %v2255 = vcvt.s32.f32 %v2223
      %v2256 = vcvt.s32.f32 %v2224
      %v2257 = vpack.c.bf16 %v2226, %v2225
      %v2258 = vpack.c.bf16 %v2228, %v2227
      %v2259 = vpack.c.bf16 %v2230, %v2229
      %v2260 = vpack.c.bf16 %v2232, %v2231
      %v2261 = vpack.c.bf16 %v2234, %v2233
      %v2262 = vpack.c.bf16 %v2236, %v2235
      %v2263 = vpack.c.bf16 %v2238, %v2237
      %v2264 = vpack.c.bf16 %v2240, %v2239
      %v2265 = vpack.c.bf16 %v2242, %v2241
      %v2266 = vpack.c.bf16 %v2244, %v2243
      %v2267 = vpack.c.bf16 %v2246, %v2245
      %v2268 = vpack.c.bf16 %v2248, %v2247
      %v2269 = vpack.c.bf16 %v2250, %v2249
      %v2270 = vpack.c.bf16 %v2252, %v2251
      %v2271 = vpack.c.bf16 %v2254, %v2253
      %v2272 = vpack.c.bf16 %v2256, %v2255
      %v2289 = vunpack.c.l.b16 %v2257
      %v2290 = vunpack.c.h.b16 %v2257
      %v2291 = vunpack.c.l.b16 %v2258
      %v2292 = vunpack.c.h.b16 %v2258
      %v2293 = vunpack.c.l.b16 %v2259
      %v2294 = vunpack.c.h.b16 %v2259
      %v2295 = vunpack.c.l.b16 %v2260
      %v2296 = vunpack.c.h.b16 %v2260
      %v2297 = vunpack.c.l.b16 %v2261
      %v2298 = vunpack.c.h.b16 %v2261
      %v2299 = vunpack.c.l.b16 %v2262
      %v2300 = vunpack.c.h.b16 %v2262
      %v2301 = vunpack.c.l.b16 %v2263
      %v2302 = vunpack.c.h.b16 %v2263
      %v2303 = vunpack.c.l.b16 %v2264
      %v2304 = vunpack.c.h.b16 %v2264
      %v2305 = vunpack.c.l.b16 %v2265
      %v2306 = vunpack.c.h.b16 %v2265
      %v2307 = vunpack.c.l.b16 %v2266
      %v2308 = vunpack.c.h.b16 %v2266
      %v2309 = vunpack.c.l.b16 %v2267
      %v2310 = vunpack.c.h.b16 %v2267
      %v2311 = vunpack.c.l.b16 %v2268
      %v2312 = vunpack.c.h.b16 %v2268
      %v2313 = vunpack.c.l.b16 %v2269
      %v2314 = vunpack.c.h.b16 %v2269
      %v2315 = vunpack.c.l.b16 %v2270
      %v2316 = vunpack.c.h.b16 %v2270
      %v2317 = vunpack.c.l.b16 %v2271
      %v2318 = vunpack.c.h.b16 %v2271
      %v2319 = vunpack.c.l.b16 %v2272
      %v2320 = vunpack.c.h.b16 %v2272
      %v2321 = vpack.c.b16 %v2289, %v2289
      %v2322 = vpack.c.b16 %v2290, %v2290
      %v2323 = vpack.c.b16 %v2291, %v2291
      %v2324 = vpack.c.b16 %v2292, %v2292
      %v2325 = vpack.c.b16 %v2293, %v2293
      %v2326 = vpack.c.b16 %v2294, %v2294
      %v2327 = vpack.c.b16 %v2295, %v2295
      %v2328 = vpack.c.b16 %v2296, %v2296
      %v2329 = vpack.c.b16 %v2297, %v2297
      %v2330 = vpack.c.b16 %v2298, %v2298
      %v2331 = vpack.c.b16 %v2299, %v2299
      %v2332 = vpack.c.b16 %v2300, %v2300
      %v2333 = vpack.c.b16 %v2301, %v2301
      %v2334 = vpack.c.b16 %v2302, %v2302
      %v2335 = vpack.c.b16 %v2303, %v2303
      %v2336 = vpack.c.b16 %v2304, %v2304
      %v2337 = vpack.c.b16 %v2305, %v2305
      %v2338 = vpack.c.b16 %v2306, %v2306
      %v2339 = vpack.c.b16 %v2307, %v2307
      %v2340 = vpack.c.b16 %v2308, %v2308
      %v2341 = vpack.c.b16 %v2309, %v2309
      %v2342 = vpack.c.b16 %v2310, %v2310
      %v2343 = vpack.c.b16 %v2311, %v2311
      %v2344 = vpack.c.b16 %v2312, %v2312
      %v2345 = vpack.c.b16 %v2313, %v2313
      %v2346 = vpack.c.b16 %v2314, %v2314
      %v2347 = vpack.c.b16 %v2315, %v2315
      %v2348 = vpack.c.b16 %v2316, %v2316
      %v2349 = vpack.c.b16 %v2317, %v2317
      %v2350 = vpack.c.b16 %v2318, %v2318
      %v2351 = vpack.c.b16 %v2319, %v2319
      %v2352 = vpack.c.b16 %v2320, %v2320
      %vm2385 = vcmask 60416
      %2386 = vst.msk [vmem:[%s234] sm:$0xf] %vm2385, %v2321
      %2387 = vst.msk [vmem:[%s234 + $0x4] sm:$0xf] %vm2385, %v2322
      %2388 = vst.msk [vmem:[%s234 + $0x8] sm:$0xf] %vm2385, %v2323
      %2389 = vst.msk [vmem:[%s234 + $0xc] sm:$0xf] %vm2385, %v2324
      %2390 = vst.msk [vmem:[%s234 + $0x10] sm:$0xf] %vm2385, %v2325
      %2391 = vst.msk [vmem:[%s234 + $0x14] sm:$0xf] %vm2385, %v2326
      %2392 = vst.msk [vmem:[%s234 + $0x18] sm:$0xf] %vm2385, %v2327
      %2393 = vst.msk [vmem:[%s234 + $0x1c] sm:$0xf] %vm2385, %v2328
      %2394 = vst.msk [vmem:[%s234 + $0x20] sm:$0xf] %vm2385, %v2329
      %2395 = vst.msk [vmem:[%s234 + $0x24] sm:$0xf] %vm2385, %v2330
      %2396 = vst.msk [vmem:[%s234 + $0x28] sm:$0xf] %vm2385, %v2331
      %2397 = vst.msk [vmem:[%s234 + $0x2c] sm:$0xf] %vm2385, %v2332
      %2398 = vst.msk [vmem:[%s234 + $0x30] sm:$0xf] %vm2385, %v2333
      %2399 = vst.msk [vmem:[%s234 + $0x34] sm:$0xf] %vm2385, %v2334
      %2400 = vst.msk [vmem:[%s234 + $0x38] sm:$0xf] %vm2385, %v2335
      %2401 = vst.msk [vmem:[%s234 + $0x3c] sm:$0xf] %vm2385, %v2336
      %2402 = vst.msk [vmem:[%s234 + $0x40] sm:$0xf] %vm2385, %v2337
      %2403 = vst.msk [vmem:[%s234 + $0x44] sm:$0xf] %vm2385, %v2338
      %2404 = vst.msk [vmem:[%s234 + $0x48] sm:$0xf] %vm2385, %v2339
      %2405 = vst.msk [vmem:[%s234 + $0x4c] sm:$0xf] %vm2385, %v2340
      %2406 = vst.msk [vmem:[%s234 + $0x50] sm:$0xf] %vm2385, %v2341
      %2407 = vst.msk [vmem:[%s234 + $0x54] sm:$0xf] %vm2385, %v2342
      %2408 = vst.msk [vmem:[%s234 + $0x58] sm:$0xf] %vm2385, %v2343
      %2409 = vst.msk [vmem:[%s234 + $0x5c] sm:$0xf] %vm2385, %v2344
      %2410 = vst.msk [vmem:[%s234 + $0x60] sm:$0xf] %vm2385, %v2345
      %2411 = vst.msk [vmem:[%s234 + $0x64] sm:$0xf] %vm2385, %v2346
      %2412 = vst.msk [vmem:[%s234 + $0x68] sm:$0xf] %vm2385, %v2347
      %2413 = vst.msk [vmem:[%s234 + $0x6c] sm:$0xf] %vm2385, %v2348
      %2414 = vst.msk [vmem:[%s234 + $0x70] sm:$0xf] %vm2385, %v2349
      %2415 = vst.msk [vmem:[%s234 + $0x74] sm:$0xf] %vm2385, %v2350
      %2416 = vst.msk [vmem:[%s234 + $0x78] sm:$0xf] %vm2385, %v2351
      %2417 = vst.msk [vmem:[%s234 + $0x7c] sm:$0xf] %vm2385, %v2352
      %p2418 = scmp.lt.s32.totalorder %s21, 3
      %s2419 = scalar_select %p2418, %s21, 3
      %p2420 = scmp.lt.s32.totalorder %s20, 1
      %s2421 = scalar_select %p2420, %s20, 1
      %s2422 = smul.addr %s2421, 32
      %s2423 = smul.addr %s2419, 64
      %s2424 = sadd.s32 %s2422, %s2423
      %s2425 = smul.addr %s2424, 4
      %s2426 = scalar_lea.vmem %s4, %s2425
      // Predicated region
      $region41: #{plain_block_forward.2} parent=35 // pred_check
        %p2427 = pneg %p139
      $region42: #{plain_block_forward.2} parent=35 // pred_check_branch
        %2429 = sbr.rel (%p2427) target = $region44
      $region43: #{plain_block_forward.2} parent=35 // pred_region
        _
      $region44: #{plain_block_forward.2} parent=35 // pred_fallthru
        _
    $region36: #{plain_block_forward.2} parent=5 // pred_fallthru
      _
    %p2430 = scmp.le.s32.totalorder 2, %s11
    // Predicated region
    $region45: #{plain_block_forward.2} parent=5 // pred_check
      %p2431 = pneg %p2430
    $region46: #{plain_block_forward.2} parent=5 // pred_check_branch
      %2433 = sbr.rel (%p2431) target = $region48
    $region47: #{plain_block_forward.2} parent=5 // pred_region
      %s2434 = ssub.s32 %s11, 2
      // Predicated region
      $region49: #{plain_block_forward.2} parent=47 // pred_check
        %p2435 = pneg %p145
      $region50: #{plain_block_forward.2} parent=47 // pred_check_branch
        %2437 = sbr.rel (%p2435) target = $region52
      $region51: #{plain_block_forward.2} parent=47 // pred_region
        %p2438 = scmp.lt.s32.totalorder %s23, 3
        %s2439 = scalar_select %p2438, %s23, 3
        %p2440 = scmp.lt.s32.totalorder %s22, 1
        %s2441 = scalar_select %p2440, %s22, 1
        %s2442 = smul.addr %s2441, 32
        %s2443 = smul.addr %s2439, 64
        %s2444 = sadd.s32 %s2442, %s2443
        %s2445 = smul.addr %s2444, 4
        %s2446 = scalar_lea.vmem %s4, %s2445
      $region52: #{plain_block_forward.2} parent=47 // pred_fallthru
        _
    $region48: #{plain_block_forward.2} parent=5 // pred_fallthru
      _
  $region6: #{plain_block_forward.2} parent=0 // loop_footer
    %s15 = sadd.s32 1, %s11
  $region7: #{plain_block_forward.2} parent=0 // loop_footer_branch
    %10 = sbr.rel target = $region3
  $region8: #{plain_block_forward.2} parent=0 // loop_exit
    _

// kernel: plain_block_forward.3
$region0: #{plain_block_forward.3}
  #allocation0 [shape = 'u32[]', space=smem, size = 0x4, offset = 0x4, fixed_abs, tag = 'smem constant byte address 0x4 - core index']
  #allocation1 [shape = 'u32[144,128]{1,0:T(1,128)}', space=vmem, size = 0x12000, scoped, tag = 'internal scratch']
  #allocation2 [shape = 'f32[256,4]{1,0:T(8,128)}', space=vmem, size = 0x20000, scoped, tag = 'scratch operand']
  #allocation3 [shape = 'f32[1]{0:T(128)S(6)}', space=smem, size = 0x200, scoped, tag = 'scoped memory for plain_block_forward.3']
  %s0 = inlined_call_operand.vmem [shape: bf16[4,2,16,16,8], index: 0, kind: input, shape index: {}]
  %s1 = inlined_call_operand.vmem [shape: bf16[72,4], index: 1, kind: input, shape index: {}]
  %s2 = inlined_call_operand.vmem [shape: f32[1,4], index: 2, kind: input, shape index: {}]
  %s3 = inlined_call_operand.<no memory space> [shape: f32[1], index: 3, kind: input, shape index: {}]
  %s4 = inlined_call_operand.vmem [shape: bf16[4,2,16,16,4], index: 4, kind: output, shape index: {}]
  %s5 = sld [smem:[#allocation0]]
  $region53: #{plain_block_forward.3} parent=0
    _
  %s7 = ssub.s32 1, %s5
  %s8 = scalar_select 0, %s7, %s5
  %9 = sst [smem:[#allocation3]] %s3
  loop: start=0, step=1, limit=10
  $region2: #{plain_block_forward.3} parent=0 // loop_pre_header
    _
  $region3: #{plain_block_forward.3} parent=0 // loop_header
    %s11 = sphi 0, %s15
    %p12 = scmp.ge.s32.totalorder %s11, 10
    %s18 = sphi 0, %s30
    %s19 = sphi 0, %s26
    %s20 = sphi 0, %s18
    %s21 = sphi 0, %s19
    %s22 = sphi 0, %s20
    %s23 = sphi 0, %s21
    %s35 = sphi 0, %s37
    %s38 = sphi 0, %s35
    %s39 = sphi 0, %s38
    %s55 = sphi 0, %s39
    %s59 = sphi 0, %s59
    %s61 = sphi 0, %s59
    %s62 = sphi 0, %s61
    %s76 = sphi 0, %s62
    %s80 = sphi 0, %s80
    %s82 = sphi 0, %s80
    %s83 = sphi 0, %s82
    %s97 = sphi 0, %s83
    %s101 = sphi 0, %s101
    %s103 = sphi 0, %s101
    %s104 = sphi 0, %s103
    %s118 = sphi 0, %s104
    %s126 = sphi 0, %s128
    %s129 = sphi 0, %s126
    %s130 = sphi 0, %s129
    %s146 = sphi 0, %s130
  $region4: #{plain_block_forward.3} parent=0 // loop_header_branch
    %14 = sbr.rel (%p12) target = $region8
  $region5: #{plain_block_forward.3} parent=0 // loop_body
    %s16 = ssub.s32 %s11, 1
    %s17 = ssub.s32 %s11, 2
    %s24 = sadd.s32 1, %s19
    %p25 = scmp.ge.s32.totalorder %s24, 4
    %s26 = scalar_select %p25, 0, %s24
    %s27 = sadd.s32 1, %s18
    %s28 = scalar_select %p25, %s27, %s18
    %p29 = scmp.ge.s32.totalorder %s28, 2
    %s30 = scalar_select %p29, 0, %s28
    %s31 = ssub.s32 %s19, %s26
    %s32 = ssub.s32 %s18, %s30
    %s33 = sor.u32 %s31, %s32
    %p34 = scmp.eq.s32.totalorder %s33, 0
    %s36 = sadd.s32 %s35, 1
    %s37 = scalar_select %p34, %s35, %s36
    %p40 = pneg %p34
    %p41 = scmp.eq.s32.totalorder %s11, 7
    %p42 = por %p40, %p41
    %p43 = scmp.ne.s32.totalorder %s35, %s38
    %p44 = scmp.eq.s32.totalorder %s11, 0
    %p45 = por %p43, %p44
    %p46 = scmp.ne.s32.totalorder %s35, %s38
    %p47 = scmp.eq.s32.totalorder %s16, 7
    %p48 = por %p46, %p47
    %p49 = scmp.ne.s32.totalorder %s38, %s39
    %p50 = scmp.eq.s32.totalorder %s16, 0
    %p51 = por %p49, %p50
    %p52 = scmp.ne.s32.totalorder %s38, %s39
    %p53 = scmp.eq.s32.totalorder %s17, 7
    %p54 = por %p52, %p53
    %p56 = scmp.ne.s32.totalorder %s39, %s55
    %p57 = scmp.eq.s32.totalorder %s17, 0
    %p58 = por %p56, %p57
    %s60 = sadd.s32 %s59, 1
    %p63 = scmp.eq.s32.totalorder %s11, 7
    %p64 = scmp.ne.s32.totalorder %s59, %s61
    %p65 = scmp.eq.s32.totalorder %s11, 0
    %p66 = por %p64, %p65
    %p67 = scmp.ne.s32.totalorder %s59, %s61
    %p68 = scmp.eq.s32.totalorder %s16, 7
    %p69 = por %p67, %p68
    %p70 = scmp.ne.s32.totalorder %s61, %s62
    %p71 = scmp.eq.s32.totalorder %s16, 0
    %p72 = por %p70, %p71
    %p73 = scmp.ne.s32.totalorder %s61, %s62
    %p74 = scmp.eq.s32.totalorder %s17, 7
    %p75 = por %p73, %p74
    %p77 = scmp.ne.s32.totalorder %s62, %s76
    %p78 = scmp.eq.s32.totalorder %s17, 0
    %p79 = por %p77, %p78
    %s81 = sadd.s32 %s80, 1
    %p84 = scmp.eq.s32.totalorder %s11, 7
    %p85 = scmp.ne.s32.totalorder %s80, %s82
    %p86 = scmp.eq.s32.totalorder %s11, 0
    %p87 = por %p85, %p86
    %p88 = scmp.ne.s32.totalorder %s80, %s82
    %p89 = scmp.eq.s32.totalorder %s16, 7
    %p90 = por %p88, %p89
    %p91 = scmp.ne.s32.totalorder %s82, %s83
    %p92 = scmp.eq.s32.totalorder %s16, 0
    %p93 = por %p91, %p92
    %p94 = scmp.ne.s32.totalorder %s82, %s83
    %p95 = scmp.eq.s32.totalorder %s17, 7
    %p96 = por %p94, %p95
    %p98 = scmp.ne.s32.totalorder %s83, %s97
    %p99 = scmp.eq.s32.totalorder %s17, 0
    %p100 = por %p98, %p99
    %s102 = sadd.s32 %s101, 1
    %p105 = scmp.eq.s32.totalorder %s11, 7
    %p106 = scmp.ne.s32.totalorder %s101, %s103
    %p107 = scmp.eq.s32.totalorder %s11, 0
    %p108 = por %p106, %p107
    %p109 = scmp.ne.s32.totalorder %s101, %s103
    %p110 = scmp.eq.s32.totalorder %s16, 7
    %p111 = por %p109, %p110
    %p112 = scmp.ne.s32.totalorder %s103, %s104
    %p113 = scmp.eq.s32.totalorder %s16, 0
    %p114 = por %p112, %p113
    %p115 = scmp.ne.s32.totalorder %s103, %s104
    %p116 = scmp.eq.s32.totalorder %s17, 7
    %p117 = por %p115, %p116
    %p119 = scmp.ne.s32.totalorder %s104, %s118
    %p120 = scmp.eq.s32.totalorder %s17, 0
    %p121 = por %p119, %p120
    %s122 = ssub.s32 %s19, %s26
    %s123 = ssub.s32 %s18, %s30
    %s124 = sor.u32 %s122, %s123
    %p125 = scmp.eq.s32.totalorder %s124, 0
    %s127 = sadd.s32 %s126, 1
    %s128 = scalar_select %p125, %s126, %s127
    %p131 = pneg %p125
    %p132 = scmp.eq.s32.totalorder %s11, 7
    %p133 = por %p131, %p132
    %p134 = scmp.ne.s32.totalorder %s126, %s129
    %p135 = scmp.eq.s32.totalorder %s11, 0
    %p136 = por %p134, %p135
    %p137 = scmp.ne.s32.totalorder %s126, %s129
    %p138 = scmp.eq.s32.totalorder %s16, 7
    %p139 = por %p137, %p138
    %p140 = scmp.ne.s32.totalorder %s129, %s130
    %p141 = scmp.eq.s32.totalorder %s16, 0
    %p142 = por %p140, %p141
    %p143 = scmp.ne.s32.totalorder %s129, %s130
    %p144 = scmp.eq.s32.totalorder %s17, 7
    %p145 = por %p143, %p144
    %p147 = scmp.ne.s32.totalorder %s130, %s146
    %p148 = scmp.eq.s32.totalorder %s17, 0
    %p149 = por %p147, %p148
    %p150 = scmp.le.s32.totalorder 1, %s11
    %p151 = scmp.lt.s32.totalorder %s11, 9
    %p152 = pnand %p150, %p151
    %p153 = pneg %p152
    // Predicated region
    $region9: #{plain_block_forward.3} parent=5 // pred_check
      _
    $region10: #{plain_block_forward.3} parent=5 // pred_check_branch
      %155 = sbr.rel (%p152) target = $region12
    $region11: #{plain_block_forward.3} parent=5 // pred_region
      %s156 = ssub.s32 %s11, 1
      // Predicated region
      $region13: #{plain_block_forward.3} parent=11 // pred_check
        %p157 = pneg %p72
      $region14: #{plain_block_forward.3} parent=11 // pred_check_branch
        %159 = sbr.rel (%p157) target = $region16
      $region15: #{plain_block_forward.3} parent=11 // pred_region
        _
      $region16: #{plain_block_forward.3} parent=11 // pred_fallthru
        _
      // Predicated region
      $region17: #{plain_block_forward.3} parent=11 // pred_check
        %p160 = pneg %p93
      $region18: #{plain_block_forward.3} parent=11 // pred_check_branch
        %162 = sbr.rel (%p160) target = $region20
      $region19: #{plain_block_forward.3} parent=11 // pred_region
        _
      $region20: #{plain_block_forward.3} parent=11 // pred_fallthru
        _
      // Predicated region
      $region21: #{plain_block_forward.3} parent=11 // pred_check
        %p163 = pneg %p114
      $region22: #{plain_block_forward.3} parent=11 // pred_check_branch
        %165 = sbr.rel (%p163) target = $region24
      $region23: #{plain_block_forward.3} parent=11 // pred_region
        _
      $region24: #{plain_block_forward.3} parent=11 // pred_fallthru
        _
    $region12: #{plain_block_forward.3} parent=5 // pred_fallthru
      _
    %p166 = scmp.lt.s32.totalorder %s11, 8
    // Predicated region
    $region25: #{plain_block_forward.3} parent=5 // pred_check
      %p167 = pneg %p166
    $region26: #{plain_block_forward.3} parent=5 // pred_check_branch
      %169 = sbr.rel (%p167) target = $region28
    $region27: #{plain_block_forward.3} parent=5 // pred_region
      // Predicated region
      $region29: #{plain_block_forward.3} parent=27 // pred_check
        %p170 = pneg %p45
      $region30: #{plain_block_forward.3} parent=27 // pred_check_branch
        %172 = sbr.rel (%p170) target = $region32
      $region31: #{plain_block_forward.3} parent=27 // pred_region
        %p173 = scmp.lt.s32.totalorder %s19, 3
        %s174 = scalar_select %p173, %s19, 3
        %p175 = scmp.lt.s32.totalorder %s18, 1
        %s176 = scalar_select %p175, %s18, 1
        %s177 = smul.addr %s176, 32
        %s178 = smul.addr %s174, 64
        %s179 = sadd.s32 %s177, %s178
        %s180 = smul.addr %s179, 4
        %s181 = scalar_lea.vmem %s0, %s180
      $region32: #{plain_block_forward.3} parent=27 // pred_fallthru
        _
    $region28: #{plain_block_forward.3} parent=5 // pred_fallthru
      _
    %p182 = scmp.le.s32.totalorder 1, %s11
    %p183 = scmp.lt.s32.totalorder %s11, 9
    %p184 = pnand %p182, %p183
    %p185 = pneg %p184
    // Predicated region
    $region33: #{plain_block_forward.3} parent=5 // pred_check
      _
    $region34: #{plain_block_forward.3} parent=5 // pred_check_branch
      %187 = sbr.rel (%p184) target = $region36
    $region35: #{plain_block_forward.3} parent=5 // pred_region
      %s188 = ssub.s32 %s11, 1
      %p189 = scmp.lt.s32.totalorder %s21, 3
      %s190 = scalar_select %p189, %s21, 3
      %p191 = scmp.lt.s32.totalorder %s20, 1
      %s192 = scalar_select %p191, %s20, 1
      %s193 = smul.addr %s192, 32
      %s194 = smul.addr %s190, 64
      %s195 = sadd.s32 %s193, %s194
      %s196 = smul.addr %s195, 4
      %s197 = scalar_lea.vmem %s0, %s196
      %p198 = pneg %p51
      %p199 = pneg %p48
      %p200 = pneg %p72
      %p201 = pneg %p69
      %p202 = pneg %p93
      %p203 = pneg %p90
      %p204 = pneg %p114
      %p205 = pneg %p111
      %p206 = pneg %p142
      %p207 = pneg %p139
      %p208 = scmp.lt.s32.totalorder %s21, 3
      %s209 = scalar_select %p208, %s21, 3
      %p210 = scmp.lt.s32.totalorder %s20, 1
      %s211 = scalar_select %p210, %s20, 1
      %s212 = smul.addr %s211, 32
      %s213 = smul.addr %s209, 64
      %s214 = sadd.s32 %s212, %s213
      %s215 = smul.addr %s214, 4
      %s216 = scalar_lea.vmem %s4, %s215
      %p217 = scmp.lt.s32.totalorder %s21, 3
      %s218 = scalar_select %p217, %s21, 3
      %p219 = scmp.lt.s32.totalorder %s20, 1
      %s220 = scalar_select %p219, %s20, 1
      %s221 = smul.addr %s220, 32
      %s222 = smul.addr %s218, 64
      %s223 = sadd.s32 %s221, %s222
      %s224 = smul.addr %s223, 4
      %s225 = scalar_lea.vmem %s0, %s224
      %p226 = scmp.lt.s32.totalorder %s21, 3
      %s227 = scalar_select %p226, %s21, 3
      %p228 = scmp.lt.s32.totalorder %s20, 1
      %s229 = scalar_select %p228, %s20, 1
      %s230 = smul.addr %s229, 32
      %s231 = smul.addr %s227, 64
      %s232 = sadd.s32 %s230, %s231
      %s233 = smul.addr %s232, 4
      %s234 = scalar_lea.vmem %s4, %s233
      %p236 = scmp.eq.s32.totalorder %s21, 0
      // Predicated region
      $region37: #{plain_block_forward.3} parent=35 // pred_check
        %p237 = pneg %p236
      $region38: #{plain_block_forward.3} parent=35 // pred_check_branch
        %239 = sbr.rel (%p237) target = $region40
      $region39: #{plain_block_forward.3} parent=35 // pred_region
        %vm240 = vcmask 31744
        %241 = vst.msk [vmem:[#allocation2] sm:$0xff] %vm240, 0.0
        %242 = vst.msk [vmem:[#allocation2 + $0x8] sm:$0xff] %vm240, 0.0
        %243 = vst.msk [vmem:[#allocation2 + $0x10] sm:$0xff] %vm240, 0.0
        %244 = vst.msk [vmem:[#allocation2 + $0x18] sm:$0xff] %vm240, 0.0
        %245 = vst.msk [vmem:[#allocation2 + $0x20] sm:$0xff] %vm240, 0.0
        %246 = vst.msk [vmem:[#allocation2 + $0x28] sm:$0xff] %vm240, 0.0
        %247 = vst.msk [vmem:[#allocation2 + $0x30] sm:$0xff] %vm240, 0.0
        %248 = vst.msk [vmem:[#allocation2 + $0x38] sm:$0xff] %vm240, 0.0
        %249 = vst.msk [vmem:[#allocation2 + $0x40] sm:$0xff] %vm240, 0.0
        %250 = vst.msk [vmem:[#allocation2 + $0x48] sm:$0xff] %vm240, 0.0
        %251 = vst.msk [vmem:[#allocation2 + $0x50] sm:$0xff] %vm240, 0.0
        %252 = vst.msk [vmem:[#allocation2 + $0x58] sm:$0xff] %vm240, 0.0
        %253 = vst.msk [vmem:[#allocation2 + $0x60] sm:$0xff] %vm240, 0.0
        %254 = vst.msk [vmem:[#allocation2 + $0x68] sm:$0xff] %vm240, 0.0
        %255 = vst.msk [vmem:[#allocation2 + $0x70] sm:$0xff] %vm240, 0.0
        %256 = vst.msk [vmem:[#allocation2 + $0x78] sm:$0xff] %vm240, 0.0
        %257 = vst.msk [vmem:[#allocation2 + $0x80] sm:$0xff] %vm240, 0.0
        %258 = vst.msk [vmem:[#allocation2 + $0x88] sm:$0xff] %vm240, 0.0
        %259 = vst.msk [vmem:[#allocation2 + $0x90] sm:$0xff] %vm240, 0.0
        %260 = vst.msk [vmem:[#allocation2 + $0x98] sm:$0xff] %vm240, 0.0
        %261 = vst.msk [vmem:[#allocation2 + $0xa0] sm:$0xff] %vm240, 0.0
        %262 = vst.msk [vmem:[#allocation2 + $0xa8] sm:$0xff] %vm240, 0.0
        %263 = vst.msk [vmem:[#allocation2 + $0xb0] sm:$0xff] %vm240, 0.0
        %264 = vst.msk [vmem:[#allocation2 + $0xb8] sm:$0xff] %vm240, 0.0
        %265 = vst.msk [vmem:[#allocation2 + $0xc0] sm:$0xff] %vm240, 0.0
        %266 = vst.msk [vmem:[#allocation2 + $0xc8] sm:$0xff] %vm240, 0.0
        %267 = vst.msk [vmem:[#allocation2 + $0xd0] sm:$0xff] %vm240, 0.0
        %268 = vst.msk [vmem:[#allocation2 + $0xd8] sm:$0xff] %vm240, 0.0
        %269 = vst.msk [vmem:[#allocation2 + $0xe0] sm:$0xff] %vm240, 0.0
        %270 = vst.msk [vmem:[#allocation2 + $0xe8] sm:$0xff] %vm240, 0.0
        %271 = vst.msk [vmem:[#allocation2 + $0xf0] sm:$0xff] %vm240, 0.0
        %272 = vst.msk [vmem:[#allocation2 + $0xf8] sm:$0xff] %vm240, 0.0
      $region40: #{plain_block_forward.3} parent=35 // pred_fallthru
        _
      %v273 = vld [vmem:[%s225] sm:$0xf]
      %v274 = vld [vmem:[%s225 + $0x4] sm:$0xf]
      %v275 = vld [vmem:[%s225 + $0x8] sm:$0xf]
      %v276 = vld [vmem:[%s225 + $0xc] sm:$0xf]
      %v277 = vld [vmem:[%s225 + $0x10] sm:$0xf]
      %v278 = vld [vmem:[%s225 + $0x14] sm:$0xf]
      %v279 = vld [vmem:[%s225 + $0x18] sm:$0xf]
      %v280 = vld [vmem:[%s225 + $0x1c] sm:$0xf]
      %v281 = vld [vmem:[%s225 + $0x20] sm:$0xf]
      %v282 = vld [vmem:[%s225 + $0x24] sm:$0xf]
      %v283 = vld [vmem:[%s225 + $0x28] sm:$0xf]
      %v284 = vld [vmem:[%s225 + $0x2c] sm:$0xf]
      %v285 = vld [vmem:[%s225 + $0x30] sm:$0xf]
      %v286 = vld [vmem:[%s225 + $0x34] sm:$0xf]
      %v287 = vld [vmem:[%s225 + $0x38] sm:$0xf]
      %v288 = vld [vmem:[%s225 + $0x3c] sm:$0xf]
      %v289 = vld [vmem:[%s225 + $0x40] sm:$0xf]
      %v290 = vld [vmem:[%s225 + $0x44] sm:$0xf]
      %v291 = vld [vmem:[%s225 + $0x48] sm:$0xf]
      %v292 = vld [vmem:[%s225 + $0x4c] sm:$0xf]
      %v293 = vld [vmem:[%s225 + $0x50] sm:$0xf]
      %v294 = vld [vmem:[%s225 + $0x54] sm:$0xf]
      %v295 = vld [vmem:[%s225 + $0x58] sm:$0xf]
      %v296 = vld [vmem:[%s225 + $0x5c] sm:$0xf]
      %v297 = vld [vmem:[%s225 + $0x60] sm:$0xf]
      %v298 = vld [vmem:[%s225 + $0x64] sm:$0xf]
      %v299 = vld [vmem:[%s225 + $0x68] sm:$0xf]
      %v300 = vld [vmem:[%s225 + $0x6c] sm:$0xf]
      %v301 = vld [vmem:[%s225 + $0x70] sm:$0xf]
      %v302 = vld [vmem:[%s225 + $0x74] sm:$0xf]
      %v303 = vld [vmem:[%s225 + $0x78] sm:$0xf]
      %v304 = vld [vmem:[%s225 + $0x7c] sm:$0xf]
      %v305 = vunpack.c.l.bf16 %v273
      %v306 = vunpack.c.l.bf16 %v274
      %v307 = vunpack.c.l.bf16 %v275
      %v308 = vunpack.c.l.bf16 %v276
      %v309 = vunpack.c.l.bf16 %v277
      %v310 = vunpack.c.l.bf16 %v278
      %v311 = vunpack.c.l.bf16 %v279
      %v312 = vunpack.c.l.bf16 %v280
      %v313 = vunpack.c.l.bf16 %v281
      %v314 = vunpack.c.l.bf16 %v282
      %v315 = vunpack.c.l.bf16 %v283
      %v316 = vunpack.c.l.bf16 %v284
      %v317 = vunpack.c.l.bf16 %v285
      %v318 = vunpack.c.l.bf16 %v286
      %v319 = vunpack.c.l.bf16 %v287
      %v320 = vunpack.c.l.bf16 %v288
      %v321 = vunpack.c.l.bf16 %v289
      %v322 = vunpack.c.l.bf16 %v290
      %v323 = vunpack.c.l.bf16 %v291
      %v324 = vunpack.c.l.bf16 %v292
      %v325 = vunpack.c.l.bf16 %v293
      %v326 = vunpack.c.l.bf16 %v294
      %v327 = vunpack.c.l.bf16 %v295
      %v328 = vunpack.c.l.bf16 %v296
      %v329 = vunpack.c.l.bf16 %v297
      %v330 = vunpack.c.l.bf16 %v298
      %v331 = vunpack.c.l.bf16 %v299
      %v332 = vunpack.c.l.bf16 %v300
      %v333 = vunpack.c.l.bf16 %v301
      %v334 = vunpack.c.l.bf16 %v302
      %v335 = vunpack.c.l.bf16 %v303
      %v336 = vunpack.c.l.bf16 %v304
      %vm370 = vcmask 1040384
      %v371 = vrot.slane 0.0, 7
      %v372 = vsel %vm370, %v371, %v371
      %v373 = vrot.slane %v305, 7
      %v374 = vrot.slane %v306, 7
      %v375 = vsel %vm370, %v373, %v374
      %v376 = vrot.slane %v307, 7
      %v377 = vrot.slane %v308, 7
      %v378 = vsel %vm370, %v376, %v377
      %v379 = vrot.slane %v309, 7
      %v380 = vrot.slane %v310, 7
      %v381 = vsel %vm370, %v379, %v380
      %v382 = vrot.slane %v311, 7
      %v383 = vrot.slane %v312, 7
      %v384 = vsel %vm370, %v382, %v383
      %v385 = vrot.slane %v313, 7
      %v386 = vrot.slane %v314, 7
      %v387 = vsel %vm370, %v385, %v386
      %v388 = vrot.slane %v315, 7
      %v389 = vrot.slane %v316, 7
      %v390 = vsel %vm370, %v388, %v389
      %v391 = vrot.slane %v317, 7
      %v392 = vrot.slane %v318, 7
      %v393 = vsel %vm370, %v391, %v392
      %v394 = vrot.slane %v319, 7
      %v395 = vrot.slane %v320, 7
      %v396 = vsel %vm370, %v394, %v395
      %v397 = vrot.slane %v321, 7
      %v398 = vrot.slane %v322, 7
      %v399 = vsel %vm370, %v397, %v398
      %v400 = vrot.slane %v323, 7
      %v401 = vrot.slane %v324, 7
      %v402 = vsel %vm370, %v400, %v401
      %v403 = vrot.slane %v325, 7
      %v404 = vrot.slane %v326, 7
      %v405 = vsel %vm370, %v403, %v404
      %v406 = vrot.slane %v327, 7
      %v407 = vrot.slane %v328, 7
      %v408 = vsel %vm370, %v406, %v407
      %v409 = vrot.slane %v329, 7
      %v410 = vrot.slane %v330, 7
      %v411 = vsel %vm370, %v409, %v410
      %v412 = vrot.slane %v331, 7
      %v413 = vrot.slane %v332, 7
      %v414 = vsel %vm370, %v412, %v413
      %v415 = vrot.slane %v333, 7
      %v416 = vrot.slane %v334, 7
      %v417 = vsel %vm370, %v415, %v416
      %v418 = vrot.slane %v335, 7
      %v419 = vrot.slane %v336, 7
      %v420 = vsel %vm370, %v418, %v419
      %v470 = vsel %vm370, 0.0, %v371
      %v471 = vsel %vm370, 0.0, %v373
      %v472 = vsel %vm370, 0.0, %v376
      %v473 = vsel %vm370, 0.0, %v379
      %v474 = vsel %vm370, 0.0, %v382
      %v475 = vsel %vm370, 0.0, %v385
      %v476 = vsel %vm370, 0.0, %v388
      %v477 = vsel %vm370, 0.0, %v391
      %v478 = vsel %vm370, 0.0, %v394
      %v479 = vsel %vm370, 0.0, %v397
      %v480 = vsel %vm370, 0.0, %v400
      %v481 = vsel %vm370, 0.0, %v403
      %v482 = vsel %vm370, 0.0, %v406
      %v483 = vsel %vm370, 0.0, %v409
      %v484 = vsel %vm370, 0.0, %v412
      %v485 = vsel %vm370, 0.0, %v415
      %v486 = vsel %vm370, 0.0, %v418
      %v487 = vsel %vm370, %v371, 0.0
      %v488 = vsel %vm370, %v374, 0.0
      %v489 = vsel %vm370, %v377, 0.0
      %v490 = vsel %vm370, %v380, 0.0
      %v491 = vsel %vm370, %v383, 0.0
      %v492 = vsel %vm370, %v386, 0.0
      %v493 = vsel %vm370, %v389, 0.0
      %v494 = vsel %vm370, %v392, 0.0
      %v495 = vsel %vm370, %v395, 0.0
      %v496 = vsel %vm370, %v398, 0.0
      %v497 = vsel %vm370, %v401, 0.0
      %v498 = vsel %vm370, %v404, 0.0
      %v499 = vsel %vm370, %v407, 0.0
      %v500 = vsel %vm370, %v410, 0.0
      %v501 = vsel %vm370, %v413, 0.0
      %v502 = vsel %vm370, %v416, 0.0
      %v503 = vsel %vm370, %v419, 0.0
      %vm536 = vcmask 1046528
      %v537 = vrot.slane %v470, 1
      %v538 = vrot.slane %v372, 1
      %v539 = vsel %vm536, %v537, %v538
      %v540 = vrot.slane %v487, 1
      %v541 = vsel %vm536, %v538, %v540
      %v542 = vrot.slane %v471, 1
      %v543 = vrot.slane %v375, 1
      %v544 = vsel %vm536, %v542, %v543
      %v545 = vrot.slane %v488, 1
      %v546 = vsel %vm536, %v543, %v545
      %v547 = vrot.slane %v472, 1
      %v548 = vrot.slane %v378, 1
      %v549 = vsel %vm536, %v547, %v548
      %v550 = vrot.slane %v489, 1
      %v551 = vsel %vm536, %v548, %v550
      %v552 = vrot.slane %v473, 1
      %v553 = vrot.slane %v381, 1
      %v554 = vsel %vm536, %v552, %v553
      %v555 = vrot.slane %v490, 1
      %v556 = vsel %vm536, %v553, %v555
      %v557 = vrot.slane %v474, 1
      %v558 = vrot.slane %v384, 1
      %v559 = vsel %vm536, %v557, %v558
      %v560 = vrot.slane %v491, 1
      %v561 = vsel %vm536, %v558, %v560
      %v562 = vrot.slane %v475, 1
      %v563 = vrot.slane %v387, 1
      %v564 = vsel %vm536, %v562, %v563
      %v565 = vrot.slane %v492, 1
      %v566 = vsel %vm536, %v563, %v565
      %v567 = vrot.slane %v476, 1
      %v568 = vrot.slane %v390, 1
      %v569 = vsel %vm536, %v567, %v568
      %v570 = vrot.slane %v493, 1
      %v571 = vsel %vm536, %v568, %v570
      %v572 = vrot.slane %v477, 1
      %v573 = vrot.slane %v393, 1
      %v574 = vsel %vm536, %v572, %v573
      %v575 = vrot.slane %v494, 1
      %v576 = vsel %vm536, %v573, %v575
      %v577 = vrot.slane %v478, 1
      %v578 = vrot.slane %v396, 1
      %v579 = vsel %vm536, %v577, %v578
      %v580 = vrot.slane %v495, 1
      %v581 = vsel %vm536, %v578, %v580
      %v582 = vrot.slane %v479, 1
      %v583 = vrot.slane %v399, 1
      %v584 = vsel %vm536, %v582, %v583
      %v585 = vrot.slane %v496, 1
      %v586 = vsel %vm536, %v583, %v585
      %v587 = vrot.slane %v480, 1
      %v588 = vrot.slane %v402, 1
      %v589 = vsel %vm536, %v587, %v588
      %v590 = vrot.slane %v497, 1
      %v591 = vsel %vm536, %v588, %v590
      %v592 = vrot.slane %v481, 1
      %v593 = vrot.slane %v405, 1
      %v594 = vsel %vm536, %v592, %v593
      %v595 = vrot.slane %v498, 1
      %v596 = vsel %vm536, %v593, %v595
      %v597 = vrot.slane %v482, 1
      %v598 = vrot.slane %v408, 1
      %v599 = vsel %vm536, %v597, %v598
      %v600 = vrot.slane %v499, 1
      %v601 = vsel %vm536, %v598, %v600
      %v602 = vrot.slane %v483, 1
      %v603 = vrot.slane %v411, 1
      %v604 = vsel %vm536, %v602, %v603
      %v605 = vrot.slane %v500, 1
      %v606 = vsel %vm536, %v603, %v605
      %v607 = vrot.slane %v484, 1
      %v608 = vrot.slane %v414, 1
      %v609 = vsel %vm536, %v607, %v608
      %v610 = vrot.slane %v501, 1
      %v611 = vsel %vm536, %v608, %v610
      %v612 = vrot.slane %v485, 1
      %v613 = vrot.slane %v417, 1
      %v614 = vsel %vm536, %v612, %v613
      %v615 = vrot.slane %v502, 1
      %v616 = vsel %vm536, %v613, %v615
      %617 = vrot.lane.b32.xlu0 %v539, 8
      %v618 = vpop.permute.xlu0 %617
      %619 = vrot.lane.b32.xlu0 %v541, 8
      %v620 = vpop.permute.xlu0 %619
      %621 = vrot.lane.b32.xlu0 %v544, 8
      %v622 = vpop.permute.xlu0 %621
      %623 = vrot.lane.b32.xlu0 %v546, 8
      %v624 = vpop.permute.xlu0 %623
      %625 = vrot.lane.b32.xlu0 %v549, 8
      %v626 = vpop.permute.xlu0 %625
      %627 = vrot.lane.b32.xlu0 %v551, 8
      %v628 = vpop.permute.xlu0 %627
      %629 = vrot.lane.b32.xlu0 %v554, 8
      %v630 = vpop.permute.xlu0 %629
      %631 = vrot.lane.b32.xlu0 %v556, 8
      %v632 = vpop.permute.xlu0 %631
      %633 = vrot.lane.b32.xlu0 %v559, 8
      %v634 = vpop.permute.xlu0 %633
      %635 = vrot.lane.b32.xlu0 %v561, 8
      %v636 = vpop.permute.xlu0 %635
      %637 = vrot.lane.b32.xlu0 %v564, 8
      %v638 = vpop.permute.xlu0 %637
      %639 = vrot.lane.b32.xlu0 %v566, 8
      %v640 = vpop.permute.xlu0 %639
      %641 = vrot.lane.b32.xlu0 %v569, 8
      %v642 = vpop.permute.xlu0 %641
      %643 = vrot.lane.b32.xlu0 %v571, 8
      %v644 = vpop.permute.xlu0 %643
      %645 = vrot.lane.b32.xlu0 %v574, 8
      %v646 = vpop.permute.xlu0 %645
      %647 = vrot.lane.b32.xlu0 %v576, 8
      %v648 = vpop.permute.xlu0 %647
      %649 = vrot.lane.b32.xlu0 %v579, 8
      %v650 = vpop.permute.xlu0 %649
      %651 = vrot.lane.b32.xlu0 %v581, 8
      %v652 = vpop.permute.xlu0 %651
      %653 = vrot.lane.b32.xlu0 %v584, 8
      %v654 = vpop.permute.xlu0 %653
      %655 = vrot.lane.b32.xlu0 %v586, 8
      %v656 = vpop.permute.xlu0 %655
      %657 = vrot.lane.b32.xlu0 %v589, 8
      %v658 = vpop.permute.xlu0 %657
      %659 = vrot.lane.b32.xlu0 %v591, 8
      %v660 = vpop.permute.xlu0 %659
      %661 = vrot.lane.b32.xlu0 %v594, 8
      %v662 = vpop.permute.xlu0 %661
      %663 = vrot.lane.b32.xlu0 %v596, 8
      %v664 = vpop.permute.xlu0 %663
      %665 = vrot.lane.b32.xlu0 %v599, 8
      %v666 = vpop.permute.xlu0 %665
      %667 = vrot.lane.b32.xlu0 %v601, 8
      %v668 = vpop.permute.xlu0 %667
      %669 = vrot.lane.b32.xlu0 %v604, 8
      %v670 = vpop.permute.xlu0 %669
      %671 = vrot.lane.b32.xlu0 %v606, 8
      %v672 = vpop.permute.xlu0 %671
      %673 = vrot.lane.b32.xlu0 %v609, 8
      %v674 = vpop.permute.xlu0 %673
      %675 = vrot.lane.b32.xlu0 %v611, 8
      %v676 = vpop.permute.xlu0 %675
      %677 = vrot.lane.b32.xlu0 %v614, 8
      %v678 = vpop.permute.xlu0 %677
      %679 = vrot.lane.b32.xlu0 %v616, 8
      %v680 = vpop.permute.xlu0 %679
      %vm713 = vcmask 1045504
      %v714 = vrot.slane %v470, 2
      %v715 = vrot.slane %v372, 2
      %v716 = vsel %vm713, %v714, %v715
      %v717 = vrot.slane %v487, 2
      %v718 = vsel %vm713, %v715, %v717
      %v719 = vrot.slane %v471, 2
      %v720 = vrot.slane %v375, 2
      %v721 = vsel %vm713, %v719, %v720
      %v722 = vrot.slane %v488, 2
      %v723 = vsel %vm713, %v720, %v722
      %v724 = vrot.slane %v472, 2
      %v725 = vrot.slane %v378, 2
      %v726 = vsel %vm713, %v724, %v725
      %v727 = vrot.slane %v489, 2
      %v728 = vsel %vm713, %v725, %v727
      %v729 = vrot.slane %v473, 2
      %v730 = vrot.slane %v381, 2
      %v731 = vsel %vm713, %v729, %v730
      %v732 = vrot.slane %v490, 2
      %v733 = vsel %vm713, %v730, %v732
      %v734 = vrot.slane %v474, 2
      %v735 = vrot.slane %v384, 2
      %v736 = vsel %vm713, %v734, %v735
      %v737 = vrot.slane %v491, 2
      %v738 = vsel %vm713, %v735, %v737
      %v739 = vrot.slane %v475, 2
      %v740 = vrot.slane %v387, 2
      %v741 = vsel %vm713, %v739, %v740
      %v742 = vrot.slane %v492, 2
      %v743 = vsel %vm713, %v740, %v742
      %v744 = vrot.slane %v476, 2
      %v745 = vrot.slane %v390, 2
      %v746 = vsel %vm713, %v744, %v745
      %v747 = vrot.slane %v493, 2
      %v748 = vsel %vm713, %v745, %v747
      %v749 = vrot.slane %v477, 2
      %v750 = vrot.slane %v393, 2
      %v751 = vsel %vm713, %v749, %v750
      %v752 = vrot.slane %v494, 2
      %v753 = vsel %vm713, %v750, %v752
      %v754 = vrot.slane %v478, 2
      %v755 = vrot.slane %v396, 2
      %v756 = vsel %vm713, %v754, %v755
      %v757 = vrot.slane %v495, 2
      %v758 = vsel %vm713, %v755, %v757
      %v759 = vrot.slane %v479, 2
      %v760 = vrot.slane %v399, 2
      %v761 = vsel %vm713, %v759, %v760
      %v762 = vrot.slane %v496, 2
      %v763 = vsel %vm713, %v760, %v762
      %v764 = vrot.slane %v480, 2
      %v765 = vrot.slane %v402, 2
      %v766 = vsel %vm713, %v764, %v765
      %v767 = vrot.slane %v497, 2
      %v768 = vsel %vm713, %v765, %v767
      %v769 = vrot.slane %v481, 2
      %v770 = vrot.slane %v405, 2
      %v771 = vsel %vm713, %v769, %v770
      %v772 = vrot.slane %v498, 2
      %v773 = vsel %vm713, %v770, %v772
      %v774 = vrot.slane %v482, 2
      %v775 = vrot.slane %v408, 2
      %v776 = vsel %vm713, %v774, %v775
      %v777 = vrot.slane %v499, 2
      %v778 = vsel %vm713, %v775, %v777
      %v779 = vrot.slane %v483, 2
      %v780 = vrot.slane %v411, 2
      %v781 = vsel %vm713, %v779, %v780
      %v782 = vrot.slane %v500, 2
      %v783 = vsel %vm713, %v780, %v782
      %v784 = vrot.slane %v484, 2
      %v785 = vrot.slane %v414, 2
      %v786 = vsel %vm713, %v784, %v785
      %v787 = vrot.slane %v501, 2
      %v788 = vsel %vm713, %v785, %v787
      %v789 = vrot.slane %v485, 2
      %v790 = vrot.slane %v417, 2
      %v791 = vsel %vm713, %v789, %v790
      %v792 = vrot.slane %v502, 2
      %v793 = vsel %vm713, %v790, %v792
      %794 = vrot.lane.b32.xlu0 %v716, 16
      %v795 = vpop.permute.xlu0 %794
      %796 = vrot.lane.b32.xlu0 %v718, 16
      %v797 = vpop.permute.xlu0 %796
      %798 = vrot.lane.b32.xlu0 %v721, 16
      %v799 = vpop.permute.xlu0 %798
      %800 = vrot.lane.b32.xlu0 %v723, 16
      %v801 = vpop.permute.xlu0 %800
      %802 = vrot.lane.b32.xlu0 %v726, 16
      %v803 = vpop.permute.xlu0 %802
      %804 = vrot.lane.b32.xlu0 %v728, 16
      %v805 = vpop.permute.xlu0 %804
      %806 = vrot.lane.b32.xlu0 %v731, 16
      %v807 = vpop.permute.xlu0 %806
      %808 = vrot.lane.b32.xlu0 %v733, 16
      %v809 = vpop.permute.xlu0 %808
      %810 = vrot.lane.b32.xlu0 %v736, 16
      %v811 = vpop.permute.xlu0 %810
      %812 = vrot.lane.b32.xlu0 %v738, 16
      %v813 = vpop.permute.xlu0 %812
      %814 = vrot.lane.b32.xlu0 %v741, 16
      %v815 = vpop.permute.xlu0 %814
      %816 = vrot.lane.b32.xlu0 %v743, 16
      %v817 = vpop.permute.xlu0 %816
      %818 = vrot.lane.b32.xlu0 %v746, 16
      %v819 = vpop.permute.xlu0 %818
      %820 = vrot.lane.b32.xlu0 %v748, 16
      %v821 = vpop.permute.xlu0 %820
      %822 = vrot.lane.b32.xlu0 %v751, 16
      %v823 = vpop.permute.xlu0 %822
      %824 = vrot.lane.b32.xlu0 %v753, 16
      %v825 = vpop.permute.xlu0 %824
      %826 = vrot.lane.b32.xlu0 %v756, 16
      %v827 = vpop.permute.xlu0 %826
      %828 = vrot.lane.b32.xlu0 %v758, 16
      %v829 = vpop.permute.xlu0 %828
      %830 = vrot.lane.b32.xlu0 %v761, 16
      %v831 = vpop.permute.xlu0 %830
      %832 = vrot.lane.b32.xlu0 %v763, 16
      %v833 = vpop.permute.xlu0 %832
      %834 = vrot.lane.b32.xlu0 %v766, 16
      %v835 = vpop.permute.xlu0 %834
      %836 = vrot.lane.b32.xlu0 %v768, 16
      %v837 = vpop.permute.xlu0 %836
      %838 = vrot.lane.b32.xlu0 %v771, 16
      %v839 = vpop.permute.xlu0 %838
      %840 = vrot.lane.b32.xlu0 %v773, 16
      %v841 = vpop.permute.xlu0 %840
      %842 = vrot.lane.b32.xlu0 %v776, 16
      %v843 = vpop.permute.xlu0 %842
      %844 = vrot.lane.b32.xlu0 %v778, 16
      %v845 = vpop.permute.xlu0 %844
      %846 = vrot.lane.b32.xlu0 %v781, 16
      %v847 = vpop.permute.xlu0 %846
      %848 = vrot.lane.b32.xlu0 %v783, 16
      %v849 = vpop.permute.xlu0 %848
      %850 = vrot.lane.b32.xlu0 %v786, 16
      %v851 = vpop.permute.xlu0 %850
      %852 = vrot.lane.b32.xlu0 %v788, 16
      %v853 = vpop.permute.xlu0 %852
      %854 = vrot.lane.b32.xlu0 %v791, 16
      %v855 = vpop.permute.xlu0 %854
      %856 = vrot.lane.b32.xlu0 %v793, 16
      %v857 = vpop.permute.xlu0 %856
      %891 = vrot.lane.b32.xlu0 %v471, 24
      %v892 = vpop.permute.xlu0 %891
      %893 = vrot.lane.b32.xlu0 %v375, 24
      %v894 = vpop.permute.xlu0 %893
      %895 = vrot.lane.b32.xlu0 %v472, 24
      %v896 = vpop.permute.xlu0 %895
      %897 = vrot.lane.b32.xlu0 %v378, 24
      %v898 = vpop.permute.xlu0 %897
      %899 = vrot.lane.b32.xlu0 %v473, 24
      %v900 = vpop.permute.xlu0 %899
      %901 = vrot.lane.b32.xlu0 %v381, 24
      %v902 = vpop.permute.xlu0 %901
      %903 = vrot.lane.b32.xlu0 %v474, 24
      %v904 = vpop.permute.xlu0 %903
      %905 = vrot.lane.b32.xlu0 %v384, 24
      %v906 = vpop.permute.xlu0 %905
      %907 = vrot.lane.b32.xlu0 %v475, 24
      %v908 = vpop.permute.xlu0 %907
      %909 = vrot.lane.b32.xlu0 %v387, 24
      %v910 = vpop.permute.xlu0 %909
      %911 = vrot.lane.b32.xlu0 %v476, 24
      %v912 = vpop.permute.xlu0 %911
      %913 = vrot.lane.b32.xlu0 %v390, 24
      %v914 = vpop.permute.xlu0 %913
      %915 = vrot.lane.b32.xlu0 %v477, 24
      %v916 = vpop.permute.xlu0 %915
      %917 = vrot.lane.b32.xlu0 %v393, 24
      %v918 = vpop.permute.xlu0 %917
      %919 = vrot.lane.b32.xlu0 %v478, 24
      %v920 = vpop.permute.xlu0 %919
      %921 = vrot.lane.b32.xlu0 %v396, 24
      %v922 = vpop.permute.xlu0 %921
      %923 = vrot.lane.b32.xlu0 %v479, 24
      %v924 = vpop.permute.xlu0 %923
      %925 = vrot.lane.b32.xlu0 %v399, 24
      %v926 = vpop.permute.xlu0 %925
      %927 = vrot.lane.b32.xlu0 %v480, 24
      %v928 = vpop.permute.xlu0 %927
      %929 = vrot.lane.b32.xlu0 %v402, 24
      %v930 = vpop.permute.xlu0 %929
      %931 = vrot.lane.b32.xlu0 %v481, 24
      %v932 = vpop.permute.xlu0 %931
      %933 = vrot.lane.b32.xlu0 %v405, 24
      %v934 = vpop.permute.xlu0 %933
      %935 = vrot.lane.b32.xlu0 %v482, 24
      %v936 = vpop.permute.xlu0 %935
      %937 = vrot.lane.b32.xlu0 %v408, 24
      %v938 = vpop.permute.xlu0 %937
      %939 = vrot.lane.b32.xlu0 %v483, 24
      %v940 = vpop.permute.xlu0 %939
      %941 = vrot.lane.b32.xlu0 %v411, 24
      %v942 = vpop.permute.xlu0 %941
      %943 = vrot.lane.b32.xlu0 %v484, 24
      %v944 = vpop.permute.xlu0 %943
      %945 = vrot.lane.b32.xlu0 %v414, 24
      %v946 = vpop.permute.xlu0 %945
      %947 = vrot.lane.b32.xlu0 %v485, 24
      %v948 = vpop.permute.xlu0 %947
      %949 = vrot.lane.b32.xlu0 %v417, 24
      %v950 = vpop.permute.xlu0 %949
      %951 = vrot.lane.b32.xlu0 %v486, 24
      %v952 = vpop.permute.xlu0 %951
      %953 = vrot.lane.b32.xlu0 %v420, 24
      %v954 = vpop.permute.xlu0 %953
      %v988 = vrot.slane %v486, 1
      %v989 = vrot.slane %v420, 1
      %v990 = vsel %vm536, %v988, %v989
      %v991 = vrot.slane %v503, 1
      %v992 = vsel %vm536, %v989, %v991
      %993 = vrot.lane.b32.xlu0 %v544, 32
      %v994 = vpop.permute.xlu0 %993
      %995 = vrot.lane.b32.xlu0 %v546, 32
      %v996 = vpop.permute.xlu0 %995
      %997 = vrot.lane.b32.xlu0 %v549, 32
      %v998 = vpop.permute.xlu0 %997
      %999 = vrot.lane.b32.xlu0 %v551, 32
      %v1000 = vpop.permute.xlu0 %999
      %1001 = vrot.lane.b32.xlu0 %v554, 32
      %v1002 = vpop.permute.xlu0 %1001
      %1003 = vrot.lane.b32.xlu0 %v556, 32
      %v1004 = vpop.permute.xlu0 %1003
      %1005 = vrot.lane.b32.xlu0 %v559, 32
      %v1006 = vpop.permute.xlu0 %1005
      %1007 = vrot.lane.b32.xlu0 %v561, 32
      %v1008 = vpop.permute.xlu0 %1007
      %1009 = vrot.lane.b32.xlu0 %v564, 32
      %v1010 = vpop.permute.xlu0 %1009
      %1011 = vrot.lane.b32.xlu0 %v566, 32
      %v1012 = vpop.permute.xlu0 %1011
      %1013 = vrot.lane.b32.xlu0 %v569, 32
      %v1014 = vpop.permute.xlu0 %1013
      %1015 = vrot.lane.b32.xlu0 %v571, 32
      %v1016 = vpop.permute.xlu0 %1015
      %1017 = vrot.lane.b32.xlu0 %v574, 32
      %v1018 = vpop.permute.xlu0 %1017
      %1019 = vrot.lane.b32.xlu0 %v576, 32
      %v1020 = vpop.permute.xlu0 %1019
      %1021 = vrot.lane.b32.xlu0 %v579, 32
      %v1022 = vpop.permute.xlu0 %1021
      %1023 = vrot.lane.b32.xlu0 %v581, 32
      %v1024 = vpop.permute.xlu0 %1023
      %1025 = vrot.lane.b32.xlu0 %v584, 32
      %v1026 = vpop.permute.xlu0 %1025
      %1027 = vrot.lane.b32.xlu0 %v586, 32
      %v1028 = vpop.permute.xlu0 %1027
      %1029 = vrot.lane.b32.xlu0 %v589, 32
      %v1030 = vpop.permute.xlu0 %1029
      %1031 = vrot.lane.b32.xlu0 %v591, 32
      %v1032 = vpop.permute.xlu0 %1031
      %1033 = vrot.lane.b32.xlu0 %v594, 32
      %v1034 = vpop.permute.xlu0 %1033
      %1035 = vrot.lane.b32.xlu0 %v596, 32
      %v1036 = vpop.permute.xlu0 %1035
      %1037 = vrot.lane.b32.xlu0 %v599, 32
      %v1038 = vpop.permute.xlu0 %1037
      %1039 = vrot.lane.b32.xlu0 %v601, 32
      %v1040 = vpop.permute.xlu0 %1039
      %1041 = vrot.lane.b32.xlu0 %v604, 32
      %v1042 = vpop.permute.xlu0 %1041
      %1043 = vrot.lane.b32.xlu0 %v606, 32
      %v1044 = vpop.permute.xlu0 %1043
      %1045 = vrot.lane.b32.xlu0 %v609, 32
      %v1046 = vpop.permute.xlu0 %1045
      %1047 = vrot.lane.b32.xlu0 %v611, 32
      %v1048 = vpop.permute.xlu0 %1047
      %1049 = vrot.lane.b32.xlu0 %v614, 32
      %v1050 = vpop.permute.xlu0 %1049
      %1051 = vrot.lane.b32.xlu0 %v616, 32
      %v1052 = vpop.permute.xlu0 %1051
      %1053 = vrot.lane.b32.xlu0 %v990, 32
      %v1054 = vpop.permute.xlu0 %1053
      %1055 = vrot.lane.b32.xlu0 %v992, 32
      %v1056 = vpop.permute.xlu0 %1055
      %v1089 = vrot.slane %v486, 2
      %v1090 = vrot.slane %v420, 2
      %v1091 = vsel %vm713, %v1089, %v1090
      %v1092 = vrot.slane %v503, 2
      %v1093 = vsel %vm713, %v1090, %v1092
      %1094 = vrot.lane.b32.xlu0 %v721, 40
      %v1095 = vpop.permute.xlu0 %1094
      %1096 = vrot.lane.b32.xlu0 %v723, 40
      %v1097 = vpop.permute.xlu0 %1096
      %1098 = vrot.lane.b32.xlu0 %v726, 40
      %v1099 = vpop.permute.xlu0 %1098
      %1100 = vrot.lane.b32.xlu0 %v728, 40
      %v1101 = vpop.permute.xlu0 %1100
      %1102 = vrot.lane.b32.xlu0 %v731, 40
      %v1103 = vpop.permute.xlu0 %1102
      %1104 = vrot.lane.b32.xlu0 %v733, 40
      %v1105 = vpop.permute.xlu0 %1104
      %1106 = vrot.lane.b32.xlu0 %v736, 40
      %v1107 = vpop.permute.xlu0 %1106
      %1108 = vrot.lane.b32.xlu0 %v738, 40
      %v1109 = vpop.permute.xlu0 %1108
      %1110 = vrot.lane.b32.xlu0 %v741, 40
      %v1111 = vpop.permute.xlu0 %1110
      %1112 = vrot.lane.b32.xlu0 %v743, 40
      %v1113 = vpop.permute.xlu0 %1112
      %1114 = vrot.lane.b32.xlu0 %v746, 40
      %v1115 = vpop.permute.xlu0 %1114
      %1116 = vrot.lane.b32.xlu0 %v748, 40
      %v1117 = vpop.permute.xlu0 %1116
      %1118 = vrot.lane.b32.xlu0 %v751, 40
      %v1119 = vpop.permute.xlu0 %1118
      %1120 = vrot.lane.b32.xlu0 %v753, 40
      %v1121 = vpop.permute.xlu0 %1120
      %1122 = vrot.lane.b32.xlu0 %v756, 40
      %v1123 = vpop.permute.xlu0 %1122
      %1124 = vrot.lane.b32.xlu0 %v758, 40
      %v1125 = vpop.permute.xlu0 %1124
      %1126 = vrot.lane.b32.xlu0 %v761, 40
      %v1127 = vpop.permute.xlu0 %1126
      %1128 = vrot.lane.b32.xlu0 %v763, 40
      %v1129 = vpop.permute.xlu0 %1128
      %1130 = vrot.lane.b32.xlu0 %v766, 40
      %v1131 = vpop.permute.xlu0 %1130
      %1132 = vrot.lane.b32.xlu0 %v768, 40
      %v1133 = vpop.permute.xlu0 %1132
      %1134 = vrot.lane.b32.xlu0 %v771, 40
      %v1135 = vpop.permute.xlu0 %1134
      %1136 = vrot.lane.b32.xlu0 %v773, 40
      %v1137 = vpop.permute.xlu0 %1136
      %1138 = vrot.lane.b32.xlu0 %v776, 40
      %v1139 = vpop.permute.xlu0 %1138
      %1140 = vrot.lane.b32.xlu0 %v778, 40
      %v1141 = vpop.permute.xlu0 %1140
      %1142 = vrot.lane.b32.xlu0 %v781, 40
      %v1143 = vpop.permute.xlu0 %1142
      %1144 = vrot.lane.b32.xlu0 %v783, 40
      %v1145 = vpop.permute.xlu0 %1144
      %1146 = vrot.lane.b32.xlu0 %v786, 40
      %v1147 = vpop.permute.xlu0 %1146
      %1148 = vrot.lane.b32.xlu0 %v788, 40
      %v1149 = vpop.permute.xlu0 %1148
      %1150 = vrot.lane.b32.xlu0 %v791, 40
      %v1151 = vpop.permute.xlu0 %1150
      %1152 = vrot.lane.b32.xlu0 %v793, 40
      %v1153 = vpop.permute.xlu0 %1152
      %1154 = vrot.lane.b32.xlu0 %v1091, 40
      %v1155 = vpop.permute.xlu0 %1154
      %1156 = vrot.lane.b32.xlu0 %v1093, 40
      %v1157 = vpop.permute.xlu0 %1156
      %1190 = vrot.lane.b32.xlu0 %v472, 48
      %v1191 = vpop.permute.xlu0 %1190
      %1192 = vrot.lane.b32.xlu0 %v378, 48
      %v1193 = vpop.permute.xlu0 %1192
      %1194 = vrot.lane.b32.xlu0 %v473, 48
      %v1195 = vpop.permute.xlu0 %1194
      %1196 = vrot.lane.b32.xlu0 %v381, 48
      %v1197 = vpop.permute.xlu0 %1196
      %1198 = vrot.lane.b32.xlu0 %v474, 48
      %v1199 = vpop.permute.xlu0 %1198
      %1200 = vrot.lane.b32.xlu0 %v384, 48
      %v1201 = vpop.permute.xlu0 %1200
      %1202 = vrot.lane.b32.xlu0 %v475, 48
      %v1203 = vpop.permute.xlu0 %1202
      %1204 = vrot.lane.b32.xlu0 %v387, 48
      %v1205 = vpop.permute.xlu0 %1204
      %1206 = vrot.lane.b32.xlu0 %v476, 48
      %v1207 = vpop.permute.xlu0 %1206
      %1208 = vrot.lane.b32.xlu0 %v390, 48
      %v1209 = vpop.permute.xlu0 %1208
      %1210 = vrot.lane.b32.xlu0 %v477, 48
      %v1211 = vpop.permute.xlu0 %1210
      %1212 = vrot.lane.b32.xlu0 %v393, 48
      %v1213 = vpop.permute.xlu0 %1212
      %1214 = vrot.lane.b32.xlu0 %v478, 48
      %v1215 = vpop.permute.xlu0 %1214
      %1216 = vrot.lane.b32.xlu0 %v396, 48
      %v1217 = vpop.permute.xlu0 %1216
      %1218 = vrot.lane.b32.xlu0 %v479, 48
      %v1219 = vpop.permute.xlu0 %1218
      %1220 = vrot.lane.b32.xlu0 %v399, 48
      %v1221 = vpop.permute.xlu0 %1220
      %1222 = vrot.lane.b32.xlu0 %v480, 48
      %v1223 = vpop.permute.xlu0 %1222
      %1224 = vrot.lane.b32.xlu0 %v402, 48
      %v1225 = vpop.permute.xlu0 %1224
      %1226 = vrot.lane.b32.xlu0 %v481, 48
      %v1227 = vpop.permute.xlu0 %1226
      %1228 = vrot.lane.b32.xlu0 %v405, 48
      %v1229 = vpop.permute.xlu0 %1228
      %1230 = vrot.lane.b32.xlu0 %v482, 48
      %v1231 = vpop.permute.xlu0 %1230
      %1232 = vrot.lane.b32.xlu0 %v408, 48
      %v1233 = vpop.permute.xlu0 %1232
      %1234 = vrot.lane.b32.xlu0 %v483, 48
      %v1235 = vpop.permute.xlu0 %1234
      %1236 = vrot.lane.b32.xlu0 %v411, 48
      %v1237 = vpop.permute.xlu0 %1236
      %1238 = vrot.lane.b32.xlu0 %v484, 48
      %v1239 = vpop.permute.xlu0 %1238
      %1240 = vrot.lane.b32.xlu0 %v414, 48
      %v1241 = vpop.permute.xlu0 %1240
      %1242 = vrot.lane.b32.xlu0 %v485, 48
      %v1243 = vpop.permute.xlu0 %1242
      %1244 = vrot.lane.b32.xlu0 %v417, 48
      %v1245 = vpop.permute.xlu0 %1244
      %1246 = vrot.lane.b32.xlu0 %v486, 48
      %v1247 = vpop.permute.xlu0 %1246
      %1248 = vrot.lane.b32.xlu0 %v420, 48
      %v1249 = vpop.permute.xlu0 %1248
      %1250 = vrot.lane.b32.xlu0 %v470, 48
      %v1251 = vpop.permute.xlu0 %1250
      %1252 = vrot.lane.b32.xlu0 %v372, 48
      %v1253 = vpop.permute.xlu0 %1252
      %1286 = vrot.lane.b32.xlu0 %v549, 56
      %v1287 = vpop.permute.xlu0 %1286
      %1288 = vrot.lane.b32.xlu0 %v551, 56
      %v1289 = vpop.permute.xlu0 %1288
      %1290 = vrot.lane.b32.xlu0 %v554, 56
      %v1291 = vpop.permute.xlu0 %1290
      %1292 = vrot.lane.b32.xlu0 %v556, 56
      %v1293 = vpop.permute.xlu0 %1292
      %1294 = vrot.lane.b32.xlu0 %v559, 56
      %v1295 = vpop.permute.xlu0 %1294
      %1296 = vrot.lane.b32.xlu0 %v561, 56
      %v1297 = vpop.permute.xlu0 %1296
      %1298 = vrot.lane.b32.xlu0 %v564, 56
      %v1299 = vpop.permute.xlu0 %1298
      %1300 = vrot.lane.b32.xlu0 %v566, 56
      %v1301 = vpop.permute.xlu0 %1300
      %1302 = vrot.lane.b32.xlu0 %v569, 56
      %v1303 = vpop.permute.xlu0 %1302
      %1304 = vrot.lane.b32.xlu0 %v571, 56
      %v1305 = vpop.permute.xlu0 %1304
      %1306 = vrot.lane.b32.xlu0 %v574, 56
      %v1307 = vpop.permute.xlu0 %1306
      %1308 = vrot.lane.b32.xlu0 %v576, 56
      %v1309 = vpop.permute.xlu0 %1308
      %1310 = vrot.lane.b32.xlu0 %v579, 56
      %v1311 = vpop.permute.xlu0 %1310
      %1312 = vrot.lane.b32.xlu0 %v581, 56
      %v1313 = vpop.permute.xlu0 %1312
      %1314 = vrot.lane.b32.xlu0 %v584, 56
      %v1315 = vpop.permute.xlu0 %1314
      %1316 = vrot.lane.b32.xlu0 %v586, 56
      %v1317 = vpop.permute.xlu0 %1316
      %1318 = vrot.lane.b32.xlu0 %v589, 56
      %v1319 = vpop.permute.xlu0 %1318
      %1320 = vrot.lane.b32.xlu0 %v591, 56
      %v1321 = vpop.permute.xlu0 %1320
      %1322 = vrot.lane.b32.xlu0 %v594, 56
      %v1323 = vpop.permute.xlu0 %1322
      %1324 = vrot.lane.b32.xlu0 %v596, 56
      %v1325 = vpop.permute.xlu0 %1324
      %1326 = vrot.lane.b32.xlu0 %v599, 56
      %v1327 = vpop.permute.xlu0 %1326
      %1328 = vrot.lane.b32.xlu0 %v601, 56
      %v1329 = vpop.permute.xlu0 %1328
      %1330 = vrot.lane.b32.xlu0 %v604, 56
      %v1331 = vpop.permute.xlu0 %1330
      %1332 = vrot.lane.b32.xlu0 %v606, 56
      %v1333 = vpop.permute.xlu0 %1332
      %1334 = vrot.lane.b32.xlu0 %v609, 56
      %v1335 = vpop.permute.xlu0 %1334
      %1336 = vrot.lane.b32.xlu0 %v611, 56
      %v1337 = vpop.permute.xlu0 %1336
      %1338 = vrot.lane.b32.xlu0 %v614, 56
      %v1339 = vpop.permute.xlu0 %1338
      %1340 = vrot.lane.b32.xlu0 %v616, 56
      %v1341 = vpop.permute.xlu0 %1340
      %1342 = vrot.lane.b32.xlu0 %v990, 56
      %v1343 = vpop.permute.xlu0 %1342
      %1344 = vrot.lane.b32.xlu0 %v992, 56
      %v1345 = vpop.permute.xlu0 %1344
      %1346 = vrot.lane.b32.xlu0 %v539, 56
      %v1347 = vpop.permute.xlu0 %1346
      %1348 = vrot.lane.b32.xlu0 %v541, 56
      %v1349 = vpop.permute.xlu0 %1348
      %1382 = vrot.lane.b32.xlu0 %v726, 64
      %v1383 = vpop.permute.xlu0 %1382
      %1384 = vrot.lane.b32.xlu0 %v728, 64
      %v1385 = vpop.permute.xlu0 %1384
      %1386 = vrot.lane.b32.xlu0 %v731, 64
      %v1387 = vpop.permute.xlu0 %1386
      %1388 = vrot.lane.b32.xlu0 %v733, 64
      %v1389 = vpop.permute.xlu0 %1388
      %1390 = vrot.lane.b32.xlu0 %v736, 64
      %v1391 = vpop.permute.xlu0 %1390
      %1392 = vrot.lane.b32.xlu0 %v738, 64
      %v1393 = vpop.permute.xlu0 %1392
      %1394 = vrot.lane.b32.xlu0 %v741, 64
      %v1395 = vpop.permute.xlu0 %1394
      %1396 = vrot.lane.b32.xlu0 %v743, 64
      %v1397 = vpop.permute.xlu0 %1396
      %1398 = vrot.lane.b32.xlu0 %v746, 64
      %v1399 = vpop.permute.xlu0 %1398
      %1400 = vrot.lane.b32.xlu0 %v748, 64
      %v1401 = vpop.permute.xlu0 %1400
      %1402 = vrot.lane.b32.xlu0 %v751, 64
      %v1403 = vpop.permute.xlu0 %1402
      %1404 = vrot.lane.b32.xlu0 %v753, 64
      %v1405 = vpop.permute.xlu0 %1404
      %1406 = vrot.lane.b32.xlu0 %v756, 64
      %v1407 = vpop.permute.xlu0 %1406
      %1408 = vrot.lane.b32.xlu0 %v758, 64
      %v1409 = vpop.permute.xlu0 %1408
      %1410 = vrot.lane.b32.xlu0 %v761, 64
      %v1411 = vpop.permute.xlu0 %1410
      %1412 = vrot.lane.b32.xlu0 %v763, 64
      %v1413 = vpop.permute.xlu0 %1412
      %1414 = vrot.lane.b32.xlu0 %v766, 64
      %v1415 = vpop.permute.xlu0 %1414
      %1416 = vrot.lane.b32.xlu0 %v768, 64
      %v1417 = vpop.permute.xlu0 %1416
      %1418 = vrot.lane.b32.xlu0 %v771, 64
      %v1419 = vpop.permute.xlu0 %1418
      %1420 = vrot.lane.b32.xlu0 %v773, 64
      %v1421 = vpop.permute.xlu0 %1420
      %1422 = vrot.lane.b32.xlu0 %v776, 64
      %v1423 = vpop.permute.xlu0 %1422
      %1424 = vrot.lane.b32.xlu0 %v778, 64
      %v1425 = vpop.permute.xlu0 %1424
      %1426 = vrot.lane.b32.xlu0 %v781, 64
      %v1427 = vpop.permute.xlu0 %1426
      %1428 = vrot.lane.b32.xlu0 %v783, 64
      %v1429 = vpop.permute.xlu0 %1428
      %1430 = vrot.lane.b32.xlu0 %v786, 64
      %v1431 = vpop.permute.xlu0 %1430
      %1432 = vrot.lane.b32.xlu0 %v788, 64
      %v1433 = vpop.permute.xlu0 %1432
      %1434 = vrot.lane.b32.xlu0 %v791, 64
      %v1435 = vpop.permute.xlu0 %1434
      %1436 = vrot.lane.b32.xlu0 %v793, 64
      %v1437 = vpop.permute.xlu0 %1436
      %1438 = vrot.lane.b32.xlu0 %v1091, 64
      %v1439 = vpop.permute.xlu0 %1438
      %1440 = vrot.lane.b32.xlu0 %v1093, 64
      %v1441 = vpop.permute.xlu0 %1440
      %1442 = vrot.lane.b32.xlu0 %v716, 64
      %v1443 = vpop.permute.xlu0 %1442
      %1444 = vrot.lane.b32.xlu0 %v718, 64
      %v1445 = vpop.permute.xlu0 %1444
      %vm1478 = vcmask 64512
      %v1479 = vsel %vm1478, %v470, %v618
      %v1480 = vsel %vm1478, %v372, %v620
      %v1481 = vsel %vm1478, %v471, %v622
      %v1482 = vsel %vm1478, %v375, %v624
      %v1483 = vsel %vm1478, %v472, %v626
      %v1484 = vsel %vm1478, %v378, %v628
      %v1485 = vsel %vm1478, %v473, %v630
      %v1486 = vsel %vm1478, %v381, %v632
      %v1487 = vsel %vm1478, %v474, %v634
      %v1488 = vsel %vm1478, %v384, %v636
      %v1489 = vsel %vm1478, %v475, %v638
      %v1490 = vsel %vm1478, %v387, %v640
      %v1491 = vsel %vm1478, %v476, %v642
      %v1492 = vsel %vm1478, %v390, %v644
      %v1493 = vsel %vm1478, %v477, %v646
      %v1494 = vsel %vm1478, %v393, %v648
      %v1495 = vsel %vm1478, %v478, %v650
      %v1496 = vsel %vm1478, %v396, %v652
      %v1497 = vsel %vm1478, %v479, %v654
      %v1498 = vsel %vm1478, %v399, %v656
      %v1499 = vsel %vm1478, %v480, %v658
      %v1500 = vsel %vm1478, %v402, %v660
      %v1501 = vsel %vm1478, %v481, %v662
      %v1502 = vsel %vm1478, %v405, %v664
      %v1503 = vsel %vm1478, %v482, %v666
      %v1504 = vsel %vm1478, %v408, %v668
      %v1505 = vsel %vm1478, %v483, %v670
      %v1506 = vsel %vm1478, %v411, %v672
      %v1507 = vsel %vm1478, %v484, %v674
      %v1508 = vsel %vm1478, %v414, %v676
      %v1509 = vsel %vm1478, %v485, %v678
      %v1510 = vsel %vm1478, %v417, %v680
      %vm1511 = vcmask 130048
      %v1512 = vsel %vm1511, %v1479, %v795
      %v1513 = vsel %vm1511, %v1480, %v797
      %v1514 = vsel %vm1511, %v1481, %v799
      %v1515 = vsel %vm1511, %v1482, %v801
      %v1516 = vsel %vm1511, %v1483, %v803
      %v1517 = vsel %vm1511, %v1484, %v805
      %v1518 = vsel %vm1511, %v1485, %v807
      %v1519 = vsel %vm1511, %v1486, %v809
      %v1520 = vsel %vm1511, %v1487, %v811
      %v1521 = vsel %vm1511, %v1488, %v813
      %v1522 = vsel %vm1511, %v1489, %v815
      %v1523 = vsel %vm1511, %v1490, %v817
      %v1524 = vsel %vm1511, %v1491, %v819
      %v1525 = vsel %vm1511, %v1492, %v821
      %v1526 = vsel %vm1511, %v1493, %v823
      %v1527 = vsel %vm1511, %v1494, %v825
      %v1528 = vsel %vm1511, %v1495, %v827
      %v1529 = vsel %vm1511, %v1496, %v829
      %v1530 = vsel %vm1511, %v1497, %v831
      %v1531 = vsel %vm1511, %v1498, %v833
      %v1532 = vsel %vm1511, %v1499, %v835
      %v1533 = vsel %vm1511, %v1500, %v837
      %v1534 = vsel %vm1511, %v1501, %v839
      %v1535 = vsel %vm1511, %v1502, %v841
      %v1536 = vsel %vm1511, %v1503, %v843
      %v1537 = vsel %vm1511, %v1504, %v845
      %v1538 = vsel %vm1511, %v1505, %v847
      %v1539 = vsel %vm1511, %v1506, %v849
      %v1540 = vsel %vm1511, %v1507, %v851
      %v1541 = vsel %vm1511, %v1508, %v853
      %v1542 = vsel %vm1511, %v1509, %v855
      %v1543 = vsel %vm1511, %v1510, %v857
      %vm1544 = vcmask 195584
      %v1545 = vsel %vm1544, %v1512, %v892
      %v1546 = vsel %vm1544, %v1513, %v894
      %v1547 = vsel %vm1544, %v1514, %v896
      %v1548 = vsel %vm1544, %v1515, %v898
      %v1549 = vsel %vm1544, %v1516, %v900
      %v1550 = vsel %vm1544, %v1517, %v902
      %v1551 = vsel %vm1544, %v1518, %v904
      %v1552 = vsel %vm1544, %v1519, %v906
      %v1553 = vsel %vm1544, %v1520, %v908
      %v1554 = vsel %vm1544, %v1521, %v910
      %v1555 = vsel %vm1544, %v1522, %v912
      %v1556 = vsel %vm1544, %v1523, %v914
      %v1557 = vsel %vm1544, %v1524, %v916
      %v1558 = vsel %vm1544, %v1525, %v918
      %v1559 = vsel %vm1544, %v1526, %v920
      %v1560 = vsel %vm1544, %v1527, %v922
      %v1561 = vsel %vm1544, %v1528, %v924
      %v1562 = vsel %vm1544, %v1529, %v926
      %v1563 = vsel %vm1544, %v1530, %v928
      %v1564 = vsel %vm1544, %v1531, %v930
      %v1565 = vsel %vm1544, %v1532, %v932
      %v1566 = vsel %vm1544, %v1533, %v934
      %v1567 = vsel %vm1544, %v1534, %v936
      %v1568 = vsel %vm1544, %v1535, %v938
      %v1569 = vsel %vm1544, %v1536, %v940
      %v1570 = vsel %vm1544, %v1537, %v942
      %v1571 = vsel %vm1544, %v1538, %v944
      %v1572 = vsel %vm1544, %v1539, %v946
      %v1573 = vsel %vm1544, %v1540, %v948
      %v1574 = vsel %vm1544, %v1541, %v950
      %v1575 = vsel %vm1544, %v1542, %v952
      %v1576 = vsel %vm1544, %v1543, %v954
      %vm1577 = vcmask 261120
      %v1578 = vsel %vm1577, %v1545, %v994
      %v1579 = vsel %vm1577, %v1546, %v996
      %v1580 = vsel %vm1577, %v1547, %v998
      %v1581 = vsel %vm1577, %v1548, %v1000
      %v1582 = vsel %vm1577, %v1549, %v1002
      %v1583 = vsel %vm1577, %v1550, %v1004
      %v1584 = vsel %vm1577, %v1551, %v1006
      %v1585 = vsel %vm1577, %v1552, %v1008
      %v1586 = vsel %vm1577, %v1553, %v1010
      %v1587 = vsel %vm1577, %v1554, %v1012
      %v1588 = vsel %vm1577, %v1555, %v1014
      %v1589 = vsel %vm1577, %v1556, %v1016
      %v1590 = vsel %vm1577, %v1557, %v1018
      %v1591 = vsel %vm1577, %v1558, %v1020
      %v1592 = vsel %vm1577, %v1559, %v1022
      %v1593 = vsel %vm1577, %v1560, %v1024
      %v1594 = vsel %vm1577, %v1561, %v1026
      %v1595 = vsel %vm1577, %v1562, %v1028
      %v1596 = vsel %vm1577, %v1563, %v1030
      %v1597 = vsel %vm1577, %v1564, %v1032
      %v1598 = vsel %vm1577, %v1565, %v1034
      %v1599 = vsel %vm1577, %v1566, %v1036
      %v1600 = vsel %vm1577, %v1567, %v1038
      %v1601 = vsel %vm1577, %v1568, %v1040
      %v1602 = vsel %vm1577, %v1569, %v1042
      %v1603 = vsel %vm1577, %v1570, %v1044
      %v1604 = vsel %vm1577, %v1571, %v1046
      %v1605 = vsel %vm1577, %v1572, %v1048
      %v1606 = vsel %vm1577, %v1573, %v1050
      %v1607 = vsel %vm1577, %v1574, %v1052
      %v1608 = vsel %vm1577, %v1575, %v1054
      %v1609 = vsel %vm1577, %v1576, %v1056
      %vm1610 = vcmask 326656
      %v1611 = vsel %vm1610, %v1578, %v1095
      %v1612 = vsel %vm1610, %v1579, %v1097
      %v1613 = vsel %vm1610, %v1580, %v1099
      %v1614 = vsel %vm1610, %v1581, %v1101
      %v1615 = vsel %vm1610, %v1582, %v1103
      %v1616 = vsel %vm1610, %v1583, %v1105
      %v1617 = vsel %vm1610, %v1584, %v1107
      %v1618 = vsel %vm1610, %v1585, %v1109
      %v1619 = vsel %vm1610, %v1586, %v1111
      %v1620 = vsel %vm1610, %v1587, %v1113
      %v1621 = vsel %vm1610, %v1588, %v1115
      %v1622 = vsel %vm1610, %v1589, %v1117
      %v1623 = vsel %vm1610, %v1590, %v1119
      %v1624 = vsel %vm1610, %v1591, %v1121
      %v1625 = vsel %vm1610, %v1592, %v1123
      %v1626 = vsel %vm1610, %v1593, %v1125
      %v1627 = vsel %vm1610, %v1594, %v1127
      %v1628 = vsel %vm1610, %v1595, %v1129
      %v1629 = vsel %vm1610, %v1596, %v1131
      %v1630 = vsel %vm1610, %v1597, %v1133
      %v1631 = vsel %vm1610, %v1598, %v1135
      %v1632 = vsel %vm1610, %v1599, %v1137
      %v1633 = vsel %vm1610, %v1600, %v1139
      %v1634 = vsel %vm1610, %v1601, %v1141
      %v1635 = vsel %vm1610, %v1602, %v1143
      %v1636 = vsel %vm1610, %v1603, %v1145
      %v1637 = vsel %vm1610, %v1604, %v1147
      %v1638 = vsel %vm1610, %v1605, %v1149
      %v1639 = vsel %vm1610, %v1606, %v1151
      %v1640 = vsel %vm1610, %v1607, %v1153
      %v1641 = vsel %vm1610, %v1608, %v1155
      %v1642 = vsel %vm1610, %v1609, %v1157
      %vm1643 = vcmask 392192
      %v1644 = vsel %vm1643, %v1611, %v1191
      %v1645 = vsel %vm1643, %v1612, %v1193
      %v1646 = vsel %vm1643, %v1613, %v1195
      %v1647 = vsel %vm1643, %v1614, %v1197
      %v1648 = vsel %vm1643, %v1615, %v1199
      %v1649 = vsel %vm1643, %v1616, %v1201
      %v1650 = vsel %vm1643, %v1617, %v1203
      %v1651 = vsel %vm1643, %v1618, %v1205
      %v1652 = vsel %vm1643, %v1619, %v1207
      %v1653 = vsel %vm1643, %v1620, %v1209
      %v1654 = vsel %vm1643, %v1621, %v1211
      %v1655 = vsel %vm1643, %v1622, %v1213
      %v1656 = vsel %vm1643, %v1623, %v1215
      %v1657 = vsel %vm1643, %v1624, %v1217
      %v1658 = vsel %vm1643, %v1625, %v1219
      %v1659 = vsel %vm1643, %v1626, %v1221
      %v1660 = vsel %vm1643, %v1627, %v1223
      %v1661 = vsel %vm1643, %v1628, %v1225
      %v1662 = vsel %vm1643, %v1629, %v1227
      %v1663 = vsel %vm1643, %v1630, %v1229
      %v1664 = vsel %vm1643, %v1631, %v1231
      %v1665 = vsel %vm1643, %v1632, %v1233
      %v1666 = vsel %vm1643, %v1633, %v1235
      %v1667 = vsel %vm1643, %v1634, %v1237
      %v1668 = vsel %vm1643, %v1635, %v1239
      %v1669 = vsel %vm1643, %v1636, %v1241
      %v1670 = vsel %vm1643, %v1637, %v1243
      %v1671 = vsel %vm1643, %v1638, %v1245
      %v1672 = vsel %vm1643, %v1639, %v1247
      %v1673 = vsel %vm1643, %v1640, %v1249
      %v1674 = vsel %vm1643, %v1641, %v1251
      %v1675 = vsel %vm1643, %v1642, %v1253
      %vm1676 = vcmask 457728
      %v1677 = vsel %vm1676, %v1644, %v1287
      %v1678 = vsel %vm1676, %v1645, %v1289
      %v1679 = vsel %vm1676, %v1646, %v1291
      %v1680 = vsel %vm1676, %v1647, %v1293
      %v1681 = vsel %vm1676, %v1648, %v1295
      %v1682 = vsel %vm1676, %v1649, %v1297
      %v1683 = vsel %vm1676, %v1650, %v1299
      %v1684 = vsel %vm1676, %v1651, %v1301
      %v1685 = vsel %vm1676, %v1652, %v1303
      %v1686 = vsel %vm1676, %v1653, %v1305
      %v1687 = vsel %vm1676, %v1654, %v1307
      %v1688 = vsel %vm1676, %v1655, %v1309
      %v1689 = vsel %vm1676, %v1656, %v1311
      %v1690 = vsel %vm1676, %v1657, %v1313
      %v1691 = vsel %vm1676, %v1658, %v1315
      %v1692 = vsel %vm1676, %v1659, %v1317
      %v1693 = vsel %vm1676, %v1660, %v1319
      %v1694 = vsel %vm1676, %v1661, %v1321
      %v1695 = vsel %vm1676, %v1662, %v1323
      %v1696 = vsel %vm1676, %v1663, %v1325
      %v1697 = vsel %vm1676, %v1664, %v1327
      %v1698 = vsel %vm1676, %v1665, %v1329
      %v1699 = vsel %vm1676, %v1666, %v1331
      %v1700 = vsel %vm1676, %v1667, %v1333
      %v1701 = vsel %vm1676, %v1668, %v1335
      %v1702 = vsel %vm1676, %v1669, %v1337
      %v1703 = vsel %vm1676, %v1670, %v1339
      %v1704 = vsel %vm1676, %v1671, %v1341
      %v1705 = vsel %vm1676, %v1672, %v1343
      %v1706 = vsel %vm1676, %v1673, %v1345
      %v1707 = vsel %vm1676, %v1674, %v1347
      %v1708 = vsel %vm1676, %v1675, %v1349
      %vm1709 = vcmask 523264
      %v1710 = vsel %vm1709, %v1677, %v1383
      %v1711 = vsel %vm1709, %v1678, %v1385
      %v1712 = vsel %vm1709, %v1679, %v1387
      %v1713 = vsel %vm1709, %v1680, %v1389
      %v1714 = vsel %vm1709, %v1681, %v1391
      %v1715 = vsel %vm1709, %v1682, %v1393
      %v1716 = vsel %vm1709, %v1683, %v1395
      %v1717 = vsel %vm1709, %v1684, %v1397
      %v1718 = vsel %vm1709, %v1685, %v1399
      %v1719 = vsel %vm1709, %v1686, %v1401
      %v1720 = vsel %vm1709, %v1687, %v1403
      %v1721 = vsel %vm1709, %v1688, %v1405
      %v1722 = vsel %vm1709, %v1689, %v1407
      %v1723 = vsel %vm1709, %v1690, %v1409
      %v1724 = vsel %vm1709, %v1691, %v1411
      %v1725 = vsel %vm1709, %v1692, %v1413
      %v1726 = vsel %vm1709, %v1693, %v1415
      %v1727 = vsel %vm1709, %v1694, %v1417
      %v1728 = vsel %vm1709, %v1695, %v1419
      %v1729 = vsel %vm1709, %v1696, %v1421
      %v1730 = vsel %vm1709, %v1697, %v1423
      %v1731 = vsel %vm1709, %v1698, %v1425
      %v1732 = vsel %vm1709, %v1699, %v1427
      %v1733 = vsel %vm1709, %v1700, %v1429
      %v1734 = vsel %vm1709, %v1701, %v1431
      %v1735 = vsel %vm1709, %v1702, %v1433
      %v1736 = vsel %vm1709, %v1703, %v1435
      %v1737 = vsel %vm1709, %v1704, %v1437
      %v1738 = vsel %vm1709, %v1705, %v1439
      %v1739 = vsel %vm1709, %v1706, %v1441
      %v1740 = vsel %vm1709, %v1707, %v1443
      %v1741 = vsel %vm1709, %v1708, %v1445
      %v1742 = vpack.c.bf16 %v1711, %v1710
      %v1743 = vpack.c.bf16 %v1713, %v1712
      %v1744 = vpack.c.bf16 %v1715, %v1714
      %v1745 = vpack.c.bf16 %v1717, %v1716
      %v1746 = vpack.c.bf16 %v1719, %v1718
      %v1747 = vpack.c.bf16 %v1721, %v1720
      %v1748 = vpack.c.bf16 %v1723, %v1722
      %v1749 = vpack.c.bf16 %v1725, %v1724
      %v1750 = vpack.c.bf16 %v1727, %v1726
      %v1751 = vpack.c.bf16 %v1729, %v1728
      %v1752 = vpack.c.bf16 %v1731, %v1730
      %v1753 = vpack.c.bf16 %v1733, %v1732
      %v1754 = vpack.c.bf16 %v1735, %v1734
      %v1755 = vpack.c.bf16 %v1737, %v1736
      %v1756 = vpack.c.bf16 %v1739, %v1738
      %v1757 = vpack.c.bf16 %v1741, %v1740
      %v1758 = vld [vmem:[%s1] sm:$0xf]
      %v1759 = vld [vmem:[%s1 + $0x4] sm:$0xf]
      %v1760 = vld [vmem:[%s1 + $0x8] sm:$0xf]
      %v1761 = vld [vmem:[%s1 + $0xc] sm:$0xf]
      %v1762 = vld [vmem:[%s1 + $0x10] sm:$0xf]
      %v1763 = vld [vmem:[%s1 + $0x14] sm:$0xf]
      %v1764 = vld [vmem:[%s1 + $0x18] sm:$0xf]
      %v1765 = vld [vmem:[%s1 + $0x1c] sm:$0xf]
      %v1766 = vld [vmem:[%s1 + $0x20] sm:$0xf]
      %v1767 = vld [vmem:[%s2] sm:$0x1]
      %v1769 = vlaneseq
      %v1770 = vshrl.u32 %v1769, 7
      %v1771 = vsub.s32 0, %v1770
      %v1772 = vrot.slane %v1767, %v1771
      %v1783 = vunpack.c.l.b16 %v1758
      %v1784 = vunpack.c.l.b16 %v1759
      %v1785 = vunpack.c.l.b16 %v1760
      %v1786 = vunpack.c.l.b16 %v1761
      %v1787 = vunpack.c.l.b16 %v1762
      %v1788 = vunpack.c.l.b16 %v1763
      %v1789 = vunpack.c.l.b16 %v1764
      %v1790 = vunpack.c.l.b16 %v1765
      %v1791 = vunpack.c.l.b16 %v1766
      %v1792 = vpack.c.b16 %v1784, %v1783
      %v1793 = vpack.c.b16 %v1786, %v1785
      %v1794 = vpack.c.b16 %v1788, %v1787
      %v1795 = vpack.c.b16 %v1790, %v1789
      %v1796 = vpack.c.b16 %v1791, %v1791
      %vm1801 = vcmask 588800
      %v1803 = vsel %vm1801, %v1742, 0
      %v1806 = vsel %vm1801, %v1743, 0
      %v1809 = vsel %vm1801, %v1744, 0
      %v1812 = vsel %vm1801, %v1745, 0
      %v1815 = vsel %vm1801, %v1746, 0
      %v1818 = vsel %vm1801, %v1747, 0
      %v1821 = vsel %vm1801, %v1748, 0
      %v1824 = vsel %vm1801, %v1749, 0
      %v1827 = vsel %vm1801, %v1750, 0
      %v1830 = vsel %vm1801, %v1751, 0
      %v1833 = vsel %vm1801, %v1752, 0
      %v1836 = vsel %vm1801, %v1753, 0
      %v1839 = vsel %vm1801, %v1754, 0
      %v1842 = vsel %vm1801, %v1755, 0
      %v1845 = vsel %vm1801, %v1756, 0
      %v1848 = vsel %vm1801, %v1757, 0
      %vm1850 = vcmask 1043456
      %v1852 = vsel %vm1850, %v1796, 0
      %1854 = vmatprep.subr.bf16.mxu0 0
      %1855 = vmatpush1.bf16.msra.mxu0 %v1792
      %1856 = vmatprep.subr.bf16.mxu0 0
      %1857 = vmatpush1.bf16.msra.mxu0 %v1793
      %1858 = vmatprep.subr.bf16.mxu0 0
      %1859 = vmatpush1.bf16.msra.mxu0 %v1794
      %1860 = vmatprep.subr.bf16.mxu0 0
      %1861 = vmatpush1.bf16.msra.mxu0 %v1795
      %1862 = vmatprep.subr.bf16.mxu0 0
      %1863 = vmatpush1.bf16.msra.mxu0 %v1852
      %1864 = vmatprep.subr.bf16.mxu0 0
      %1865 = vmatpush1.bf16.msra.mxu0 0
      %1866 = vmatprep.subr.bf16.mxu0 0
      %1867 = vmatpush1.bf16.msra.mxu0 0
      %1868 = vmatprep.subr.bf16.mxu0 0
      %1869 = vmatpush1.bf16.msra.mxu0 0
      %1870 = vmatprep.subr.bf16.mxu0 0
      %1871 = vmatpush1.bf16.msra.mxu0 0
      %1872 = vmatprep.subr.bf16.mxu0 0
      %1873 = vmatpush1.bf16.msra.mxu0 0
      %1874 = vmatprep.subr.bf16.mxu0 0
      %1875 = vmatpush1.bf16.msra.mxu0 0
      %1876 = vmatprep.subr.bf16.mxu0 0
      %1877 = vmatpush1.bf16.msra.mxu0 0
      %1878 = vmatprep.subr.bf16.mxu0 0
      %1879 = vmatpush1.bf16.msra.mxu0 0
      %1880 = vmatprep.subr.bf16.mxu0 0
      %1881 = vmatpush1.bf16.msra.mxu0 0
      %1882 = vmatprep.subr.bf16.mxu0 0
      %1883 = vmatpush1.bf16.msra.mxu0 0
      %1884 = vmatprep.subr.bf16.mxu0 0
      %1885 = vmatpush1.bf16.msra.mxu0 0
      %1886 = vmatprep.mubr.bf16.mxu0 0
      %1887 = vmatmul.mubr.bf16.gmra.mrb[0].mxu0 %v1803
      %v1888 = vpop.f32.mrb[0].mxu0
      %v1889 = vadd.f32 %v1772, %v1888
      %v1890 = vpop.f32.mrb[0].mxu0
      %v1891 = vpop.f32.mrb[0].mxu0
      %v1892 = vadd.f32 %v1772, %v1891
      %v1893 = vpop.f32.mrb[0].mxu0
      %1894 = vmatprep.mubr.bf16.mxu0 0
      %1895 = vmatmul.mubr.bf16.gmra.mrb[0].mxu0 %v1806
      %v1896 = vpop.f32.mrb[0].mxu0
      %v1897 = vadd.f32 %v1772, %v1896
      %v1898 = vpop.f32.mrb[0].mxu0
      %v1899 = vpop.f32.mrb[0].mxu0
      %v1900 = vadd.f32 %v1772, %v1899
      %v1901 = vpop.f32.mrb[0].mxu0
      %1902 = vmatprep.mubr.bf16.mxu0 0
      %1903 = vmatmul.mubr.bf16.gmra.mrb[0].mxu0 %v1809
      %v1904 = vpop.f32.mrb[0].mxu0
      %v1905 = vadd.f32 %v1772, %v1904
      %v1906 = vpop.f32.mrb[0].mxu0
      %v1907 = vpop.f32.mrb[0].mxu0
      %v1908 = vadd.f32 %v1772, %v1907
      %v1909 = vpop.f32.mrb[0].mxu0
      %1910 = vmatprep.mubr.bf16.mxu0 0
      %1911 = vmatmul.mubr.bf16.gmra.mrb[0].mxu0 %v1812
      %v1912 = vpop.f32.mrb[0].mxu0
      %v1913 = vadd.f32 %v1772, %v1912
      %v1914 = vpop.f32.mrb[0].mxu0
      %v1915 = vpop.f32.mrb[0].mxu0
      %v1916 = vadd.f32 %v1772, %v1915
      %v1917 = vpop.f32.mrb[0].mxu0
      %1918 = vmatprep.mubr.bf16.mxu0 0
      %1919 = vmatmul.mubr.bf16.gmra.mrb[0].mxu0 %v1815
      %v1920 = vpop.f32.mrb[0].mxu0
      %v1921 = vadd.f32 %v1772, %v1920
      %v1922 = vpop.f32.mrb[0].mxu0
      %v1923 = vpop.f32.mrb[0].mxu0
      %v1924 = vadd.f32 %v1772, %v1923
      %v1925 = vpop.f32.mrb[0].mxu0
      %1926 = vmatprep.mubr.bf16.mxu0 0
      %1927 = vmatmul.mubr.bf16.gmra.mrb[0].mxu0 %v1818
      %v1928 = vpop.f32.mrb[0].mxu0
      %v1929 = vadd.f32 %v1772, %v1928
      %v1930 = vpop.f32.mrb[0].mxu0
      %v1931 = vpop.f32.mrb[0].mxu0
      %v1932 = vadd.f32 %v1772, %v1931
      %v1933 = vpop.f32.mrb[0].mxu0
      %1934 = vmatprep.mubr.bf16.mxu0 0
      %1935 = vmatmul.mubr.bf16.gmra.mrb[0].mxu0 %v1821
      %v1936 = vpop.f32.mrb[0].mxu0
      %v1937 = vadd.f32 %v1772, %v1936
      %v1938 = vpop.f32.mrb[0].mxu0
      %v1939 = vpop.f32.mrb[0].mxu0
      %v1940 = vadd.f32 %v1772, %v1939
      %v1941 = vpop.f32.mrb[0].mxu0
      %1942 = vmatprep.mubr.bf16.mxu0 0
      %1943 = vmatmul.mubr.bf16.gmra.mrb[0].mxu0 %v1824
      %v1944 = vpop.f32.mrb[0].mxu0
      %v1945 = vadd.f32 %v1772, %v1944
      %v1946 = vpop.f32.mrb[0].mxu0
      %v1947 = vpop.f32.mrb[0].mxu0
      %v1948 = vadd.f32 %v1772, %v1947
      %v1949 = vpop.f32.mrb[0].mxu0
      %1950 = vmatprep.mubr.bf16.mxu0 0
      %1951 = vmatmul.mubr.bf16.gmra.mrb[0].mxu0 %v1827
      %v1952 = vpop.f32.mrb[0].mxu0
      %v1953 = vadd.f32 %v1772, %v1952
      %v1954 = vpop.f32.mrb[0].mxu0
      %v1955 = vpop.f32.mrb[0].mxu0
      %v1956 = vadd.f32 %v1772, %v1955
      %v1957 = vpop.f32.mrb[0].mxu0
      %1958 = vmatprep.mubr.bf16.mxu0 0
      %1959 = vmatmul.mubr.bf16.gmra.mrb[0].mxu0 %v1830
      %v1960 = vpop.f32.mrb[0].mxu0
      %v1961 = vadd.f32 %v1772, %v1960
      %v1962 = vpop.f32.mrb[0].mxu0
      %v1963 = vpop.f32.mrb[0].mxu0
      %v1964 = vadd.f32 %v1772, %v1963
      %v1965 = vpop.f32.mrb[0].mxu0
      %1966 = vmatprep.mubr.bf16.mxu0 0
      %1967 = vmatmul.mubr.bf16.gmra.mrb[0].mxu0 %v1833
      %v1968 = vpop.f32.mrb[0].mxu0
      %v1969 = vadd.f32 %v1772, %v1968
      %v1970 = vpop.f32.mrb[0].mxu0
      %v1971 = vpop.f32.mrb[0].mxu0
      %v1972 = vadd.f32 %v1772, %v1971
      %v1973 = vpop.f32.mrb[0].mxu0
      %1974 = vmatprep.mubr.bf16.mxu0 0
      %1975 = vmatmul.mubr.bf16.gmra.mrb[0].mxu0 %v1836
      %v1976 = vpop.f32.mrb[0].mxu0
      %v1977 = vadd.f32 %v1772, %v1976
      %v1978 = vpop.f32.mrb[0].mxu0
      %v1979 = vpop.f32.mrb[0].mxu0
      %v1980 = vadd.f32 %v1772, %v1979
      %v1981 = vpop.f32.mrb[0].mxu0
      %1982 = vmatprep.mubr.bf16.mxu0 0
      %1983 = vmatmul.mubr.bf16.gmra.mrb[0].mxu0 %v1839
      %v1984 = vpop.f32.mrb[0].mxu0
      %v1985 = vadd.f32 %v1772, %v1984
      %v1986 = vpop.f32.mrb[0].mxu0
      %v1987 = vpop.f32.mrb[0].mxu0
      %v1988 = vadd.f32 %v1772, %v1987
      %v1989 = vpop.f32.mrb[0].mxu0
      %1990 = vmatprep.mubr.bf16.mxu0 0
      %1991 = vmatmul.mubr.bf16.gmra.mrb[0].mxu0 %v1842
      %v1992 = vpop.f32.mrb[0].mxu0
      %v1993 = vadd.f32 %v1772, %v1992
      %v1994 = vpop.f32.mrb[0].mxu0
      %v1995 = vpop.f32.mrb[0].mxu0
      %v1996 = vadd.f32 %v1772, %v1995
      %v1997 = vpop.f32.mrb[0].mxu0
      %1998 = vmatprep.mubr.bf16.mxu0 0
      %1999 = vmatmul.mubr.bf16.gmra.mrb[0].mxu0 %v1845
      %v2000 = vpop.f32.mrb[0].mxu0
      %v2001 = vadd.f32 %v1772, %v2000
      %v2002 = vpop.f32.mrb[0].mxu0
      %v2003 = vpop.f32.mrb[0].mxu0
      %v2004 = vadd.f32 %v1772, %v2003
      %v2005 = vpop.f32.mrb[0].mxu0
      %2006 = vmatprep.mubr.bf16.mxu0 0
      %2007 = vmatmul.mubr.bf16.gmra.mrb[0].mxu0 %v1848
      %v2008 = vpop.f32.mrb[0].mxu0
      %v2009 = vadd.f32 %v1772, %v2008
      %v2010 = vpop.f32.mrb[0].mxu0
      %v2011 = vpop.f32.mrb[0].mxu0
      %v2012 = vadd.f32 %v1772, %v2011
      %v2013 = vpop.f32.mrb[0].mxu0
      %2014 = vdwg.mxu0
      %s2015 = sld [smem:[#allocation3]]
      %v2016 = vld [vmem:[#allocation2] sm:$0xff]
      %v2017 = vld [vmem:[#allocation2 + $0x8] sm:$0xff]
      %v2018 = vld [vmem:[#allocation2 + $0x10] sm:$0xff]
      %v2019 = vld [vmem:[#allocation2 + $0x18] sm:$0xff]
      %v2020 = vld [vmem:[#allocation2 + $0x20] sm:$0xff]
      %v2021 = vld [vmem:[#allocation2 + $0x28] sm:$0xff]
      %v2022 = vld [vmem:[#allocation2 + $0x30] sm:$0xff]
      %v2023 = vld [vmem:[#allocation2 + $0x38] sm:$0xff]
      %v2024 = vld [vmem:[#allocation2 + $0x40] sm:$0xff]
      %v2025 = vld [vmem:[#allocation2 + $0x48] sm:$0xff]
      %v2026 = vld [vmem:[#allocation2 + $0x50] sm:$0xff]
      %v2027 = vld [vmem:[#allocation2 + $0x58] sm:$0xff]
      %v2028 = vld [vmem:[#allocation2 + $0x60] sm:$0xff]
      %v2029 = vld [vmem:[#allocation2 + $0x68] sm:$0xff]
      %v2030 = vld [vmem:[#allocation2 + $0x70] sm:$0xff]
      %v2031 = vld [vmem:[#allocation2 + $0x78] sm:$0xff]
      %v2032 = vld [vmem:[#allocation2 + $0x80] sm:$0xff]
      %v2033 = vld [vmem:[#allocation2 + $0x88] sm:$0xff]
      %v2034 = vld [vmem:[#allocation2 + $0x90] sm:$0xff]
      %v2035 = vld [vmem:[#allocation2 + $0x98] sm:$0xff]
      %v2036 = vld [vmem:[#allocation2 + $0xa0] sm:$0xff]
      %v2037 = vld [vmem:[#allocation2 + $0xa8] sm:$0xff]
      %v2038 = vld [vmem:[#allocation2 + $0xb0] sm:$0xff]
      %v2039 = vld [vmem:[#allocation2 + $0xb8] sm:$0xff]
      %v2040 = vld [vmem:[#allocation2 + $0xc0] sm:$0xff]
      %v2041 = vld [vmem:[#allocation2 + $0xc8] sm:$0xff]
      %v2042 = vld [vmem:[#allocation2 + $0xd0] sm:$0xff]
      %v2043 = vld [vmem:[#allocation2 + $0xd8] sm:$0xff]
      %v2044 = vld [vmem:[#allocation2 + $0xe0] sm:$0xff]
      %v2045 = vld [vmem:[#allocation2 + $0xe8] sm:$0xff]
      %v2046 = vld [vmem:[#allocation2 + $0xf0] sm:$0xff]
      %v2047 = vld [vmem:[#allocation2 + $0xf8] sm:$0xff]
      %v2048 = vstv %s2015
      %v2049 = vmul.f32 %v2016, %v2048
      %v2050 = vmul.f32 %v2017, %v2048
      %v2051 = vmul.f32 %v2018, %v2048
      %v2052 = vmul.f32 %v2019, %v2048
      %v2053 = vmul.f32 %v2020, %v2048
      %v2054 = vmul.f32 %v2021, %v2048
      %v2055 = vmul.f32 %v2022, %v2048
      %v2056 = vmul.f32 %v2023, %v2048
      %v2057 = vmul.f32 %v2024, %v2048
      %v2058 = vmul.f32 %v2025, %v2048
      %v2059 = vmul.f32 %v2026, %v2048
      %v2060 = vmul.f32 %v2027, %v2048
      %v2061 = vmul.f32 %v2028, %v2048
      %v2062 = vmul.f32 %v2029, %v2048
      %v2063 = vmul.f32 %v2030, %v2048
      %v2064 = vmul.f32 %v2031, %v2048
      %v2065 = vmul.f32 %v2032, %v2048
      %v2066 = vmul.f32 %v2033, %v2048
      %v2067 = vmul.f32 %v2034, %v2048
      %v2068 = vmul.f32 %v2035, %v2048
      %v2069 = vmul.f32 %v2036, %v2048
      %v2070 = vmul.f32 %v2037, %v2048
      %v2071 = vmul.f32 %v2038, %v2048
      %v2072 = vmul.f32 %v2039, %v2048
      %v2073 = vmul.f32 %v2040, %v2048
      %v2074 = vmul.f32 %v2041, %v2048
      %v2075 = vmul.f32 %v2042, %v2048
      %v2076 = vmul.f32 %v2043, %v2048
      %v2077 = vmul.f32 %v2044, %v2048
      %v2078 = vmul.f32 %v2045, %v2048
      %v2079 = vmul.f32 %v2046, %v2048
      %v2080 = vmul.f32 %v2047, %v2048
      %v2081 = vadd.f32 %v2049, %v1889
      %v2082 = vadd.f32 %v2050, %v1892
      %v2083 = vadd.f32 %v2051, %v1897
      %v2084 = vadd.f32 %v2052, %v1900
      %v2085 = vadd.f32 %v2053, %v1905
      %v2086 = vadd.f32 %v2054, %v1908
      %v2087 = vadd.f32 %v2055, %v1913
      %v2088 = vadd.f32 %v2056, %v1916
      %v2089 = vadd.f32 %v2057, %v1921
      %v2090 = vadd.f32 %v2058, %v1924
      %v2091 = vadd.f32 %v2059, %v1929
      %v2092 = vadd.f32 %v2060, %v1932
      %v2093 = vadd.f32 %v2061, %v1937
      %v2094 = vadd.f32 %v2062, %v1940
      %v2095 = vadd.f32 %v2063, %v1945
      %v2096 = vadd.f32 %v2064, %v1948
      %v2097 = vadd.f32 %v2065, %v1953
      %v2098 = vadd.f32 %v2066, %v1956
      %v2099 = vadd.f32 %v2067, %v1961
      %v2100 = vadd.f32 %v2068, %v1964
      %v2101 = vadd.f32 %v2069, %v1969
      %v2102 = vadd.f32 %v2070, %v1972
      %v2103 = vadd.f32 %v2071, %v1977
      %v2104 = vadd.f32 %v2072, %v1980
      %v2105 = vadd.f32 %v2073, %v1985
      %v2106 = vadd.f32 %v2074, %v1988
      %v2107 = vadd.f32 %v2075, %v1993
      %v2108 = vadd.f32 %v2076, %v1996
      %v2109 = vadd.f32 %v2077, %v2001
      %v2110 = vadd.f32 %v2078, %v2004
      %v2111 = vadd.f32 %v2079, %v2009
      %v2112 = vadd.f32 %v2080, %v2012
      %vm2113 = vcmp.ge.f32.partialorder %v2081, 1.0
      %vm2114 = vcmp.ge.f32.partialorder %v2082, 1.0
      %vm2115 = vcmp.ge.f32.partialorder %v2083, 1.0
      %vm2116 = vcmp.ge.f32.partialorder %v2084, 1.0
      %vm2117 = vcmp.ge.f32.partialorder %v2085, 1.0
      %vm2118 = vcmp.ge.f32.partialorder %v2086, 1.0
      %vm2119 = vcmp.ge.f32.partialorder %v2087, 1.0
      %vm2120 = vcmp.ge.f32.partialorder %v2088, 1.0
      %vm2121 = vcmp.ge.f32.partialorder %v2089, 1.0
      %vm2122 = vcmp.ge.f32.partialorder %v2090, 1.0
      %vm2123 = vcmp.ge.f32.partialorder %v2091, 1.0
      %vm2124 = vcmp.ge.f32.partialorder %v2092, 1.0
      %vm2125 = vcmp.ge.f32.partialorder %v2093, 1.0
      %vm2126 = vcmp.ge.f32.partialorder %v2094, 1.0
      %vm2127 = vcmp.ge.f32.partialorder %v2095, 1.0
      %vm2128 = vcmp.ge.f32.partialorder %v2096, 1.0
      %vm2129 = vcmp.ge.f32.partialorder %v2097, 1.0
      %vm2130 = vcmp.ge.f32.partialorder %v2098, 1.0
      %vm2131 = vcmp.ge.f32.partialorder %v2099, 1.0
      %vm2132 = vcmp.ge.f32.partialorder %v2100, 1.0
      %vm2133 = vcmp.ge.f32.partialorder %v2101, 1.0
      %vm2134 = vcmp.ge.f32.partialorder %v2102, 1.0
      %vm2135 = vcmp.ge.f32.partialorder %v2103, 1.0
      %vm2136 = vcmp.ge.f32.partialorder %v2104, 1.0
      %vm2137 = vcmp.ge.f32.partialorder %v2105, 1.0
      %vm2138 = vcmp.ge.f32.partialorder %v2106, 1.0
      %vm2139 = vcmp.ge.f32.partialorder %v2107, 1.0
      %vm2140 = vcmp.ge.f32.partialorder %v2108, 1.0
      %vm2141 = vcmp.ge.f32.partialorder %v2109, 1.0
      %vm2142 = vcmp.ge.f32.partialorder %v2110, 1.0
      %vm2143 = vcmp.ge.f32.partialorder %v2111, 1.0
      %vm2144 = vcmp.ge.f32.partialorder %v2112, 1.0
      %v2145 = vsel %vm2113, 0.0, %v2081
      %v2146 = vsel %vm2114, 0.0, %v2082
      %v2147 = vsel %vm2115, 0.0, %v2083
      %v2148 = vsel %vm2116, 0.0, %v2084
      %v2149 = vsel %vm2117, 0.0, %v2085
      %v2150 = vsel %vm2118, 0.0, %v2086
      %v2151 = vsel %vm2119, 0.0, %v2087
      %v2152 = vsel %vm2120, 0.0, %v2088
      %v2153 = vsel %vm2121, 0.0, %v2089
      %v2154 = vsel %vm2122, 0.0, %v2090
      %v2155 = vsel %vm2123, 0.0, %v2091
      %v2156 = vsel %vm2124, 0.0, %v2092
      %v2157 = vsel %vm2125, 0.0, %v2093
      %v2158 = vsel %vm2126, 0.0, %v2094
      %v2159 = vsel %vm2127, 0.0, %v2095
      %v2160 = vsel %vm2128, 0.0, %v2096
      %v2161 = vsel %vm2129, 0.0, %v2097
      %v2162 = vsel %vm2130, 0.0, %v2098
      %v2163 = vsel %vm2131, 0.0, %v2099
      %v2164 = vsel %vm2132, 0.0, %v2100
      %v2165 = vsel %vm2133, 0.0, %v2101
      %v2166 = vsel %vm2134, 0.0, %v2102
      %v2167 = vsel %vm2135, 0.0, %v2103
      %v2168 = vsel %vm2136, 0.0, %v2104
      %v2169 = vsel %vm2137, 0.0, %v2105
      %v2170 = vsel %vm2138, 0.0, %v2106
      %v2171 = vsel %vm2139, 0.0, %v2107
      %v2172 = vsel %vm2140, 0.0, %v2108
      %v2173 = vsel %vm2141, 0.0, %v2109
      %v2174 = vsel %vm2142, 0.0, %v2110
      %v2175 = vsel %vm2143, 0.0, %v2111
      %v2176 = vsel %vm2144, 0.0, %v2112
      %vm2177 = vcmask 31744
      %2178 = vst.msk [vmem:[#allocation2] sm:$0xff] %vm2177, %v2145
      %2179 = vst.msk [vmem:[#allocation2 + $0x8] sm:$0xff] %vm2177, %v2146
      %2180 = vst.msk [vmem:[#allocation2 + $0x10] sm:$0xff] %vm2177, %v2147
      %2181 = vst.msk [vmem:[#allocation2 + $0x18] sm:$0xff] %vm2177, %v2148
      %2182 = vst.msk [vmem:[#allocation2 + $0x20] sm:$0xff] %vm2177, %v2149
      %2183 = vst.msk [vmem:[#allocation2 + $0x28] sm:$0xff] %vm2177, %v2150
      %2184 = vst.msk [vmem:[#allocation2 + $0x30] sm:$0xff] %vm2177, %v2151
      %2185 = vst.msk [vmem:[#allocation2 + $0x38] sm:$0xff] %vm2177, %v2152
      %2186 = vst.msk [vmem:[#allocation2 + $0x40] sm:$0xff] %vm2177, %v2153
      %2187 = vst.msk [vmem:[#allocation2 + $0x48] sm:$0xff] %vm2177, %v2154
      %2188 = vst.msk [vmem:[#allocation2 + $0x50] sm:$0xff] %vm2177, %v2155
      %2189 = vst.msk [vmem:[#allocation2 + $0x58] sm:$0xff] %vm2177, %v2156
      %2190 = vst.msk [vmem:[#allocation2 + $0x60] sm:$0xff] %vm2177, %v2157
      %2191 = vst.msk [vmem:[#allocation2 + $0x68] sm:$0xff] %vm2177, %v2158
      %2192 = vst.msk [vmem:[#allocation2 + $0x70] sm:$0xff] %vm2177, %v2159
      %2193 = vst.msk [vmem:[#allocation2 + $0x78] sm:$0xff] %vm2177, %v2160
      %2194 = vst.msk [vmem:[#allocation2 + $0x80] sm:$0xff] %vm2177, %v2161
      %2195 = vst.msk [vmem:[#allocation2 + $0x88] sm:$0xff] %vm2177, %v2162
      %2196 = vst.msk [vmem:[#allocation2 + $0x90] sm:$0xff] %vm2177, %v2163
      %2197 = vst.msk [vmem:[#allocation2 + $0x98] sm:$0xff] %vm2177, %v2164
      %2198 = vst.msk [vmem:[#allocation2 + $0xa0] sm:$0xff] %vm2177, %v2165
      %2199 = vst.msk [vmem:[#allocation2 + $0xa8] sm:$0xff] %vm2177, %v2166
      %2200 = vst.msk [vmem:[#allocation2 + $0xb0] sm:$0xff] %vm2177, %v2167
      %2201 = vst.msk [vmem:[#allocation2 + $0xb8] sm:$0xff] %vm2177, %v2168
      %2202 = vst.msk [vmem:[#allocation2 + $0xc0] sm:$0xff] %vm2177, %v2169
      %2203 = vst.msk [vmem:[#allocation2 + $0xc8] sm:$0xff] %vm2177, %v2170
      %2204 = vst.msk [vmem:[#allocation2 + $0xd0] sm:$0xff] %vm2177, %v2171
      %2205 = vst.msk [vmem:[#allocation2 + $0xd8] sm:$0xff] %vm2177, %v2172
      %2206 = vst.msk [vmem:[#allocation2 + $0xe0] sm:$0xff] %vm2177, %v2173
      %2207 = vst.msk [vmem:[#allocation2 + $0xe8] sm:$0xff] %vm2177, %v2174
      %2208 = vst.msk [vmem:[#allocation2 + $0xf0] sm:$0xff] %vm2177, %v2175
      %2209 = vst.msk [vmem:[#allocation2 + $0xf8] sm:$0xff] %vm2177, %v2176
      %v2210 = vsel %vm2113, 1, 0
      %v2211 = vsel %vm2114, 1, 0
      %v2212 = vsel %vm2115, 1, 0
      %v2213 = vsel %vm2116, 1, 0
      %v2214 = vsel %vm2117, 1, 0
      %v2215 = vsel %vm2118, 1, 0
      %v2216 = vsel %vm2119, 1, 0
      %v2217 = vsel %vm2120, 1, 0
      %v2218 = vsel %vm2121, 1, 0
      %v2219 = vsel %vm2122, 1, 0
      %v2220 = vsel %vm2123, 1, 0
      %v2221 = vsel %vm2124, 1, 0
      %v2222 = vsel %vm2125, 1, 0
      %v2223 = vsel %vm2126, 1, 0
      %v2224 = vsel %vm2127, 1, 0
      %v2225 = vsel %vm2128, 1, 0
      %v2226 = vsel %vm2129, 1, 0
      %v2227 = vsel %vm2130, 1, 0
      %v2228 = vsel %vm2131, 1, 0
      %v2229 = vsel %vm2132, 1, 0
      %v2230 = vsel %vm2133, 1, 0
      %v2231 = vsel %vm2134, 1, 0
      %v2232 = vsel %vm2135, 1, 0
      %v2233 = vsel %vm2136, 1, 0
      %v2234 = vsel %vm2137, 1, 0
      %v2235 = vsel %vm2138, 1, 0
      %v2236 = vsel %vm2139, 1, 0
      %v2237 = vsel %vm2140, 1, 0
      %v2238 = vsel %vm2141, 1, 0
      %v2239 = vsel %vm2142, 1, 0
      %v2240 = vsel %vm2143, 1, 0
      %v2241 = vsel %vm2144, 1, 0
      %v2242 = vcvt.s32.f32 %v2210
      %v2243 = vcvt.s32.f32 %v2211
      %v2244 = vcvt.s32.f32 %v2212
      %v2245 = vcvt.s32.f32 %v2213
      %v2246 = vcvt.s32.f32 %v2214
      %v2247 = vcvt.s32.f32 %v2215
      %v2248 = vcvt.s32.f32 %v2216
      %v2249 = vcvt.s32.f32 %v2217
      %v2250 = vcvt.s32.f32 %v2218
      %v2251 = vcvt.s32.f32 %v2219
      %v2252 = vcvt.s32.f32 %v2220
      %v2253 = vcvt.s32.f32 %v2221
      %v2254 = vcvt.s32.f32 %v2222
      %v2255 = vcvt.s32.f32 %v2223
      %v2256 = vcvt.s32.f32 %v2224
      %v2257 = vcvt.s32.f32 %v2225
      %v2258 = vcvt.s32.f32 %v2226
      %v2259 = vcvt.s32.f32 %v2227
      %v2260 = vcvt.s32.f32 %v2228
      %v2261 = vcvt.s32.f32 %v2229
      %v2262 = vcvt.s32.f32 %v2230
      %v2263 = vcvt.s32.f32 %v2231
      %v2264 = vcvt.s32.f32 %v2232
      %v2265 = vcvt.s32.f32 %v2233
      %v2266 = vcvt.s32.f32 %v2234
      %v2267 = vcvt.s32.f32 %v2235
      %v2268 = vcvt.s32.f32 %v2236
      %v2269 = vcvt.s32.f32 %v2237
      %v2270 = vcvt.s32.f32 %v2238
      %v2271 = vcvt.s32.f32 %v2239
      %v2272 = vcvt.s32.f32 %v2240
      %v2273 = vcvt.s32.f32 %v2241
      %v2274 = vpack.c.bf16 %v2243, %v2242
      %v2275 = vpack.c.bf16 %v2245, %v2244
      %v2276 = vpack.c.bf16 %v2247, %v2246
      %v2277 = vpack.c.bf16 %v2249, %v2248
      %v2278 = vpack.c.bf16 %v2251, %v2250
      %v2279 = vpack.c.bf16 %v2253, %v2252
      %v2280 = vpack.c.bf16 %v2255, %v2254
      %v2281 = vpack.c.bf16 %v2257, %v2256
      %v2282 = vpack.c.bf16 %v2259, %v2258
      %v2283 = vpack.c.bf16 %v2261, %v2260
      %v2284 = vpack.c.bf16 %v2263, %v2262
      %v2285 = vpack.c.bf16 %v2265, %v2264
      %v2286 = vpack.c.bf16 %v2267, %v2266
      %v2287 = vpack.c.bf16 %v2269, %v2268
      %v2288 = vpack.c.bf16 %v2271, %v2270
      %v2289 = vpack.c.bf16 %v2273, %v2272
      %v2306 = vunpack.c.l.b16 %v2274
      %v2307 = vunpack.c.h.b16 %v2274
      %v2308 = vunpack.c.l.b16 %v2275
      %v2309 = vunpack.c.h.b16 %v2275
      %v2310 = vunpack.c.l.b16 %v2276
      %v2311 = vunpack.c.h.b16 %v2276
      %v2312 = vunpack.c.l.b16 %v2277
      %v2313 = vunpack.c.h.b16 %v2277
      %v2314 = vunpack.c.l.b16 %v2278
      %v2315 = vunpack.c.h.b16 %v2278
      %v2316 = vunpack.c.l.b16 %v2279
      %v2317 = vunpack.c.h.b16 %v2279
      %v2318 = vunpack.c.l.b16 %v2280
      %v2319 = vunpack.c.h.b16 %v2280
      %v2320 = vunpack.c.l.b16 %v2281
      %v2321 = vunpack.c.h.b16 %v2281
      %v2322 = vunpack.c.l.b16 %v2282
      %v2323 = vunpack.c.h.b16 %v2282
      %v2324 = vunpack.c.l.b16 %v2283
      %v2325 = vunpack.c.h.b16 %v2283
      %v2326 = vunpack.c.l.b16 %v2284
      %v2327 = vunpack.c.h.b16 %v2284
      %v2328 = vunpack.c.l.b16 %v2285
      %v2329 = vunpack.c.h.b16 %v2285
      %v2330 = vunpack.c.l.b16 %v2286
      %v2331 = vunpack.c.h.b16 %v2286
      %v2332 = vunpack.c.l.b16 %v2287
      %v2333 = vunpack.c.h.b16 %v2287
      %v2334 = vunpack.c.l.b16 %v2288
      %v2335 = vunpack.c.h.b16 %v2288
      %v2336 = vunpack.c.l.b16 %v2289
      %v2337 = vunpack.c.h.b16 %v2289
      %v2338 = vpack.c.b16 %v2306, %v2306
      %v2339 = vpack.c.b16 %v2307, %v2307
      %v2340 = vpack.c.b16 %v2308, %v2308
      %v2341 = vpack.c.b16 %v2309, %v2309
      %v2342 = vpack.c.b16 %v2310, %v2310
      %v2343 = vpack.c.b16 %v2311, %v2311
      %v2344 = vpack.c.b16 %v2312, %v2312
      %v2345 = vpack.c.b16 %v2313, %v2313
      %v2346 = vpack.c.b16 %v2314, %v2314
      %v2347 = vpack.c.b16 %v2315, %v2315
      %v2348 = vpack.c.b16 %v2316, %v2316
      %v2349 = vpack.c.b16 %v2317, %v2317
      %v2350 = vpack.c.b16 %v2318, %v2318
      %v2351 = vpack.c.b16 %v2319, %v2319
      %v2352 = vpack.c.b16 %v2320, %v2320
      %v2353 = vpack.c.b16 %v2321, %v2321
      %v2354 = vpack.c.b16 %v2322, %v2322
      %v2355 = vpack.c.b16 %v2323, %v2323
      %v2356 = vpack.c.b16 %v2324, %v2324
      %v2357 = vpack.c.b16 %v2325, %v2325
      %v2358 = vpack.c.b16 %v2326, %v2326
      %v2359 = vpack.c.b16 %v2327, %v2327
      %v2360 = vpack.c.b16 %v2328, %v2328
      %v2361 = vpack.c.b16 %v2329, %v2329
      %v2362 = vpack.c.b16 %v2330, %v2330
      %v2363 = vpack.c.b16 %v2331, %v2331
      %v2364 = vpack.c.b16 %v2332, %v2332
      %v2365 = vpack.c.b16 %v2333, %v2333
      %v2366 = vpack.c.b16 %v2334, %v2334
      %v2367 = vpack.c.b16 %v2335, %v2335
      %v2368 = vpack.c.b16 %v2336, %v2336
      %v2369 = vpack.c.b16 %v2337, %v2337
      %vm2402 = vcmask 27648
      %2403 = vst.msk [vmem:[%s234] sm:$0xf] %vm2402, %v2338
      %2404 = vst.msk [vmem:[%s234 + $0x4] sm:$0xf] %vm2402, %v2339
      %2405 = vst.msk [vmem:[%s234 + $0x8] sm:$0xf] %vm2402, %v2340
      %2406 = vst.msk [vmem:[%s234 + $0xc] sm:$0xf] %vm2402, %v2341
      %2407 = vst.msk [vmem:[%s234 + $0x10] sm:$0xf] %vm2402, %v2342
      %2408 = vst.msk [vmem:[%s234 + $0x14] sm:$0xf] %vm2402, %v2343
      %2409 = vst.msk [vmem:[%s234 + $0x18] sm:$0xf] %vm2402, %v2344
      %2410 = vst.msk [vmem:[%s234 + $0x1c] sm:$0xf] %vm2402, %v2345
      %2411 = vst.msk [vmem:[%s234 + $0x20] sm:$0xf] %vm2402, %v2346
      %2412 = vst.msk [vmem:[%s234 + $0x24] sm:$0xf] %vm2402, %v2347
      %2413 = vst.msk [vmem:[%s234 + $0x28] sm:$0xf] %vm2402, %v2348
      %2414 = vst.msk [vmem:[%s234 + $0x2c] sm:$0xf] %vm2402, %v2349
      %2415 = vst.msk [vmem:[%s234 + $0x30] sm:$0xf] %vm2402, %v2350
      %2416 = vst.msk [vmem:[%s234 + $0x34] sm:$0xf] %vm2402, %v2351
      %2417 = vst.msk [vmem:[%s234 + $0x38] sm:$0xf] %vm2402, %v2352
      %2418 = vst.msk [vmem:[%s234 + $0x3c] sm:$0xf] %vm2402, %v2353
      %2419 = vst.msk [vmem:[%s234 + $0x40] sm:$0xf] %vm2402, %v2354
      %2420 = vst.msk [vmem:[%s234 + $0x44] sm:$0xf] %vm2402, %v2355
      %2421 = vst.msk [vmem:[%s234 + $0x48] sm:$0xf] %vm2402, %v2356
      %2422 = vst.msk [vmem:[%s234 + $0x4c] sm:$0xf] %vm2402, %v2357
      %2423 = vst.msk [vmem:[%s234 + $0x50] sm:$0xf] %vm2402, %v2358
      %2424 = vst.msk [vmem:[%s234 + $0x54] sm:$0xf] %vm2402, %v2359
      %2425 = vst.msk [vmem:[%s234 + $0x58] sm:$0xf] %vm2402, %v2360
      %2426 = vst.msk [vmem:[%s234 + $0x5c] sm:$0xf] %vm2402, %v2361
      %2427 = vst.msk [vmem:[%s234 + $0x60] sm:$0xf] %vm2402, %v2362
      %2428 = vst.msk [vmem:[%s234 + $0x64] sm:$0xf] %vm2402, %v2363
      %2429 = vst.msk [vmem:[%s234 + $0x68] sm:$0xf] %vm2402, %v2364
      %2430 = vst.msk [vmem:[%s234 + $0x6c] sm:$0xf] %vm2402, %v2365
      %2431 = vst.msk [vmem:[%s234 + $0x70] sm:$0xf] %vm2402, %v2366
      %2432 = vst.msk [vmem:[%s234 + $0x74] sm:$0xf] %vm2402, %v2367
      %2433 = vst.msk [vmem:[%s234 + $0x78] sm:$0xf] %vm2402, %v2368
      %2434 = vst.msk [vmem:[%s234 + $0x7c] sm:$0xf] %vm2402, %v2369
      %p2435 = scmp.lt.s32.totalorder %s21, 3
      %s2436 = scalar_select %p2435, %s21, 3
      %p2437 = scmp.lt.s32.totalorder %s20, 1
      %s2438 = scalar_select %p2437, %s20, 1
      %s2439 = smul.addr %s2438, 32
      %s2440 = smul.addr %s2436, 64
      %s2441 = sadd.s32 %s2439, %s2440
      %s2442 = smul.addr %s2441, 4
      %s2443 = scalar_lea.vmem %s4, %s2442
      // Predicated region
      $region41: #{plain_block_forward.3} parent=35 // pred_check
        %p2444 = pneg %p139
      $region42: #{plain_block_forward.3} parent=35 // pred_check_branch
        %2446 = sbr.rel (%p2444) target = $region44
      $region43: #{plain_block_forward.3} parent=35 // pred_region
        _
      $region44: #{plain_block_forward.3} parent=35 // pred_fallthru
        _
    $region36: #{plain_block_forward.3} parent=5 // pred_fallthru
      _
    %p2447 = scmp.le.s32.totalorder 2, %s11
    // Predicated region
    $region45: #{plain_block_forward.3} parent=5 // pred_check
      %p2448 = pneg %p2447
    $region46: #{plain_block_forward.3} parent=5 // pred_check_branch
      %2450 = sbr.rel (%p2448) target = $region48
    $region47: #{plain_block_forward.3} parent=5 // pred_region
      %s2451 = ssub.s32 %s11, 2
      // Predicated region
      $region49: #{plain_block_forward.3} parent=47 // pred_check
        %p2452 = pneg %p145
      $region50: #{plain_block_forward.3} parent=47 // pred_check_branch
        %2454 = sbr.rel (%p2452) target = $region52
      $region51: #{plain_block_forward.3} parent=47 // pred_region
        %p2455 = scmp.lt.s32.totalorder %s23, 3
        %s2456 = scalar_select %p2455, %s23, 3
        %p2457 = scmp.lt.s32.totalorder %s22, 1
        %s2458 = scalar_select %p2457, %s22, 1
        %s2459 = smul.addr %s2458, 32
        %s2460 = smul.addr %s2456, 64
        %s2461 = sadd.s32 %s2459, %s2460
        %s2462 = smul.addr %s2461, 4
        %s2463 = scalar_lea.vmem %s4, %s2462
      $region52: #{plain_block_forward.3} parent=47 // pred_fallthru
        _
    $region48: #{plain_block_forward.3} parent=5 // pred_fallthru
      _
  $region6: #{plain_block_forward.3} parent=0 // loop_footer
    %s15 = sadd.s32 1, %s11
  $region7: #{plain_block_forward.3} parent=0 // loop_footer_branch
    %10 = sbr.rel target = $region3
  $region8: #{plain_block_forward.3} parent=0 // loop_exit
    _

</llo_original>
